<compile_context>
chip_gen: v5e
topology: v5e:2x2
jax: 0.10.0
libtpu: 0.0.40
codegen_flags: <defaults>
</compile_context>

<pallas_src>
import math

import numpy as np
import jax
import jax.numpy as jnp
from jax.experimental import pallas as pl
from jax.experimental.pallas import tpu as pltpu

# Small, module-consistent dims (original: MAP_SIZE=550, STATE_DIM=493, batch=64)
MAP_SIZE = 32                  # must be a multiple of 16 for this demo config
MAP_FEATURE_DIM = 128
POSE_DIM = 3
LIDAR_DIM = 16
GOAL_DIM = 2
PLG_DIM = POSE_DIM + LIDAR_DIM + GOAL_DIM                        # 21
PLG_AUG = PLG_DIM + 1          # + ones row (folds the fc1 bias into the matmul)
STATE_DIM = MAP_FEATURE_DIM + PLG_DIM                            # 149
N_TOTAL = 16                   # full batch
NB = 8                         # samples per grid step (>=8 per perf review)

# derived conv geometry
_S1 = MAP_SIZE // 2            # conv1 output side   = 16
_P1 = MAP_SIZE // 4            # pooled-1 side       = 8
_S2 = MAP_SIZE // 8            # conv2 output side   = 4
_P2 = MAP_SIZE // 16           # pooled-2 side       = 2
_C1 = 32                       # conv1 out channels
_C2 = 16                       # conv2 out channels
_NPOS1 = _S1 * _S1             # 256 conv1 outputs per sample
_NH1 = _P1 * _P1               # 64  pooled-1 cells per sample
_NPOS2 = _S2 * _S2             # 16  conv2 outputs per sample
_NPC2 = _P2 * _P2              # 4   pooled-2 cells per sample
_FLAT = _C2 * _NPC2            # 64  flattened map features before mapfc
_KROWS = 16                    # taps rows: 9 taps + 1 ones (bias) + 6 zero pad

assert MAP_SIZE % 16 == 0 and N_TOTAL % NB == 0


# ----------------------------------------------------------------------------
# The fused kernel (one grid step == one block of NB batch samples)
# Orientation everywhere: features/channels on sublanes, batch x space on lanes.
# ----------------------------------------------------------------------------
def _critic_kernel(taps_ref, plg_ref,
                   w1_ref, g_ref, w2t_ref, b2_ref, wmr_ref, bm_ref,
                   w1m_ref, w1p_ref, w2f_ref, b2f_ref, w3f_ref, b3f_ref,
                   w4f_ref, b4f_ref, o_ref):
    nb = taps_ref.shape[2] // _NPOS1          # samples in this block (static)
    taps = taps_ref[0]                        # (16, nb*256), lane-dense

    # ---- Conv2d(1->32, k=3, s=2, p=1) + ReLU: bias folded via the ones row ----
    c1 = jnp.maximum(
        jnp.dot(w1_ref[...], taps, preferred_element_type=jnp.float32), 0.0)   # (32, nb*256)

    # ---- MaxPool2d(2,2): lanes ordered q*(nb*64)+n*64+cell -> 4 lane-groups ----
    pw1 = nb * _NH1
    h1 = jnp.maximum(jnp.maximum(c1[:, :pw1], c1[:, pw1:2 * pw1]),
                     jnp.maximum(c1[:, 2 * pw1:3 * pw1], c1[:, 3 * pw1:]))      # (32, nb*64)

    # ---- Conv2d(32->16, k=3, s=2, p=1): spatial stencil + zero padding as ONE
    #      matmul against a pack-time 0/1 operator, then 9 accumulating channel
    #      matmuls on 128-aligned lane slices (no scratch, no masked stores) ----
    gat = jnp.dot(h1, g_ref[...], preferred_element_type=jnp.float32)          # (32, 9*nb*16)
    gw = nb * _NPOS2
    acc = jnp.dot(w2t_ref[0], gat[:, :gw], preferred_element_type=jnp.float32)
    for t in range(1, 9):
        acc = acc + jnp.dot(w2t_ref[t], gat[:, t * gw:(t + 1) * gw],
                            preferred_element_type=jnp.float32)
    c2 = jnp.maximum(acc + b2_ref[...], 0.0)                                    # (16, nb*16)

    # ---- MaxPool2d(2,2): lanes ordered qq*(nb*4)+pc*nb+n -> 4 lane-groups ----
    pw2 = nb * _NPC2
    p2 = jnp.maximum(jnp.maximum(c2[:, :pw2], c2[:, pw2:2 * pw2]),
                     jnp.maximum(c2[:, 2 * pw2:3 * pw2], c2[:, 3 * pw2:]))      # (16, nb*4)

    # ---- Flatten + mapfc + ReLU: the NCHW flatten permutation is folded into
    #      wmr at pack time; contraction over (channel, pooled cell) is done as
    #      4 accumulating matmuls on the pc lane-groups ----
    facc = jnp.dot(wmr_ref[0], p2[:, :nb], preferred_element_type=jnp.float32)
    for pc in range(1, _NPC2):
        facc = facc + jnp.dot(wmr_ref[pc], p2[:, pc * nb:(pc + 1) * nb],
                              preferred_element_type=jnp.float32)
    feat = jnp.maximum(facc + bm_ref[...], 0.0)                                 # (128, nb)

    # ---- FC head (feature-major, batch on lanes). The concat(map_features,
    #      pose, lidar, goal) is folded into a split fc1: W1 = [W1m | W1p];
    #      fc1 bias rides on the ones row of plg ----
    x = jnp.dot(w1m_ref[...], feat, preferred_element_type=jnp.float32)
    x = x + jnp.dot(w1p_ref[...], plg_ref[0], preferred_element_type=jnp.float32)
    x = jnp.maximum(x, 0.0)                                                      # (256, nb)
    x = jnp.maximum(jnp.dot(w2f_ref[...], x, preferred_element_type=jnp.float32)
                    + b2f_ref[...], 0.0)                                         # (128, nb)
    x = jnp.maximum(jnp.dot(w3f_ref[...], x, preferred_element_type=jnp.float32)
                    + b3f_ref[...], 0.0)                                         # (64, nb)
    q = jnp.dot(w4f_ref[...], x, preferred_element_type=jnp.float32) + b4f_ref[...]  # (1, nb)
    # Output is only nb floats per step, so lane-padding the store buys nothing.
    o_ref[0] = q


# ----------------------------------------------------------------------------
# Host-side layout plumbing (pure XLA ops, no compute of substance)
# ----------------------------------------------------------------------------
def _conv1_taps_fm(maps, nb):
    """Lane-dense im2col for Conv2d(k=3, s=2, p=1) on the single-channel map.

    Output (num_blocks, 16, nb*256): rows 0..8 = taps (kh*3+kw), row 9 = ones
    (bias fold), rows 10..15 = zero pad; columns ordered q*(nb*64) + n*64 +
    (r*8+s) where q indexes the 2x2 maxpool window and (r,s) the pooled cell,
    so pool1 is 4 full-width lane-slice maxes in the kernel.
    """
    n = maps.shape[0]
    nblk = n // nb
    xp = jnp.pad(maps, ((0, 0), (1, 1), (1, 1)))
    planes = []
    for kh in range(3):
        for kw in range(3):
            tap = xp[:, kh:kh + 2 * _S1:2, kw:kw + 2 * _S1:2]      # (n, 16, 16)
            planes.append(tap.reshape(n, _P1, 2, _P1, 2))           # (n, r, di, s, dj)
    t = jnp.stack(planes, axis=0)                                   # (9, n, r, di, s, dj)
    t = t.transpose(0, 3, 5, 1, 2, 4)                               # (9, di, dj, n, r, s)
    t = t.reshape(9, 2, 2, nblk, nb, _P1, _P1)                      # (9, di, dj, blk, nb, r, s)
    t = t.transpose(3, 0, 1, 2, 4, 5, 6)                            # (blk, 9, di, dj, nb, r, s)
    t = t.reshape(nblk, 9, 4 * nb * _NH1)                           # (blk, 9, nb*256)
    L = t.shape[-1]
    pad = jnp.concatenate([jnp.ones((nblk, 1, L), jnp.float32),
                           jnp.zeros((nblk, _KROWS - 10, L), jnp.float32)], axis=1)
    return jnp.concatenate([t, pad], axis=1)                        # (blk, 16, nb*256)


def _conv2_gather_blockdiag(nb):
    """0/1 operator (nb*64, 9*nb*16) mapping pooled-1 cells to the conv2 tap
    values (3x3/stride-2 stencil with zero padding baked in), block-diagonal
    over the nb samples of one grid block.  Column order t, qq, pc, n so that
    pool2 is 4 lane-slice maxes and mapfc sees contiguous pc lane-groups."""
    g = np.zeros((nb * _NH1, 9 * nb * _NPOS2), np.float32)
    for kh in range(3):
        for kw in range(3):
            t = kh * 3 + kw
            for i in range(_S2):
                for j in range(_S2):
                    qq = (i % 2) * 2 + (j % 2)
                    pc = (i // 2) * _P2 + (j // 2)
                    r, s = 2 * i + kh - 1, 2 * j + kw - 1
                    if 0 <= r < _P1 and 0 <= s < _P1:
                        for n in range(nb):
                            g[n * _NH1 + r * _P1 + s,
                              t * (nb * _NPOS2) + qq * (nb * _NPC2) + pc * nb + n] = 1.0
    return jnp.asarray(g)


# ----------------------------------------------------------------------------
# Parameters: PyTorch-style init + one-time repack for the fused kernel
# ----------------------------------------------------------------------------
def init_params(key):
    def lin(k, fan_in, fan_out):
        kw, kb = jax.random.split(k)
        bound = 1.0 / math.sqrt(fan_in)
        w = jax.random.uniform(kw, (fan_in, fan_out), jnp.float32, -bound, bound)
        b = jax.random.uniform(kb, (fan_out,), jnp.float32, -bound, bound)
        return w, b

    def conv(k, cin, cout):
        kw, kb = jax.random.split(k)
        bound = 1.0 / math.sqrt(cin * 9)
        w = jax.random.uniform(kw, (cout, cin, 3, 3), jnp.float32, -bound, bound)
        b = jax.random.uniform(kb, (cout,), jnp.float32, -bound, bound)
        return w, b

    ks = jax.random.split(key, 7)
    return dict(
        conv1=conv(ks[0], 1, _C1),
        conv2=conv(ks[1], _C1, _C2),
        mapfc=lin(ks[2], _FLAT, MAP_FEATURE_DIM),
        fc1=lin(ks[3], STATE_DIM, 256),
        fc2=lin(ks[4], 256, 128),
        fc3=lin(ks[5], 128, 64),
        fc4=lin(ks[6], 64, 1),
    )


def pack_params(p, nb=NB):
    """Host-side, one-time weight re-layout to feature-major form."""
    c1w, c1b = p["conv1"]          # (32,1,3,3), (32,)
    c2w, c2b = p["conv2"]          # (16,32,3,3), (16,)
    mw, mb = p["mapfc"]            # (64,128), (128,)
    f1w, f1b = p["fc1"]            # (149,256), (256,)
    f2w, f2b = p["fc2"]            # (256,128), (128,)
    f3w, f3b = p["fc3"]            # (128,64), (64,)
    f4w, f4b = p["fc4"]            # (64,1), (1,)

    # conv1 (32,1,3,3) -> (32,16): cols 0..8 taps (kh*3+kw), col 9 bias, rest 0
    w1 = jnp.concatenate([c1w.reshape(_C1, 9), c1b[:, None],
                          jnp.zeros((_C1, _KROWS - 10), jnp.float32)], axis=1)
    # conv2 (16,32,3,3) -> per-tap (9,16,32): w2t[t][co,ci] = c2w[co,ci,kh,kw]
    w2t = jnp.transpose(c2w, (2, 3, 0, 1)).reshape(9, _C2, _C1)
    # mapfc: fold the NCHW flatten order (row co*4+pc): wmr[pc][f,co]=mw[co*4+pc,f]
    wmr = mw.reshape(_C2, _NPC2, MAP_FEATURE_DIM).transpose(1, 2, 0)   # (4,128,16)
    # fc1 split across the concat boundary; bias folded into the plg ones row
    w1m = f1w[:MAP_FEATURE_DIM].T                                      # (256,128)
    w1p = jnp.concatenate([f1w[MAP_FEATURE_DIM:].T, f1b[:, None]], axis=1)  # (256,22)

    return dict(
        w1=w1,
        g=_conv2_gather_blockdiag(nb),
        w2t=w2t, b2=c2b[:, None],
        wmr=wmr, bm=mb[:, None],
        w1m=w1m, w1p=w1p,
        w2f=f2w.T, b2f=f2b[:, None],
        w3f=f3w.T, b3f=f3b[:, None],
        w4f=f4w.T, b4f=f4b[:, None],
    )


_WEIGHT_ORDER = ("w1", "g", "w2t", "b2", "wmr", "bm",
                 "w1m", "w1p", "w2f", "b2f", "w3f", "b3f", "w4f", "b4f")


# ----------------------------------------------------------------------------
# Forward pass: one fused pallas_call, grid over batch blocks of NB samples
# ----------------------------------------------------------------------------
def critic_forward(maps, poses, lidars, goal, packed, *, nb=NB):
    n = maps.shape[0]
    assert n % nb == 0
    nblk = n // nb

    taps = _conv1_taps_fm(maps, nb)                                   # (nblk, 16, nb*256)
    goal_b = jnp.broadcast_to(goal[None, :], (n, GOAL_DIM))
    plg = jnp.concatenate([poses, lidars, goal_b,
                           jnp.ones((n, 1), jnp.float32)], axis=1)    # (N, 22)
    plg_fm = plg.reshape(nblk, nb, PLG_AUG).transpose(0, 2, 1)        # (nblk, 22, nb)

    weights = [packed[k] for k in _WEIGHT_ORDER]
    in_specs = [
        pl.BlockSpec((1, _KROWS, nb * _NPOS1), lambda i: (i, 0, 0)),
        pl.BlockSpec((1, PLG_AUG, nb), lambda i: (i, 0, 0)),
    ] + [
        # constant block index -> weights stay VMEM-resident across grid steps
        pl.BlockSpec(w.shape, lambda i, nd=w.ndim: (0,) * nd) for w in weights
    ]

    out = pl.pallas_call(
        _critic_kernel,
        out_shape=jax.ShapeDtypeStruct((nblk, 1, nb), jnp.float32),
        grid=(nblk,),
        in_specs=in_specs,
        out_specs=pl.BlockSpec((1, 1, nb), lambda i: (i, 0, 0)),
        compiler_params=pltpu.CompilerParams(
            dimension_semantics=("parallel",)),
    )(taps, plg_fm, *weights)

    return out.reshape(n, 1)                                          # (N, 1)


# ----------------------------------------------------------------------------
# Pure-JAX reference (for a correctness check of the fused kernel)
# ----------------------------------------------------------------------------
def critic_reference(maps, poses, lidars, goal, p):
    def conv(x, w, b):
        y = jax.lax.conv_general_dilated(
            x, w, (2, 2), ((1, 1), (1, 1)),
            dimension_numbers=("NCHW", "OIHW", "NCHW"))
        return y + b[None, :, None, None]

    def pool(x):
        return jax.lax.reduce_window(
            x, -jnp.inf, jax.lax.max, (1, 1, 2, 2), (1, 1, 2, 2), "VALID")

    h = pool(jax.nn.relu(conv(maps[:, None], *p["conv1"])))
    h = pool(jax.nn.relu(conv(h, *p["conv2"])))
    h = h.reshape(h.shape[0], -1)                                     # NCHW flatten
    feat = jax.nn.relu(h @ p["mapfc"][0] + p["mapfc"][1])
    goal_b = jnp.broadcast_to(goal[None, :], (maps.shape[0], GOAL_DIM))
    z = jnp.concatenate([feat, poses, lidars, goal_b], axis=1)
    z = jax.nn.relu(z @ p["fc1"][0] + p["fc1"][1])
    z = jax.nn.relu(z @ p["fc2"][0] + p["fc2"][1])
    z = jax.nn.relu(z @ p["fc3"][0] + p["fc3"][1])
    return z @ p["fc4"][0] + p["fc4"][1]


if __name__ == "__main__":
    key = jax.random.PRNGKey(0)
    k_maps, k_pose, k_lidar, k_goal, k_param = jax.random.split(key, 5)
    maps = jax.random.uniform(k_maps, (N_TOTAL, MAP_SIZE, MAP_SIZE), jnp.float32)
    poses = jax.random.normal(k_pose, (N_TOTAL, POSE_DIM), jnp.float32)
    lidars = jax.random.uniform(k_lidar, (N_TOTAL, LIDAR_DIM), jnp.float32)
    goal = jax.random.normal(k_goal, (GOAL_DIM,), jnp.float32)

    params = init_params(k_param)
    packed = pack_params(params)

    fwd = jax.jit(critic_forward)
    q = jax.block_until_ready(fwd(maps, poses, lidars, goal, packed))
    assert q.shape == (N_TOTAL, 1) and q.dtype == jnp.float32

    ref = jax.block_until_ready(critic_reference(maps, poses, lidars, goal, params))
    np.testing.assert_allclose(np.asarray(q), np.asarray(ref), rtol=1e-3, atol=1e-3)

    print("KERNEL_OK")
</pallas_src>

<mosaic_0001>
module attributes {stable_mosaic.version = 11 : i64} {
  func.func @_critic_kernel(%arg0: i32, %arg1: memref<1x16x2048xf32, #tpu.memory_space<vmem>>, %arg2: memref<1x22x8xf32, #tpu.memory_space<vmem>>, %arg3: memref<32x16xf32, #tpu.memory_space<vmem>>, %arg4: memref<512x1152xf32, #tpu.memory_space<vmem>>, %arg5: memref<9x16x32xf32, #tpu.memory_space<vmem>>, %arg6: memref<16x1xf32, #tpu.memory_space<vmem>>, %arg7: memref<4x128x16xf32, #tpu.memory_space<vmem>>, %arg8: memref<128x1xf32, #tpu.memory_space<vmem>>, %arg9: memref<256x128xf32, #tpu.memory_space<vmem>>, %arg10: memref<256x22xf32, #tpu.memory_space<vmem>>, %arg11: memref<128x256xf32, #tpu.memory_space<vmem>>, %arg12: memref<128x1xf32, #tpu.memory_space<vmem>>, %arg13: memref<64x128xf32, #tpu.memory_space<vmem>>, %arg14: memref<64x1xf32, #tpu.memory_space<vmem>>, %arg15: memref<1x64xf32, #tpu.memory_space<vmem>>, %arg16: memref<1x1xf32, #tpu.memory_space<vmem>>, %arg17: memref<1x1x8xf32, #tpu.memory_space<vmem>>) attributes {dimension_semantics = [#tpu.dimension_semantics<parallel>], iteration_bounds = array<i64: 2>, scalar_prefetch = 0 : i64, scratch_operands = 0 : i64, tpu.core_type = #tpu.core_type<tc>, window_params = [{transform_indices = @transform_0, window_bounds = array<i64: 1, 16, 2048>}, {transform_indices = @transform_1, window_bounds = array<i64: 1, 22, 8>}, {pipeline_mode = #tpu.pipeline_mode<synchronous>, transform_indices = @transform_2, window_bounds = array<i64: 32, 16>}, {pipeline_mode = #tpu.pipeline_mode<synchronous>, transform_indices = @transform_3, window_bounds = array<i64: 512, 1152>}, {pipeline_mode = #tpu.pipeline_mode<synchronous>, transform_indices = @transform_4, window_bounds = array<i64: 9, 16, 32>}, {pipeline_mode = #tpu.pipeline_mode<synchronous>, transform_indices = @transform_5, window_bounds = array<i64: 16, 1>}, {pipeline_mode = #tpu.pipeline_mode<synchronous>, transform_indices = @transform_6, window_bounds = array<i64: 4, 128, 16>}, {pipeline_mode = #tpu.pipeline_mode<synchronous>, transform_indices = @transform_7, window_bounds = array<i64: 128, 1>}, {pipeline_mode = #tpu.pipeline_mode<synchronous>, transform_indices = @transform_8, window_bounds = array<i64: 256, 128>}, {pipeline_mode = #tpu.pipeline_mode<synchronous>, transform_indices = @transform_9, window_bounds = array<i64: 256, 22>}, {pipeline_mode = #tpu.pipeline_mode<synchronous>, transform_indices = @transform_10, window_bounds = array<i64: 128, 256>}, {pipeline_mode = #tpu.pipeline_mode<synchronous>, transform_indices = @transform_11, window_bounds = array<i64: 128, 1>}, {pipeline_mode = #tpu.pipeline_mode<synchronous>, transform_indices = @transform_12, window_bounds = array<i64: 64, 128>}, {pipeline_mode = #tpu.pipeline_mode<synchronous>, transform_indices = @transform_13, window_bounds = array<i64: 64, 1>}, {pipeline_mode = #tpu.pipeline_mode<synchronous>, transform_indices = @transform_14, window_bounds = array<i64: 1, 64>}, {pipeline_mode = #tpu.pipeline_mode<synchronous>, transform_indices = @transform_15, window_bounds = array<i64: 1, 1>}, {transform_indices = @transform_16, window_bounds = array<i64: 1, 1, 8>}]} {
    %c0 = arith.constant 0 : index
    %c0_0 = arith.constant 0 : index
    %c0_1 = arith.constant 0 : index
    %0 = vector.load %arg1[%c0, %c0_0, %c0_1] : memref<1x16x2048xf32, #tpu.memory_space<vmem>>, vector<1x16x2048xf32>
    %1 = vector.shape_cast %0 : vector<1x16x2048xf32> to vector<16x2048xf32>
    %c0_2 = arith.constant 0 : index
    %c0_3 = arith.constant 0 : index
    %2 = vector.load %arg3[%c0_2, %c0_3] : memref<32x16xf32, #tpu.memory_space<vmem>>, vector<32x16xf32>
    %cst = arith.constant dense<0.000000e+00> : vector<32x2048xf32>
    %3 = tpu.matmul %2, %1, %cst {dimension_numbers = #tpu.dot_dimension_numbers<[1], [0], [0], [1], [0, 0, 1, 1], [], []>} : vector<32x16xf32>, vector<16x2048xf32>, vector<32x2048xf32> -> vector<32x2048xf32>
    %cst_4 = arith.constant 0.000000e+00 : f32
    %4 = vector.broadcast %cst_4 : f32 to vector<32x2048xf32>
    %5 = arith.maximumf %3, %4 : vector<32x2048xf32>
    %6 = vector.extract_strided_slice %5 {offsets = [0, 0], sizes = [32, 512], strides = [1, 1]} : vector<32x2048xf32> to vector<32x512xf32>
    %7 = vector.extract_strided_slice %5 {offsets = [0, 512], sizes = [32, 512], strides = [1, 1]} : vector<32x2048xf32> to vector<32x512xf32>
    %8 = arith.maximumf %6, %7 : vector<32x512xf32>
    %9 = vector.extract_strided_slice %5 {offsets = [0, 1024], sizes = [32, 512], strides = [1, 1]} : vector<32x2048xf32> to vector<32x512xf32>
    %10 = vector.extract_strided_slice %5 {offsets = [0, 1536], sizes = [32, 512], strides = [1, 1]} : vector<32x2048xf32> to vector<32x512xf32>
    %11 = arith.maximumf %9, %10 : vector<32x512xf32>
    %12 = arith.maximumf %8, %11 : vector<32x512xf32>
    %c0_5 = arith.constant 0 : index
    %c0_6 = arith.constant 0 : index
    %13 = vector.load %arg4[%c0_5, %c0_6] : memref<512x1152xf32, #tpu.memory_space<vmem>>, vector<512x1152xf32>
    %cst_7 = arith.constant dense<0.000000e+00> : vector<32x1152xf32>
    %14 = tpu.matmul %12, %13, %cst_7 {dimension_numbers = #tpu.dot_dimension_numbers<[1], [0], [0], [1], [0, 0, 1, 1], [], []>} : vector<32x512xf32>, vector<512x1152xf32>, vector<32x1152xf32> -> vector<32x1152xf32>
    %c0_8 = arith.constant 0 : index
    %c0_9 = arith.constant 0 : index
    %c0_10 = arith.constant 0 : index
    %15 = vector.load %arg5[%c0_8, %c0_9, %c0_10] : memref<9x16x32xf32, #tpu.memory_space<vmem>>, vector<1x16x32xf32>
    %16 = vector.shape_cast %15 : vector<1x16x32xf32> to vector<16x32xf32>
    %17 = vector.extract_strided_slice %14 {offsets = [0, 0], sizes = [32, 128], strides = [1, 1]} : vector<32x1152xf32> to vector<32x128xf32>
    %cst_11 = arith.constant dense<0.000000e+00> : vector<16x128xf32>
    %18 = tpu.matmul %16, %17, %cst_11 {dimension_numbers = #tpu.dot_dimension_numbers<[1], [0], [0], [1], [0, 0, 1, 1], [], []>} : vector<16x32xf32>, vector<32x128xf32>, vector<16x128xf32> -> vector<16x128xf32>
    %c1 = arith.constant 1 : index
    %c0_12 = arith.constant 0 : index
    %c0_13 = arith.constant 0 : index
    %19 = vector.load %arg5[%c1, %c0_12, %c0_13] : memref<9x16x32xf32, #tpu.memory_space<vmem>>, vector<1x16x32xf32>
    %20 = vector.shape_cast %19 : vector<1x16x32xf32> to vector<16x32xf32>
    %21 = vector.extract_strided_slice %14 {offsets = [0, 128], sizes = [32, 128], strides = [1, 1]} : vector<32x1152xf32> to vector<32x128xf32>
    %cst_14 = arith.constant dense<0.000000e+00> : vector<16x128xf32>
    %22 = tpu.matmul %20, %21, %cst_14 {dimension_numbers = #tpu.dot_dimension_numbers<[1], [0], [0], [1], [0, 0, 1, 1], [], []>} : vector<16x32xf32>, vector<32x128xf32>, vector<16x128xf32> -> vector<16x128xf32>
    %23 = arith.addf %18, %22 : vector<16x128xf32>
    %c2 = arith.constant 2 : index
    %c0_15 = arith.constant 0 : index
    %c0_16 = arith.constant 0 : index
    %24 = vector.load %arg5[%c2, %c0_15, %c0_16] : memref<9x16x32xf32, #tpu.memory_space<vmem>>, vector<1x16x32xf32>
    %25 = vector.shape_cast %24 : vector<1x16x32xf32> to vector<16x32xf32>
    %26 = vector.extract_strided_slice %14 {offsets = [0, 256], sizes = [32, 128], strides = [1, 1]} : vector<32x1152xf32> to vector<32x128xf32>
    %cst_17 = arith.constant dense<0.000000e+00> : vector<16x128xf32>
    %27 = tpu.matmul %25, %26, %cst_17 {dimension_numbers = #tpu.dot_dimension_numbers<[1], [0], [0], [1], [0, 0, 1, 1], [], []>} : vector<16x32xf32>, vector<32x128xf32>, vector<16x128xf32> -> vector<16x128xf32>
    %28 = arith.addf %23, %27 : vector<16x128xf32>
    %c3 = arith.constant 3 : index
    %c0_18 = arith.constant 0 : index
    %c0_19 = arith.constant 0 : index
    %29 = vector.load %arg5[%c3, %c0_18, %c0_19] : memref<9x16x32xf32, #tpu.memory_space<vmem>>, vector<1x16x32xf32>
    %30 = vector.shape_cast %29 : vector<1x16x32xf32> to vector<16x32xf32>
    %31 = vector.extract_strided_slice %14 {offsets = [0, 384], sizes = [32, 128], strides = [1, 1]} : vector<32x1152xf32> to vector<32x128xf32>
    %cst_20 = arith.constant dense<0.000000e+00> : vector<16x128xf32>
    %32 = tpu.matmul %30, %31, %cst_20 {dimension_numbers = #tpu.dot_dimension_numbers<[1], [0], [0], [1], [0, 0, 1, 1], [], []>} : vector<16x32xf32>, vector<32x128xf32>, vector<16x128xf32> -> vector<16x128xf32>
    %33 = arith.addf %28, %32 : vector<16x128xf32>
    %c4 = arith.constant 4 : index
    %c0_21 = arith.constant 0 : index
    %c0_22 = arith.constant 0 : index
    %34 = vector.load %arg5[%c4, %c0_21, %c0_22] : memref<9x16x32xf32, #tpu.memory_space<vmem>>, vector<1x16x32xf32>
    %35 = vector.shape_cast %34 : vector<1x16x32xf32> to vector<16x32xf32>
    %36 = vector.extract_strided_slice %14 {offsets = [0, 512], sizes = [32, 128], strides = [1, 1]} : vector<32x1152xf32> to vector<32x128xf32>
    %cst_23 = arith.constant dense<0.000000e+00> : vector<16x128xf32>
    %37 = tpu.matmul %35, %36, %cst_23 {dimension_numbers = #tpu.dot_dimension_numbers<[1], [0], [0], [1], [0, 0, 1, 1], [], []>} : vector<16x32xf32>, vector<32x128xf32>, vector<16x128xf32> -> vector<16x128xf32>
    %38 = arith.addf %33, %37 : vector<16x128xf32>
    %c5 = arith.constant 5 : index
    %c0_24 = arith.constant 0 : index
    %c0_25 = arith.constant 0 : index
    %39 = vector.load %arg5[%c5, %c0_24, %c0_25] : memref<9x16x32xf32, #tpu.memory_space<vmem>>, vector<1x16x32xf32>
    %40 = vector.shape_cast %39 : vector<1x16x32xf32> to vector<16x32xf32>
    %41 = vector.extract_strided_slice %14 {offsets = [0, 640], sizes = [32, 128], strides = [1, 1]} : vector<32x1152xf32> to vector<32x128xf32>
    %cst_26 = arith.constant dense<0.000000e+00> : vector<16x128xf32>
    %42 = tpu.matmul %40, %41, %cst_26 {dimension_numbers = #tpu.dot_dimension_numbers<[1], [0], [0], [1], [0, 0, 1, 1], [], []>} : vector<16x32xf32>, vector<32x128xf32>, vector<16x128xf32> -> vector<16x128xf32>
    %43 = arith.addf %38, %42 : vector<16x128xf32>
    %c6 = arith.constant 6 : index
    %c0_27 = arith.constant 0 : index
    %c0_28 = arith.constant 0 : index
    %44 = vector.load %arg5[%c6, %c0_27, %c0_28] : memref<9x16x32xf32, #tpu.memory_space<vmem>>, vector<1x16x32xf32>
    %45 = vector.shape_cast %44 : vector<1x16x32xf32> to vector<16x32xf32>
    %46 = vector.extract_strided_slice %14 {offsets = [0, 768], sizes = [32, 128], strides = [1, 1]} : vector<32x1152xf32> to vector<32x128xf32>
    %cst_29 = arith.constant dense<0.000000e+00> : vector<16x128xf32>
    %47 = tpu.matmul %45, %46, %cst_29 {dimension_numbers = #tpu.dot_dimension_numbers<[1], [0], [0], [1], [0, 0, 1, 1], [], []>} : vector<16x32xf32>, vector<32x128xf32>, vector<16x128xf32> -> vector<16x128xf32>
    %48 = arith.addf %43, %47 : vector<16x128xf32>
    %c7 = arith.constant 7 : index
    %c0_30 = arith.constant 0 : index
    %c0_31 = arith.constant 0 : index
    %49 = vector.load %arg5[%c7, %c0_30, %c0_31] : memref<9x16x32xf32, #tpu.memory_space<vmem>>, vector<1x16x32xf32>
    %50 = vector.shape_cast %49 : vector<1x16x32xf32> to vector<16x32xf32>
    %51 = vector.extract_strided_slice %14 {offsets = [0, 896], sizes = [32, 128], strides = [1, 1]} : vector<32x1152xf32> to vector<32x128xf32>
    %cst_32 = arith.constant dense<0.000000e+00> : vector<16x128xf32>
    %52 = tpu.matmul %50, %51, %cst_32 {dimension_numbers = #tpu.dot_dimension_numbers<[1], [0], [0], [1], [0, 0, 1, 1], [], []>} : vector<16x32xf32>, vector<32x128xf32>, vector<16x128xf32> -> vector<16x128xf32>
    %53 = arith.addf %48, %52 : vector<16x128xf32>
    %c8 = arith.constant 8 : index
    %c0_33 = arith.constant 0 : index
    %c0_34 = arith.constant 0 : index
    %54 = vector.load %arg5[%c8, %c0_33, %c0_34] : memref<9x16x32xf32, #tpu.memory_space<vmem>>, vector<1x16x32xf32>
    %55 = vector.shape_cast %54 : vector<1x16x32xf32> to vector<16x32xf32>
    %56 = vector.extract_strided_slice %14 {offsets = [0, 1024], sizes = [32, 128], strides = [1, 1]} : vector<32x1152xf32> to vector<32x128xf32>
    %cst_35 = arith.constant dense<0.000000e+00> : vector<16x128xf32>
    %57 = tpu.matmul %55, %56, %cst_35 {dimension_numbers = #tpu.dot_dimension_numbers<[1], [0], [0], [1], [0, 0, 1, 1], [], []>} : vector<16x32xf32>, vector<32x128xf32>, vector<16x128xf32> -> vector<16x128xf32>
    %58 = arith.addf %53, %57 : vector<16x128xf32>
    %c0_36 = arith.constant 0 : index
    %c0_37 = arith.constant 0 : index
    %59 = vector.load %arg6[%c0_36, %c0_37] : memref<16x1xf32, #tpu.memory_space<vmem>>, vector<16x1xf32>
    %60 = vector.broadcast %59 : vector<16x1xf32> to vector<16x128xf32>
    %61 = arith.addf %58, %60 : vector<16x128xf32>
    %cst_38 = arith.constant 0.000000e+00 : f32
    %62 = vector.broadcast %cst_38 : f32 to vector<16x128xf32>
    %63 = arith.maximumf %61, %62 : vector<16x128xf32>
    %64 = vector.extract_strided_slice %63 {offsets = [0, 0], sizes = [16, 32], strides = [1, 1]} : vector<16x128xf32> to vector<16x32xf32>
    %65 = vector.extract_strided_slice %63 {offsets = [0, 32], sizes = [16, 32], strides = [1, 1]} : vector<16x128xf32> to vector<16x32xf32>
    %66 = arith.maximumf %64, %65 : vector<16x32xf32>
    %67 = vector.extract_strided_slice %63 {offsets = [0, 64], sizes = [16, 32], strides = [1, 1]} : vector<16x128xf32> to vector<16x32xf32>
    %68 = vector.extract_strided_slice %63 {offsets = [0, 96], sizes = [16, 32], strides = [1, 1]} : vector<16x128xf32> to vector<16x32xf32>
    %69 = arith.maximumf %67, %68 : vector<16x32xf32>
    %70 = arith.maximumf %66, %69 : vector<16x32xf32>
    %c0_39 = arith.constant 0 : index
    %c0_40 = arith.constant 0 : index
    %c0_41 = arith.constant 0 : index
    %71 = vector.load %arg7[%c0_39, %c0_40, %c0_41] : memref<4x128x16xf32, #tpu.memory_space<vmem>>, vector<1x128x16xf32>
    %72 = vector.shape_cast %71 : vector<1x128x16xf32> to vector<128x16xf32>
    %73 = vector.extract_strided_slice %70 {offsets = [0, 0], sizes = [16, 8], strides = [1, 1]} : vector<16x32xf32> to vector<16x8xf32>
    %cst_42 = arith.constant dense<0.000000e+00> : vector<128x8xf32>
    %74 = tpu.matmul %72, %73, %cst_42 {dimension_numbers = #tpu.dot_dimension_numbers<[1], [0], [0], [1], [0, 0, 1, 1], [], []>} : vector<128x16xf32>, vector<16x8xf32>, vector<128x8xf32> -> vector<128x8xf32>
    %c1_43 = arith.constant 1 : index
    %c0_44 = arith.constant 0 : index
    %c0_45 = arith.constant 0 : index
    %75 = vector.load %arg7[%c1_43, %c0_44, %c0_45] : memref<4x128x16xf32, #tpu.memory_space<vmem>>, vector<1x128x16xf32>
    %76 = vector.shape_cast %75 : vector<1x128x16xf32> to vector<128x16xf32>
    %77 = vector.extract_strided_slice %70 {offsets = [0, 8], sizes = [16, 8], strides = [1, 1]} : vector<16x32xf32> to vector<16x8xf32>
    %cst_46 = arith.constant dense<0.000000e+00> : vector<128x8xf32>
    %78 = tpu.matmul %76, %77, %cst_46 {dimension_numbers = #tpu.dot_dimension_numbers<[1], [0], [0], [1], [0, 0, 1, 1], [], []>} : vector<128x16xf32>, vector<16x8xf32>, vector<128x8xf32> -> vector<128x8xf32>
    %79 = arith.addf %74, %78 : vector<128x8xf32>
    %c2_47 = arith.constant 2 : index
    %c0_48 = arith.constant 0 : index
    %c0_49 = arith.constant 0 : index
    %80 = vector.load %arg7[%c2_47, %c0_48, %c0_49] : memref<4x128x16xf32, #tpu.memory_space<vmem>>, vector<1x128x16xf32>
    %81 = vector.shape_cast %80 : vector<1x128x16xf32> to vector<128x16xf32>
    %82 = vector.extract_strided_slice %70 {offsets = [0, 16], sizes = [16, 8], strides = [1, 1]} : vector<16x32xf32> to vector<16x8xf32>
    %cst_50 = arith.constant dense<0.000000e+00> : vector<128x8xf32>
    %83 = tpu.matmul %81, %82, %cst_50 {dimension_numbers = #tpu.dot_dimension_numbers<[1], [0], [0], [1], [0, 0, 1, 1], [], []>} : vector<128x16xf32>, vector<16x8xf32>, vector<128x8xf32> -> vector<128x8xf32>
    %84 = arith.addf %79, %83 : vector<128x8xf32>
    %c3_51 = arith.constant 3 : index
    %c0_52 = arith.constant 0 : index
    %c0_53 = arith.constant 0 : index
    %85 = vector.load %arg7[%c3_51, %c0_52, %c0_53] : memref<4x128x16xf32, #tpu.memory_space<vmem>>, vector<1x128x16xf32>
    %86 = vector.shape_cast %85 : vector<1x128x16xf32> to vector<128x16xf32>
    %87 = vector.extract_strided_slice %70 {offsets = [0, 24], sizes = [16, 8], strides = [1, 1]} : vector<16x32xf32> to vector<16x8xf32>
    %cst_54 = arith.constant dense<0.000000e+00> : vector<128x8xf32>
    %88 = tpu.matmul %86, %87, %cst_54 {dimension_numbers = #tpu.dot_dimension_numbers<[1], [0], [0], [1], [0, 0, 1, 1], [], []>} : vector<128x16xf32>, vector<16x8xf32>, vector<128x8xf32> -> vector<128x8xf32>
    %89 = arith.addf %84, %88 : vector<128x8xf32>
    %c0_55 = arith.constant 0 : index
    %c0_56 = arith.constant 0 : index
    %90 = vector.load %arg8[%c0_55, %c0_56] : memref<128x1xf32, #tpu.memory_space<vmem>>, vector<128x1xf32>
    %91 = vector.broadcast %90 : vector<128x1xf32> to vector<128x8xf32>
    %92 = arith.addf %89, %91 : vector<128x8xf32>
    %cst_57 = arith.constant 0.000000e+00 : f32
    %93 = vector.broadcast %cst_57 : f32 to vector<128x8xf32>
    %94 = arith.maximumf %92, %93 : vector<128x8xf32>
    %c0_58 = arith.constant 0 : index
    %c0_59 = arith.constant 0 : index
    %95 = vector.load %arg9[%c0_58, %c0_59] : memref<256x128xf32, #tpu.memory_space<vmem>>, vector<256x128xf32>
    %cst_60 = arith.constant dense<0.000000e+00> : vector<256x8xf32>
    %96 = tpu.matmul %95, %94, %cst_60 {dimension_numbers = #tpu.dot_dimension_numbers<[1], [0], [0], [1], [0, 0, 1, 1], [], []>} : vector<256x128xf32>, vector<128x8xf32>, vector<256x8xf32> -> vector<256x8xf32>
    %c0_61 = arith.constant 0 : index
    %c0_62 = arith.constant 0 : index
    %97 = vector.load %arg10[%c0_61, %c0_62] : memref<256x22xf32, #tpu.memory_space<vmem>>, vector<256x22xf32>
    %c0_63 = arith.constant 0 : index
    %c0_64 = arith.constant 0 : index
    %c0_65 = arith.constant 0 : index
    %98 = vector.load %arg2[%c0_63, %c0_64, %c0_65] : memref<1x22x8xf32, #tpu.memory_space<vmem>>, vector<1x22x8xf32>
    %99 = vector.shape_cast %98 : vector<1x22x8xf32> to vector<22x8xf32>
    %cst_66 = arith.constant dense<0.000000e+00> : vector<256x8xf32>
    %100 = tpu.matmul %97, %99, %cst_66 {dimension_numbers = #tpu.dot_dimension_numbers<[1], [0], [0], [1], [0, 0, 1, 1], [], []>} : vector<256x22xf32>, vector<22x8xf32>, vector<256x8xf32> -> vector<256x8xf32>
    %101 = arith.addf %96, %100 : vector<256x8xf32>
    %cst_67 = arith.constant 0.000000e+00 : f32
    %102 = vector.broadcast %cst_67 : f32 to vector<256x8xf32>
    %103 = arith.maximumf %101, %102 : vector<256x8xf32>
    %c0_68 = arith.constant 0 : index
    %c0_69 = arith.constant 0 : index
    %104 = vector.load %arg11[%c0_68, %c0_69] : memref<128x256xf32, #tpu.memory_space<vmem>>, vector<128x256xf32>
    %cst_70 = arith.constant dense<0.000000e+00> : vector<128x8xf32>
    %105 = tpu.matmul %104, %103, %cst_70 {dimension_numbers = #tpu.dot_dimension_numbers<[1], [0], [0], [1], [0, 0, 1, 1], [], []>} : vector<128x256xf32>, vector<256x8xf32>, vector<128x8xf32> -> vector<128x8xf32>
    %c0_71 = arith.constant 0 : index
    %c0_72 = arith.constant 0 : index
    %106 = vector.load %arg12[%c0_71, %c0_72] : memref<128x1xf32, #tpu.memory_space<vmem>>, vector<128x1xf32>
    %107 = vector.broadcast %106 : vector<128x1xf32> to vector<128x8xf32>
    %108 = arith.addf %105, %107 : vector<128x8xf32>
    %cst_73 = arith.constant 0.000000e+00 : f32
    %109 = vector.broadcast %cst_73 : f32 to vector<128x8xf32>
    %110 = arith.maximumf %108, %109 : vector<128x8xf32>
    %c0_74 = arith.constant 0 : index
    %c0_75 = arith.constant 0 : index
    %111 = vector.load %arg13[%c0_74, %c0_75] : memref<64x128xf32, #tpu.memory_space<vmem>>, vector<64x128xf32>
    %cst_76 = arith.constant dense<0.000000e+00> : vector<64x8xf32>
    %112 = tpu.matmul %111, %110, %cst_76 {dimension_numbers = #tpu.dot_dimension_numbers<[1], [0], [0], [1], [0, 0, 1, 1], [], []>} : vector<64x128xf32>, vector<128x8xf32>, vector<64x8xf32> -> vector<64x8xf32>
    %c0_77 = arith.constant 0 : index
    %c0_78 = arith.constant 0 : index
    %113 = vector.load %arg14[%c0_77, %c0_78] : memref<64x1xf32, #tpu.memory_space<vmem>>, vector<64x1xf32>
    %114 = vector.broadcast %113 : vector<64x1xf32> to vector<64x8xf32>
    %115 = arith.addf %112, %114 : vector<64x8xf32>
    %cst_79 = arith.constant 0.000000e+00 : f32
    %116 = vector.broadcast %cst_79 : f32 to vector<64x8xf32>
    %117 = arith.maximumf %115, %116 : vector<64x8xf32>
    %c0_80 = arith.constant 0 : index
    %c0_81 = arith.constant 0 : index
    %118 = vector.load %arg15[%c0_80, %c0_81] : memref<1x64xf32, #tpu.memory_space<vmem>>, vector<1x64xf32>
    %cst_82 = arith.constant dense<0.000000e+00> : vector<1x8xf32>
    %119 = tpu.matmul %118, %117, %cst_82 {dimension_numbers = #tpu.dot_dimension_numbers<[1], [0], [0], [1], [0, 0, 1, 1], [], []>} : vector<1x64xf32>, vector<64x8xf32>, vector<1x8xf32> -> vector<1x8xf32>
    %c0_83 = arith.constant 0 : index
    %c0_84 = arith.constant 0 : index
    %120 = vector.load %arg16[%c0_83, %c0_84] : memref<1x1xf32, #tpu.memory_space<vmem>>, vector<1x1xf32>
    %121 = vector.broadcast %120 : vector<1x1xf32> to vector<1x8xf32>
    %122 = arith.addf %119, %121 : vector<1x8xf32>
    %c0_85 = arith.constant 0 : index
    %c0_86 = arith.constant 0 : index
    %c0_87 = arith.constant 0 : index
    %123 = vector.load %arg17[%c0_85, %c0_86, %c0_87] : memref<1x1x8xf32, #tpu.memory_space<vmem>>, vector<1x1x8xf32>
    %124 = vector.shape_cast %123 : vector<1x1x8xf32> to vector<1x8xf32>
    %125 = vector.shape_cast %122 : vector<1x8xf32> to vector<1x1x8xf32>
    tpu.vector_store %arg17[%c0_85, %c0_86, %c0_87], %125 {strides = array<i32>} : memref<1x1x8xf32, #tpu.memory_space<vmem>>, vector<1x1x8xf32>,
    return
  }
  func.func @transform_0(%arg0: i32) -> (i32, i32, i32) {
    %c0_i32 = arith.constant 0 : i32
    %c0_i32_0 = arith.constant 0 : i32
    %c0_i32_1 = arith.constant 0 : i32
    return %arg0, %c0_i32, %c0_i32_0 : i32, i32, i32
  }
  func.func @transform_1(%arg0: i32) -> (i32, i32, i32) {
    %c0_i32 = arith.constant 0 : i32
    %c0_i32_0 = arith.constant 0 : i32
    %c0_i32_1 = arith.constant 0 : i32
    return %arg0, %c0_i32, %c0_i32_0 : i32, i32, i32
  }
  func.func @transform_2(%arg0: i32) -> (i32, i32) {
    %c0_i32 = arith.constant 0 : i32
    %c0_i32_0 = arith.constant 0 : i32
    %c0_i32_1 = arith.constant 0 : i32
    return %c0_i32, %c0_i32_0 : i32, i32
  }
  func.func @transform_3(%arg0: i32) -> (i32, i32) {
    %c0_i32 = arith.constant 0 : i32
    %c0_i32_0 = arith.constant 0 : i32
    %c0_i32_1 = arith.constant 0 : i32
    return %c0_i32, %c0_i32_0 : i32, i32
  }
  func.func @transform_4(%arg0: i32) -> (i32, i32, i32) {
    %c0_i32 = arith.constant 0 : i32
    %c0_i32_0 = arith.constant 0 : i32
    %c0_i32_1 = arith.constant 0 : i32
    %c0_i32_2 = arith.constant 0 : i32
    return %c0_i32, %c0_i32_0, %c0_i32_1 : i32, i32, i32
  }
  func.func @transform_5(%arg0: i32) -> (i32, i32) {
    %c0_i32 = arith.constant 0 : i32
    %c0_i32_0 = arith.constant 0 : i32
    %c0_i32_1 = arith.constant 0 : i32
    return %c0_i32, %c0_i32_0 : i32, i32
  }
  func.func @transform_6(%arg0: i32) -> (i32, i32, i32) {
    %c0_i32 = arith.constant 0 : i32
    %c0_i32_0 = arith.constant 0 : i32
    %c0_i32_1 = arith.constant 0 : i32
    %c0_i32_2 = arith.constant 0 : i32
    return %c0_i32, %c0_i32_0, %c0_i32_1 : i32, i32, i32
  }
  func.func @transform_7(%arg0: i32) -> (i32, i32) {
    %c0_i32 = arith.constant 0 : i32
    %c0_i32_0 = arith.constant 0 : i32
    %c0_i32_1 = arith.constant 0 : i32
    return %c0_i32, %c0_i32_0 : i32, i32
  }
  func.func @transform_8(%arg0: i32) -> (i32, i32) {
    %c0_i32 = arith.constant 0 : i32
    %c0_i32_0 = arith.constant 0 : i32
    %c0_i32_1 = arith.constant 0 : i32
    return %c0_i32, %c0_i32_0 : i32, i32
  }
  func.func @transform_9(%arg0: i32) -> (i32, i32) {
    %c0_i32 = arith.constant 0 : i32
    %c0_i32_0 = arith.constant 0 : i32
    %c0_i32_1 = arith.constant 0 : i32
    return %c0_i32, %c0_i32_0 : i32, i32
  }
  func.func @transform_10(%arg0: i32) -> (i32, i32) {
    %c0_i32 = arith.constant 0 : i32
    %c0_i32_0 = arith.constant 0 : i32
    %c0_i32_1 = arith.constant 0 : i32
    return %c0_i32, %c0_i32_0 : i32, i32
  }
  func.func @transform_11(%arg0: i32) -> (i32, i32) {
    %c0_i32 = arith.constant 0 : i32
    %c0_i32_0 = arith.constant 0 : i32
    %c0_i32_1 = arith.constant 0 : i32
    return %c0_i32, %c0_i32_0 : i32, i32
  }
  func.func @transform_12(%arg0: i32) -> (i32, i32) {
    %c0_i32 = arith.constant 0 : i32
    %c0_i32_0 = arith.constant 0 : i32
    %c0_i32_1 = arith.constant 0 : i32
    return %c0_i32, %c0_i32_0 : i32, i32
  }
  func.func @transform_13(%arg0: i32) -> (i32, i32) {
    %c0_i32 = arith.constant 0 : i32
    %c0_i32_0 = arith.constant 0 : i32
    %c0_i32_1 = arith.constant 0 : i32
    return %c0_i32, %c0_i32_0 : i32, i32
  }
  func.func @transform_14(%arg0: i32) -> (i32, i32) {
    %c0_i32 = arith.constant 0 : i32
    %c0_i32_0 = arith.constant 0 : i32
    %c0_i32_1 = arith.constant 0 : i32
    return %c0_i32, %c0_i32_0 : i32, i32
  }
  func.func @transform_15(%arg0: i32) -> (i32, i32) {
    %c0_i32 = arith.constant 0 : i32
    %c0_i32_0 = arith.constant 0 : i32
    %c0_i32_1 = arith.constant 0 : i32
    return %c0_i32, %c0_i32_0 : i32, i32
  }
  func.func @transform_16(%arg0: i32) -> (i32, i32, i32) {
    %c0_i32 = arith.constant 0 : i32
    %c0_i32_0 = arith.constant 0 : i32
    %c0_i32_1 = arith.constant 0 : i32
    return %arg0, %c0_i32, %c0_i32_0 : i32, i32, i32
  }
}

</mosaic_0001>

<llo_original>
// kernel: critic_forward.1
$region0: #{critic_forward.1}
  #allocation0 [shape = 'u32[]', space=smem, size = 0x4, offset = 0x4, fixed_abs, tag = 'smem constant byte address 0x4 - core index']
  #allocation1 [shape = 'u32[72,128]{1,0:T(1,128)}', space=vmem, size = 0x9000, scoped, tag = 'internal scratch']
  #allocation2 [shape = 'f32[1,1]{1,0:T(1,128)S(1)}', space=vmem, size = 0x200, scoped, tag = 'scoped memory for critic_forward.1']
  %s0 = inlined_call_operand.vmem [shape: f32[2,16,2048], index: 0, kind: input, shape index: {}]
  %s1 = inlined_call_operand.vmem [shape: f32[2,22,8], index: 1, kind: input, shape index: {}]
  %s2 = inlined_call_operand.vmem [shape: f32[32,16], index: 2, kind: input, shape index: {}]
  %s3 = inlined_call_operand.vmem [shape: f32[512,1152], index: 3, kind: input, shape index: {}]
  %s4 = inlined_call_operand.vmem [shape: f32[9,16,32], index: 4, kind: input, shape index: {}]
  %s5 = inlined_call_operand.vmem [shape: f32[16,1], index: 5, kind: input, shape index: {}]
  %s6 = inlined_call_operand.vmem [shape: f32[4,128,16], index: 6, kind: input, shape index: {}]
  %s7 = inlined_call_operand.vmem [shape: f32[128,1], index: 7, kind: input, shape index: {}]
  %s8 = inlined_call_operand.vmem [shape: f32[256,128], index: 8, kind: input, shape index: {}]
  %s9 = inlined_call_operand.vmem [shape: f32[256,22], index: 9, kind: input, shape index: {}]
  %s10 = inlined_call_operand.vmem [shape: f32[128,256], index: 10, kind: input, shape index: {}]
  %s11 = inlined_call_operand.vmem [shape: f32[128,1], index: 11, kind: input, shape index: {}]
  %s12 = inlined_call_operand.vmem [shape: f32[64,128], index: 12, kind: input, shape index: {}]
  %s13 = inlined_call_operand.vmem [shape: f32[64,1], index: 13, kind: input, shape index: {}]
  %s14 = inlined_call_operand.vmem [shape: f32[1,64], index: 14, kind: input, shape index: {}]
  %s15 = inlined_call_operand.<no memory space> [shape: f32[1,1], index: 15, kind: input, shape index: {}]
  %s16 = inlined_call_operand.vmem [shape: f32[2,1,8], index: 16, kind: output, shape index: {}]
  %s17 = sld [smem:[#allocation0]]
  $region97: #{critic_forward.1} parent=0
    _
  %s19 = ssub.s32 1, %s17
  %s20 = scalar_select 0, %s19, %s17
  %v21 = vstv %s15
  %22 = vst [vmem:[#allocation2] sm:$0x1] %v21
  loop: start=0, step=1, limit=4
  $region2: #{critic_forward.1} parent=0 // loop_pre_header
    _
  $region3: #{critic_forward.1} parent=0 // loop_header
    %s24 = sphi 0, %s28
    %p25 = scmp.ge.s32.totalorder %s24, 4
    %s34 = sphi 0, %s36
    %s37 = sphi 0, %s34
    %s38 = sphi 0, %s37
    %s54 = sphi 0, %s38
    %s60 = sphi 0, %s62
    %s63 = sphi 0, %s60
    %s64 = sphi 0, %s63
    %s80 = sphi 0, %s64
    %s84 = sphi 0, %s84
    %s86 = sphi 0, %s84
    %s87 = sphi 0, %s86
    %s101 = sphi 0, %s87
    %s105 = sphi 0, %s105
    %s107 = sphi 0, %s105
    %s108 = sphi 0, %s107
    %s122 = sphi 0, %s108
    %s126 = sphi 0, %s126
    %s128 = sphi 0, %s126
    %s129 = sphi 0, %s128
    %s143 = sphi 0, %s129
    %s147 = sphi 0, %s147
    %s149 = sphi 0, %s147
    %s150 = sphi 0, %s149
    %s164 = sphi 0, %s150
    %s168 = sphi 0, %s168
    %s170 = sphi 0, %s168
    %s171 = sphi 0, %s170
    %s185 = sphi 0, %s171
    %s189 = sphi 0, %s189
    %s191 = sphi 0, %s189
    %s192 = sphi 0, %s191
    %s206 = sphi 0, %s192
    %s210 = sphi 0, %s210
    %s212 = sphi 0, %s210
    %s213 = sphi 0, %s212
    %s227 = sphi 0, %s213
    %s231 = sphi 0, %s231
    %s233 = sphi 0, %s231
    %s234 = sphi 0, %s233
    %s248 = sphi 0, %s234
    %s252 = sphi 0, %s252
    %s254 = sphi 0, %s252
    %s255 = sphi 0, %s254
    %s269 = sphi 0, %s255
    %s273 = sphi 0, %s273
    %s275 = sphi 0, %s273
    %s276 = sphi 0, %s275
    %s290 = sphi 0, %s276
    %s294 = sphi 0, %s294
    %s296 = sphi 0, %s294
    %s297 = sphi 0, %s296
    %s311 = sphi 0, %s297
    %s315 = sphi 0, %s315
    %s317 = sphi 0, %s315
    %s318 = sphi 0, %s317
    %s332 = sphi 0, %s318
    %s336 = sphi 0, %s336
    %s338 = sphi 0, %s336
    %s339 = sphi 0, %s338
    %s353 = sphi 0, %s339
    %s357 = sphi 0, %s357
    %s359 = sphi 0, %s357
    %s360 = sphi 0, %s359
    %s374 = sphi 0, %s360
    %s380 = sphi 0, %s382
    %s383 = sphi 0, %s380
    %s384 = sphi 0, %s383
    %s400 = sphi 0, %s384
  $region4: #{critic_forward.1} parent=0 // loop_header_branch
    %27 = sbr.rel (%p25) target = $region8
  $region5: #{critic_forward.1} parent=0 // loop_body
    %s29 = ssub.s32 %s24, 1
    %s30 = ssub.s32 %s24, 2
    %s31 = sadd.s32 %s24, 1
    %s32 = ssub.s32 %s24, %s31
    %p33 = scmp.eq.s32.totalorder %s32, 0
    %s35 = sadd.s32 %s34, 1
    %s36 = scalar_select %p33, %s34, %s35
    %p39 = pneg %p33
    %p40 = scmp.eq.s32.totalorder %s24, 1
    %p41 = por %p39, %p40
    %p42 = scmp.ne.s32.totalorder %s34, %s37
    %p43 = scmp.eq.s32.totalorder %s24, 0
    %p44 = por %p42, %p43
    %p45 = scmp.ne.s32.totalorder %s34, %s37
    %p46 = scmp.eq.s32.totalorder %s29, 1
    %p47 = por %p45, %p46
    %p48 = scmp.ne.s32.totalorder %s37, %s38
    %p49 = scmp.eq.s32.totalorder %s29, 0
    %p50 = por %p48, %p49
    %p51 = scmp.ne.s32.totalorder %s37, %s38
    %p52 = scmp.eq.s32.totalorder %s30, 1
    %p53 = por %p51, %p52
    %p55 = scmp.ne.s32.totalorder %s38, %s54
    %p56 = scmp.eq.s32.totalorder %s30, 0
    %p57 = por %p55, %p56
    %s58 = ssub.s32 %s24, %s31
    %p59 = scmp.eq.s32.totalorder %s58, 0
    %s61 = sadd.s32 %s60, 1
    %s62 = scalar_select %p59, %s60, %s61
    %p65 = pneg %p59
    %p66 = scmp.eq.s32.totalorder %s24, 1
    %p67 = por %p65, %p66
    %p68 = scmp.ne.s32.totalorder %s60, %s63
    %p69 = scmp.eq.s32.totalorder %s24, 0
    %p70 = por %p68, %p69
    %p71 = scmp.ne.s32.totalorder %s60, %s63
    %p72 = scmp.eq.s32.totalorder %s29, 1
    %p73 = por %p71, %p72
    %p74 = scmp.ne.s32.totalorder %s63, %s64
    %p75 = scmp.eq.s32.totalorder %s29, 0
    %p76 = por %p74, %p75
    %p77 = scmp.ne.s32.totalorder %s63, %s64
    %p78 = scmp.eq.s32.totalorder %s30, 1
    %p79 = por %p77, %p78
    %p81 = scmp.ne.s32.totalorder %s64, %s80
    %p82 = scmp.eq.s32.totalorder %s30, 0
    %p83 = por %p81, %p82
    %s85 = sadd.s32 %s84, 1
    %p88 = scmp.eq.s32.totalorder %s24, 1
    %p89 = scmp.ne.s32.totalorder %s84, %s86
    %p90 = scmp.eq.s32.totalorder %s24, 0
    %p91 = por %p89, %p90
    %p92 = scmp.ne.s32.totalorder %s84, %s86
    %p93 = scmp.eq.s32.totalorder %s29, 1
    %p94 = por %p92, %p93
    %p95 = scmp.ne.s32.totalorder %s86, %s87
    %p96 = scmp.eq.s32.totalorder %s29, 0
    %p97 = por %p95, %p96
    %p98 = scmp.ne.s32.totalorder %s86, %s87
    %p99 = scmp.eq.s32.totalorder %s30, 1
    %p100 = por %p98, %p99
    %p102 = scmp.ne.s32.totalorder %s87, %s101
    %p103 = scmp.eq.s32.totalorder %s30, 0
    %p104 = por %p102, %p103
    %s106 = sadd.s32 %s105, 1
    %p109 = scmp.eq.s32.totalorder %s24, 1
    %p110 = scmp.ne.s32.totalorder %s105, %s107
    %p111 = scmp.eq.s32.totalorder %s24, 0
    %p112 = por %p110, %p111
    %p113 = scmp.ne.s32.totalorder %s105, %s107
    %p114 = scmp.eq.s32.totalorder %s29, 1
    %p115 = por %p113, %p114
    %p116 = scmp.ne.s32.totalorder %s107, %s108
    %p117 = scmp.eq.s32.totalorder %s29, 0
    %p118 = por %p116, %p117
    %p119 = scmp.ne.s32.totalorder %s107, %s108
    %p120 = scmp.eq.s32.totalorder %s30, 1
    %p121 = por %p119, %p120
    %p123 = scmp.ne.s32.totalorder %s108, %s122
    %p124 = scmp.eq.s32.totalorder %s30, 0
    %p125 = por %p123, %p124
    %s127 = sadd.s32 %s126, 1
    %p130 = scmp.eq.s32.totalorder %s24, 1
    %p131 = scmp.ne.s32.totalorder %s126, %s128
    %p132 = scmp.eq.s32.totalorder %s24, 0
    %p133 = por %p131, %p132
    %p134 = scmp.ne.s32.totalorder %s126, %s128
    %p135 = scmp.eq.s32.totalorder %s29, 1
    %p136 = por %p134, %p135
    %p137 = scmp.ne.s32.totalorder %s128, %s129
    %p138 = scmp.eq.s32.totalorder %s29, 0
    %p139 = por %p137, %p138
    %p140 = scmp.ne.s32.totalorder %s128, %s129
    %p141 = scmp.eq.s32.totalorder %s30, 1
    %p142 = por %p140, %p141
    %p144 = scmp.ne.s32.totalorder %s129, %s143
    %p145 = scmp.eq.s32.totalorder %s30, 0
    %p146 = por %p144, %p145
    %s148 = sadd.s32 %s147, 1
    %p151 = scmp.eq.s32.totalorder %s24, 1
    %p152 = scmp.ne.s32.totalorder %s147, %s149
    %p153 = scmp.eq.s32.totalorder %s24, 0
    %p154 = por %p152, %p153
    %p155 = scmp.ne.s32.totalorder %s147, %s149
    %p156 = scmp.eq.s32.totalorder %s29, 1
    %p157 = por %p155, %p156
    %p158 = scmp.ne.s32.totalorder %s149, %s150
    %p159 = scmp.eq.s32.totalorder %s29, 0
    %p160 = por %p158, %p159
    %p161 = scmp.ne.s32.totalorder %s149, %s150
    %p162 = scmp.eq.s32.totalorder %s30, 1
    %p163 = por %p161, %p162
    %p165 = scmp.ne.s32.totalorder %s150, %s164
    %p166 = scmp.eq.s32.totalorder %s30, 0
    %p167 = por %p165, %p166
    %s169 = sadd.s32 %s168, 1
    %p172 = scmp.eq.s32.totalorder %s24, 1
    %p173 = scmp.ne.s32.totalorder %s168, %s170
    %p174 = scmp.eq.s32.totalorder %s24, 0
    %p175 = por %p173, %p174
    %p176 = scmp.ne.s32.totalorder %s168, %s170
    %p177 = scmp.eq.s32.totalorder %s29, 1
    %p178 = por %p176, %p177
    %p179 = scmp.ne.s32.totalorder %s170, %s171
    %p180 = scmp.eq.s32.totalorder %s29, 0
    %p181 = por %p179, %p180
    %p182 = scmp.ne.s32.totalorder %s170, %s171
    %p183 = scmp.eq.s32.totalorder %s30, 1
    %p184 = por %p182, %p183
    %p186 = scmp.ne.s32.totalorder %s171, %s185
    %p187 = scmp.eq.s32.totalorder %s30, 0
    %p188 = por %p186, %p187
    %s190 = sadd.s32 %s189, 1
    %p193 = scmp.eq.s32.totalorder %s24, 1
    %p194 = scmp.ne.s32.totalorder %s189, %s191
    %p195 = scmp.eq.s32.totalorder %s24, 0
    %p196 = por %p194, %p195
    %p197 = scmp.ne.s32.totalorder %s189, %s191
    %p198 = scmp.eq.s32.totalorder %s29, 1
    %p199 = por %p197, %p198
    %p200 = scmp.ne.s32.totalorder %s191, %s192
    %p201 = scmp.eq.s32.totalorder %s29, 0
    %p202 = por %p200, %p201
    %p203 = scmp.ne.s32.totalorder %s191, %s192
    %p204 = scmp.eq.s32.totalorder %s30, 1
    %p205 = por %p203, %p204
    %p207 = scmp.ne.s32.totalorder %s192, %s206
    %p208 = scmp.eq.s32.totalorder %s30, 0
    %p209 = por %p207, %p208
    %s211 = sadd.s32 %s210, 1
    %p214 = scmp.eq.s32.totalorder %s24, 1
    %p215 = scmp.ne.s32.totalorder %s210, %s212
    %p216 = scmp.eq.s32.totalorder %s24, 0
    %p217 = por %p215, %p216
    %p218 = scmp.ne.s32.totalorder %s210, %s212
    %p219 = scmp.eq.s32.totalorder %s29, 1
    %p220 = por %p218, %p219
    %p221 = scmp.ne.s32.totalorder %s212, %s213
    %p222 = scmp.eq.s32.totalorder %s29, 0
    %p223 = por %p221, %p222
    %p224 = scmp.ne.s32.totalorder %s212, %s213
    %p225 = scmp.eq.s32.totalorder %s30, 1
    %p226 = por %p224, %p225
    %p228 = scmp.ne.s32.totalorder %s213, %s227
    %p229 = scmp.eq.s32.totalorder %s30, 0
    %p230 = por %p228, %p229
    %s232 = sadd.s32 %s231, 1
    %p235 = scmp.eq.s32.totalorder %s24, 1
    %p236 = scmp.ne.s32.totalorder %s231, %s233
    %p237 = scmp.eq.s32.totalorder %s24, 0
    %p238 = por %p236, %p237
    %p239 = scmp.ne.s32.totalorder %s231, %s233
    %p240 = scmp.eq.s32.totalorder %s29, 1
    %p241 = por %p239, %p240
    %p242 = scmp.ne.s32.totalorder %s233, %s234
    %p243 = scmp.eq.s32.totalorder %s29, 0
    %p244 = por %p242, %p243
    %p245 = scmp.ne.s32.totalorder %s233, %s234
    %p246 = scmp.eq.s32.totalorder %s30, 1
    %p247 = por %p245, %p246
    %p249 = scmp.ne.s32.totalorder %s234, %s248
    %p250 = scmp.eq.s32.totalorder %s30, 0
    %p251 = por %p249, %p250
    %s253 = sadd.s32 %s252, 1
    %p256 = scmp.eq.s32.totalorder %s24, 1
    %p257 = scmp.ne.s32.totalorder %s252, %s254
    %p258 = scmp.eq.s32.totalorder %s24, 0
    %p259 = por %p257, %p258
    %p260 = scmp.ne.s32.totalorder %s252, %s254
    %p261 = scmp.eq.s32.totalorder %s29, 1
    %p262 = por %p260, %p261
    %p263 = scmp.ne.s32.totalorder %s254, %s255
    %p264 = scmp.eq.s32.totalorder %s29, 0
    %p265 = por %p263, %p264
    %p266 = scmp.ne.s32.totalorder %s254, %s255
    %p267 = scmp.eq.s32.totalorder %s30, 1
    %p268 = por %p266, %p267
    %p270 = scmp.ne.s32.totalorder %s255, %s269
    %p271 = scmp.eq.s32.totalorder %s30, 0
    %p272 = por %p270, %p271
    %s274 = sadd.s32 %s273, 1
    %p277 = scmp.eq.s32.totalorder %s24, 1
    %p278 = scmp.ne.s32.totalorder %s273, %s275
    %p279 = scmp.eq.s32.totalorder %s24, 0
    %p280 = por %p278, %p279
    %p281 = scmp.ne.s32.totalorder %s273, %s275
    %p282 = scmp.eq.s32.totalorder %s29, 1
    %p283 = por %p281, %p282
    %p284 = scmp.ne.s32.totalorder %s275, %s276
    %p285 = scmp.eq.s32.totalorder %s29, 0
    %p286 = por %p284, %p285
    %p287 = scmp.ne.s32.totalorder %s275, %s276
    %p288 = scmp.eq.s32.totalorder %s30, 1
    %p289 = por %p287, %p288
    %p291 = scmp.ne.s32.totalorder %s276, %s290
    %p292 = scmp.eq.s32.totalorder %s30, 0
    %p293 = por %p291, %p292
    %s295 = sadd.s32 %s294, 1
    %p298 = scmp.eq.s32.totalorder %s24, 1
    %p299 = scmp.ne.s32.totalorder %s294, %s296
    %p300 = scmp.eq.s32.totalorder %s24, 0
    %p301 = por %p299, %p300
    %p302 = scmp.ne.s32.totalorder %s294, %s296
    %p303 = scmp.eq.s32.totalorder %s29, 1
    %p304 = por %p302, %p303
    %p305 = scmp.ne.s32.totalorder %s296, %s297
    %p306 = scmp.eq.s32.totalorder %s29, 0
    %p307 = por %p305, %p306
    %p308 = scmp.ne.s32.totalorder %s296, %s297
    %p309 = scmp.eq.s32.totalorder %s30, 1
    %p310 = por %p308, %p309
    %p312 = scmp.ne.s32.totalorder %s297, %s311
    %p313 = scmp.eq.s32.totalorder %s30, 0
    %p314 = por %p312, %p313
    %s316 = sadd.s32 %s315, 1
    %p319 = scmp.eq.s32.totalorder %s24, 1
    %p320 = scmp.ne.s32.totalorder %s315, %s317
    %p321 = scmp.eq.s32.totalorder %s24, 0
    %p322 = por %p320, %p321
    %p323 = scmp.ne.s32.totalorder %s315, %s317
    %p324 = scmp.eq.s32.totalorder %s29, 1
    %p325 = por %p323, %p324
    %p326 = scmp.ne.s32.totalorder %s317, %s318
    %p327 = scmp.eq.s32.totalorder %s29, 0
    %p328 = por %p326, %p327
    %p329 = scmp.ne.s32.totalorder %s317, %s318
    %p330 = scmp.eq.s32.totalorder %s30, 1
    %p331 = por %p329, %p330
    %p333 = scmp.ne.s32.totalorder %s318, %s332
    %p334 = scmp.eq.s32.totalorder %s30, 0
    %p335 = por %p333, %p334
    %s337 = sadd.s32 %s336, 1
    %p340 = scmp.eq.s32.totalorder %s24, 1
    %p341 = scmp.ne.s32.totalorder %s336, %s338
    %p342 = scmp.eq.s32.totalorder %s24, 0
    %p343 = por %p341, %p342
    %p344 = scmp.ne.s32.totalorder %s336, %s338
    %p345 = scmp.eq.s32.totalorder %s29, 1
    %p346 = por %p344, %p345
    %p347 = scmp.ne.s32.totalorder %s338, %s339
    %p348 = scmp.eq.s32.totalorder %s29, 0
    %p349 = por %p347, %p348
    %p350 = scmp.ne.s32.totalorder %s338, %s339
    %p351 = scmp.eq.s32.totalorder %s30, 1
    %p352 = por %p350, %p351
    %p354 = scmp.ne.s32.totalorder %s339, %s353
    %p355 = scmp.eq.s32.totalorder %s30, 0
    %p356 = por %p354, %p355
    %s358 = sadd.s32 %s357, 1
    %p361 = scmp.eq.s32.totalorder %s24, 1
    %p362 = scmp.ne.s32.totalorder %s357, %s359
    %p363 = scmp.eq.s32.totalorder %s24, 0
    %p364 = por %p362, %p363
    %p365 = scmp.ne.s32.totalorder %s357, %s359
    %p366 = scmp.eq.s32.totalorder %s29, 1
    %p367 = por %p365, %p366
    %p368 = scmp.ne.s32.totalorder %s359, %s360
    %p369 = scmp.eq.s32.totalorder %s29, 0
    %p370 = por %p368, %p369
    %p371 = scmp.ne.s32.totalorder %s359, %s360
    %p372 = scmp.eq.s32.totalorder %s30, 1
    %p373 = por %p371, %p372
    %p375 = scmp.ne.s32.totalorder %s360, %s374
    %p376 = scmp.eq.s32.totalorder %s30, 0
    %p377 = por %p375, %p376
    %s378 = ssub.s32 %s24, %s31
    %p379 = scmp.eq.s32.totalorder %s378, 0
    %s381 = sadd.s32 %s380, 1
    %s382 = scalar_select %p379, %s380, %s381
    %p385 = pneg %p379
    %p386 = scmp.eq.s32.totalorder %s24, 1
    %p387 = por %p385, %p386
    %p388 = scmp.ne.s32.totalorder %s380, %s383
    %p389 = scmp.eq.s32.totalorder %s24, 0
    %p390 = por %p388, %p389
    %p391 = scmp.ne.s32.totalorder %s380, %s383
    %p392 = scmp.eq.s32.totalorder %s29, 1
    %p393 = por %p391, %p392
    %p394 = scmp.ne.s32.totalorder %s383, %s384
    %p395 = scmp.eq.s32.totalorder %s29, 0
    %p396 = por %p394, %p395
    %p397 = scmp.ne.s32.totalorder %s383, %s384
    %p398 = scmp.eq.s32.totalorder %s30, 1
    %p399 = por %p397, %p398
    %p401 = scmp.ne.s32.totalorder %s384, %s400
    %p402 = scmp.eq.s32.totalorder %s30, 0
    %p403 = por %p401, %p402
    %p404 = scmp.le.s32.totalorder 1, %s24
    %p405 = scmp.lt.s32.totalorder %s24, 3
    %p406 = pnand %p404, %p405
    %p407 = pneg %p406
    // Predicated region
    $region9: #{critic_forward.1} parent=5 // pred_check
      _
    $region10: #{critic_forward.1} parent=5 // pred_check_branch
      %409 = sbr.rel (%p406) target = $region12
    $region11: #{critic_forward.1} parent=5 // pred_region
      %s410 = ssub.s32 %s24, 1
      // Predicated region
      $region13: #{critic_forward.1} parent=11 // pred_check
        %p411 = pneg %p97
      $region14: #{critic_forward.1} parent=11 // pred_check_branch
        %413 = sbr.rel (%p411) target = $region16
      $region15: #{critic_forward.1} parent=11 // pred_region
        _
      $region16: #{critic_forward.1} parent=11 // pred_fallthru
        _
      // Predicated region
      $region17: #{critic_forward.1} parent=11 // pred_check
        %p414 = pneg %p118
      $region18: #{critic_forward.1} parent=11 // pred_check_branch
        %416 = sbr.rel (%p414) target = $region20
      $region19: #{critic_forward.1} parent=11 // pred_region
        _
      $region20: #{critic_forward.1} parent=11 // pred_fallthru
        _
      // Predicated region
      $region21: #{critic_forward.1} parent=11 // pred_check
        %p417 = pneg %p139
      $region22: #{critic_forward.1} parent=11 // pred_check_branch
        %419 = sbr.rel (%p417) target = $region24
      $region23: #{critic_forward.1} parent=11 // pred_region
        _
      $region24: #{critic_forward.1} parent=11 // pred_fallthru
        _
      // Predicated region
      $region25: #{critic_forward.1} parent=11 // pred_check
        %p420 = pneg %p160
      $region26: #{critic_forward.1} parent=11 // pred_check_branch
        %422 = sbr.rel (%p420) target = $region28
      $region27: #{critic_forward.1} parent=11 // pred_region
        _
      $region28: #{critic_forward.1} parent=11 // pred_fallthru
        _
      // Predicated region
      $region29: #{critic_forward.1} parent=11 // pred_check
        %p423 = pneg %p181
      $region30: #{critic_forward.1} parent=11 // pred_check_branch
        %425 = sbr.rel (%p423) target = $region32
      $region31: #{critic_forward.1} parent=11 // pred_region
        _
      $region32: #{critic_forward.1} parent=11 // pred_fallthru
        _
      // Predicated region
      $region33: #{critic_forward.1} parent=11 // pred_check
        %p426 = pneg %p202
      $region34: #{critic_forward.1} parent=11 // pred_check_branch
        %428 = sbr.rel (%p426) target = $region36
      $region35: #{critic_forward.1} parent=11 // pred_region
        _
      $region36: #{critic_forward.1} parent=11 // pred_fallthru
        _
      // Predicated region
      $region37: #{critic_forward.1} parent=11 // pred_check
        %p429 = pneg %p223
      $region38: #{critic_forward.1} parent=11 // pred_check_branch
        %431 = sbr.rel (%p429) target = $region40
      $region39: #{critic_forward.1} parent=11 // pred_region
        _
      $region40: #{critic_forward.1} parent=11 // pred_fallthru
        _
      // Predicated region
      $region41: #{critic_forward.1} parent=11 // pred_check
        %p432 = pneg %p244
      $region42: #{critic_forward.1} parent=11 // pred_check_branch
        %434 = sbr.rel (%p432) target = $region44
      $region43: #{critic_forward.1} parent=11 // pred_region
        _
      $region44: #{critic_forward.1} parent=11 // pred_fallthru
        _
      // Predicated region
      $region45: #{critic_forward.1} parent=11 // pred_check
        %p435 = pneg %p265
      $region46: #{critic_forward.1} parent=11 // pred_check_branch
        %437 = sbr.rel (%p435) target = $region48
      $region47: #{critic_forward.1} parent=11 // pred_region
        _
      $region48: #{critic_forward.1} parent=11 // pred_fallthru
        _
      // Predicated region
      $region49: #{critic_forward.1} parent=11 // pred_check
        %p438 = pneg %p286
      $region50: #{critic_forward.1} parent=11 // pred_check_branch
        %440 = sbr.rel (%p438) target = $region52
      $region51: #{critic_forward.1} parent=11 // pred_region
        _
      $region52: #{critic_forward.1} parent=11 // pred_fallthru
        _
      // Predicated region
      $region53: #{critic_forward.1} parent=11 // pred_check
        %p441 = pneg %p307
      $region54: #{critic_forward.1} parent=11 // pred_check_branch
        %443 = sbr.rel (%p441) target = $region56
      $region55: #{critic_forward.1} parent=11 // pred_region
        _
      $region56: #{critic_forward.1} parent=11 // pred_fallthru
        _
      // Predicated region
      $region57: #{critic_forward.1} parent=11 // pred_check
        %p444 = pneg %p328
      $region58: #{critic_forward.1} parent=11 // pred_check_branch
        %446 = sbr.rel (%p444) target = $region60
      $region59: #{critic_forward.1} parent=11 // pred_region
        _
      $region60: #{critic_forward.1} parent=11 // pred_fallthru
        _
      // Predicated region
      $region61: #{critic_forward.1} parent=11 // pred_check
        %p447 = pneg %p349
      $region62: #{critic_forward.1} parent=11 // pred_check_branch
        %449 = sbr.rel (%p447) target = $region64
      $region63: #{critic_forward.1} parent=11 // pred_region
        _
      $region64: #{critic_forward.1} parent=11 // pred_fallthru
        _
      // Predicated region
      $region65: #{critic_forward.1} parent=11 // pred_check
        %p450 = pneg %p370
      $region66: #{critic_forward.1} parent=11 // pred_check_branch
        %452 = sbr.rel (%p450) target = $region68
      $region67: #{critic_forward.1} parent=11 // pred_region
        _
      $region68: #{critic_forward.1} parent=11 // pred_fallthru
        _
    $region12: #{critic_forward.1} parent=5 // pred_fallthru
      _
    %p453 = scmp.lt.s32.totalorder %s24, 2
    // Predicated region
    $region69: #{critic_forward.1} parent=5 // pred_check
      %p454 = pneg %p453
    $region70: #{critic_forward.1} parent=5 // pred_check_branch
      %456 = sbr.rel (%p454) target = $region72
    $region71: #{critic_forward.1} parent=5 // pred_region
      // Predicated region
      $region73: #{critic_forward.1} parent=71 // pred_check
        %p457 = pneg %p44
      $region74: #{critic_forward.1} parent=71 // pred_check_branch
        %459 = sbr.rel (%p457) target = $region76
      $region75: #{critic_forward.1} parent=71 // pred_region
        %p460 = scmp.lt.s32.totalorder %s24, 1
        %s461 = scalar_select %p460, %s24, 1
        %s462 = smul.addr %s461, 32
        %s463 = smul.addr %s462, 8
        %s464 = scalar_lea.vmem %s0, %s463
      $region76: #{critic_forward.1} parent=71 // pred_fallthru
        _
      // Predicated region
      $region77: #{critic_forward.1} parent=71 // pred_check
        %p465 = pneg %p70
      $region78: #{critic_forward.1} parent=71 // pred_check_branch
        %467 = sbr.rel (%p465) target = $region80
      $region79: #{critic_forward.1} parent=71 // pred_region
        %p468 = scmp.lt.s32.totalorder %s24, 1
        %s469 = scalar_select %p468, %s24, 1
        %s470 = smul.addr %s469, 3
        %s471 = smul.addr %s470, 8
        %s472 = scalar_lea.vmem %s1, %s471
      $region80: #{critic_forward.1} parent=71 // pred_fallthru
        _
    $region72: #{critic_forward.1} parent=5 // pred_fallthru
      _
    %p473 = scmp.le.s32.totalorder 1, %s24
    %p474 = scmp.lt.s32.totalorder %s24, 3
    %p475 = pnand %p473, %p474
    %p476 = pneg %p475
    // Predicated region
    $region81: #{critic_forward.1} parent=5 // pred_check
      _
    $region82: #{critic_forward.1} parent=5 // pred_check_branch
      %478 = sbr.rel (%p475) target = $region84
    $region83: #{critic_forward.1} parent=5 // pred_region
      %s479 = ssub.s32 %s24, 1
      %p480 = scmp.lt.s32.totalorder %s29, 1
      %s481 = scalar_select %p480, %s29, 1
      %s482 = smul.addr %s481, 32
      %s483 = smul.addr %s482, 8
      %s484 = scalar_lea.vmem %s0, %s483
      %p485 = pneg %p50
      %p486 = pneg %p47
      %p487 = scmp.lt.s32.totalorder %s29, 1
      %s488 = scalar_select %p487, %s29, 1
      %s489 = smul.addr %s488, 3
      %s490 = smul.addr %s489, 8
      %s491 = scalar_lea.vmem %s1, %s490
      %p492 = pneg %p76
      %p493 = pneg %p73
      %p494 = pneg %p97
      %p495 = pneg %p94
      %p496 = pneg %p118
      %p497 = pneg %p115
      %p498 = pneg %p139
      %p499 = pneg %p136
      %p500 = pneg %p160
      %p501 = pneg %p157
      %p502 = pneg %p181
      %p503 = pneg %p178
      %p504 = pneg %p202
      %p505 = pneg %p199
      %p506 = pneg %p223
      %p507 = pneg %p220
      %p508 = pneg %p244
      %p509 = pneg %p241
      %p510 = pneg %p265
      %p511 = pneg %p262
      %p512 = pneg %p286
      %p513 = pneg %p283
      %p514 = pneg %p307
      %p515 = pneg %p304
      %p516 = pneg %p328
      %p517 = pneg %p325
      %p518 = pneg %p349
      %p519 = pneg %p346
      %p520 = pneg %p370
      %p521 = pneg %p367
      %p522 = pneg %p396
      %p523 = pneg %p393
      %p524 = scmp.lt.s32.totalorder %s29, 1
      %s525 = scalar_select %p524, %s29, 1
      %s526 = scalar_lea.vmem %s16, %s525
      %p527 = scmp.lt.s32.totalorder %s29, 1
      %s528 = scalar_select %p527, %s29, 1
      %s529 = smul.addr %s528, 32
      %s530 = smul.addr %s529, 8
      %s531 = scalar_lea.vmem %s0, %s530
      %p532 = scmp.lt.s32.totalorder %s29, 1
      %s533 = scalar_select %p532, %s29, 1
      %s534 = smul.addr %s533, 3
      %s535 = smul.addr %s534, 8
      %s536 = scalar_lea.vmem %s1, %s535
      %p537 = scmp.lt.s32.totalorder %s29, 1
      %s538 = scalar_select %p537, %s29, 1
      %s539 = scalar_lea.vmem %s16, %s538
      %v540 = vld [vmem:[%s531] sm:$0xff]
      %v541 = vld [vmem:[%s531 + $0x8] sm:$0xff]
      %v542 = vld [vmem:[%s531 + $0x10] sm:$0xff]
      %v543 = vld [vmem:[%s531 + $0x18] sm:$0xff]
      %v544 = vld [vmem:[%s531 + $0x20] sm:$0xff]
      %v545 = vld [vmem:[%s531 + $0x28] sm:$0xff]
      %v546 = vld [vmem:[%s531 + $0x30] sm:$0xff]
      %v547 = vld [vmem:[%s531 + $0x38] sm:$0xff]
      %v548 = vld [vmem:[%s531 + $0x40] sm:$0xff]
      %v549 = vld [vmem:[%s531 + $0x48] sm:$0xff]
      %v550 = vld [vmem:[%s531 + $0x50] sm:$0xff]
      %v551 = vld [vmem:[%s531 + $0x58] sm:$0xff]
      %v552 = vld [vmem:[%s531 + $0x60] sm:$0xff]
      %v553 = vld [vmem:[%s531 + $0x68] sm:$0xff]
      %v554 = vld [vmem:[%s531 + $0x70] sm:$0xff]
      %v555 = vld [vmem:[%s531 + $0x78] sm:$0xff]
      %v556 = vld [vmem:[%s531 + $0x80] sm:$0xff]
      %v557 = vld [vmem:[%s531 + $0x88] sm:$0xff]
      %v558 = vld [vmem:[%s531 + $0x90] sm:$0xff]
      %v559 = vld [vmem:[%s531 + $0x98] sm:$0xff]
      %v560 = vld [vmem:[%s531 + $0xa0] sm:$0xff]
      %v561 = vld [vmem:[%s531 + $0xa8] sm:$0xff]
      %v562 = vld [vmem:[%s531 + $0xb0] sm:$0xff]
      %v563 = vld [vmem:[%s531 + $0xb8] sm:$0xff]
      %v564 = vld [vmem:[%s531 + $0xc0] sm:$0xff]
      %v565 = vld [vmem:[%s531 + $0xc8] sm:$0xff]
      %v566 = vld [vmem:[%s531 + $0xd0] sm:$0xff]
      %v567 = vld [vmem:[%s531 + $0xd8] sm:$0xff]
      %v568 = vld [vmem:[%s531 + $0xe0] sm:$0xff]
      %v569 = vld [vmem:[%s531 + $0xe8] sm:$0xff]
      %v570 = vld [vmem:[%s531 + $0xf0] sm:$0xff]
      %v571 = vld [vmem:[%s531 + $0xf8] sm:$0xff]
      %v572 = vld [vmem:[%s2] sm:$0xff]
      %v573 = vld [vmem:[%s2 + $0x8] sm:$0xff]
      %v574 = vld [vmem:[%s2 + $0x10] sm:$0xff]
      %v575 = vld [vmem:[%s2 + $0x18] sm:$0xff]
      %vm576 = vcmask 130048
      %v578 = vsel %vm576, %v572, 0
      %v581 = vsel %vm576, %v573, 0
      %v584 = vsel %vm576, %v574, 0
      %v587 = vsel %vm576, %v575, 0
      %589 = vmatpush.msra.mxu0 0.0
      %590 = vmatpush.msra.mxu0 0.0
      %591 = vmatpush.msra.mxu0 0.0
      %592 = vmatpush.msra.mxu0 0.0
      %593 = vmatpush.msra.mxu0 0.0
      %594 = vmatpush.msra.mxu0 0.0
      %595 = vmatpush.msra.mxu0 0.0
      %596 = vmatpush.msra.mxu0 0.0
      %597 = vmatpush.msra.mxu0 0.0
      %598 = vmatpush.msra.mxu0 0.0
      %599 = vmatpush.msra.mxu0 0.0
      %600 = vmatpush.msra.mxu0 0.0
      %601 = vmatpush.msra.mxu0 0.0
      %602 = vmatpush.msra.mxu0 0.0
      %603 = vmatpush.msra.mxu0 %v556
      %604 = vmatpush.msra.mxu0 %v540
      %605 = vmatmul.f32.gmra.mxu0 %v578
      %v606 = vpop.f32.mrf.mxu0
      %v607 = vadd.f32 0.0, %v606
      %608 = vmatmul.f32.gmra.mxu0 %v581
      %v609 = vpop.f32.mrf.mxu0
      %v610 = vadd.f32 0.0, %v609
      %611 = vmatmul.f32.gmra.mxu0 %v584
      %v612 = vpop.f32.mrf.mxu0
      %v613 = vadd.f32 0.0, %v612
      %614 = vmatmul.f32.gmra.mxu0 %v587
      %v615 = vpop.f32.mrf.mxu0
      %v616 = vadd.f32 0.0, %v615
      %617 = vdwg.mxu0
      %618 = vmatpush.msra.mxu0 0.0
      %619 = vmatpush.msra.mxu0 0.0
      %620 = vmatpush.msra.mxu0 0.0
      %621 = vmatpush.msra.mxu0 0.0
      %622 = vmatpush.msra.mxu0 0.0
      %623 = vmatpush.msra.mxu0 0.0
      %624 = vmatpush.msra.mxu0 0.0
      %625 = vmatpush.msra.mxu0 0.0
      %626 = vmatpush.msra.mxu0 0.0
      %627 = vmatpush.msra.mxu0 0.0
      %628 = vmatpush.msra.mxu0 0.0
      %629 = vmatpush.msra.mxu0 0.0
      %630 = vmatpush.msra.mxu0 0.0
      %631 = vmatpush.msra.mxu0 0.0
      %632 = vmatpush.msra.mxu0 %v557
      %633 = vmatpush.msra.mxu0 %v541
      %634 = vmatmul.f32.gmra.mxu0 %v578
      %v635 = vpop.f32.mrf.mxu0
      %v636 = vadd.f32 0.0, %v635
      %637 = vmatmul.f32.gmra.mxu0 %v581
      %v638 = vpop.f32.mrf.mxu0
      %v639 = vadd.f32 0.0, %v638
      %640 = vmatmul.f32.gmra.mxu0 %v584
      %v641 = vpop.f32.mrf.mxu0
      %v642 = vadd.f32 0.0, %v641
      %643 = vmatmul.f32.gmra.mxu0 %v587
      %v644 = vpop.f32.mrf.mxu0
      %v645 = vadd.f32 0.0, %v644
      %646 = vdwg.mxu0
      %647 = vmatpush.msra.mxu0 0.0
      %648 = vmatpush.msra.mxu0 0.0
      %649 = vmatpush.msra.mxu0 0.0
      %650 = vmatpush.msra.mxu0 0.0
      %651 = vmatpush.msra.mxu0 0.0
      %652 = vmatpush.msra.mxu0 0.0
      %653 = vmatpush.msra.mxu0 0.0
      %654 = vmatpush.msra.mxu0 0.0
      %655 = vmatpush.msra.mxu0 0.0
      %656 = vmatpush.msra.mxu0 0.0
      %657 = vmatpush.msra.mxu0 0.0
      %658 = vmatpush.msra.mxu0 0.0
      %659 = vmatpush.msra.mxu0 0.0
      %660 = vmatpush.msra.mxu0 0.0
      %661 = vmatpush.msra.mxu0 %v558
      %662 = vmatpush.msra.mxu0 %v542
      %663 = vmatmul.f32.gmra.mxu0 %v578
      %v664 = vpop.f32.mrf.mxu0
      %v665 = vadd.f32 0.0, %v664
      %666 = vmatmul.f32.gmra.mxu0 %v581
      %v667 = vpop.f32.mrf.mxu0
      %v668 = vadd.f32 0.0, %v667
      %669 = vmatmul.f32.gmra.mxu0 %v584
      %v670 = vpop.f32.mrf.mxu0
      %v671 = vadd.f32 0.0, %v670
      %672 = vmatmul.f32.gmra.mxu0 %v587
      %v673 = vpop.f32.mrf.mxu0
      %v674 = vadd.f32 0.0, %v673
      %675 = vdwg.mxu0
      %676 = vmatpush.msra.mxu0 0.0
      %677 = vmatpush.msra.mxu0 0.0
      %678 = vmatpush.msra.mxu0 0.0
      %679 = vmatpush.msra.mxu0 0.0
      %680 = vmatpush.msra.mxu0 0.0
      %681 = vmatpush.msra.mxu0 0.0
      %682 = vmatpush.msra.mxu0 0.0
      %683 = vmatpush.msra.mxu0 0.0
      %684 = vmatpush.msra.mxu0 0.0
      %685 = vmatpush.msra.mxu0 0.0
      %686 = vmatpush.msra.mxu0 0.0
      %687 = vmatpush.msra.mxu0 0.0
      %688 = vmatpush.msra.mxu0 0.0
      %689 = vmatpush.msra.mxu0 0.0
      %690 = vmatpush.msra.mxu0 %v559
      %691 = vmatpush.msra.mxu0 %v543
      %692 = vmatmul.f32.gmra.mxu0 %v578
      %v693 = vpop.f32.mrf.mxu0
      %v694 = vadd.f32 0.0, %v693
      %695 = vmatmul.f32.gmra.mxu0 %v581
      %v696 = vpop.f32.mrf.mxu0
      %v697 = vadd.f32 0.0, %v696
      %698 = vmatmul.f32.gmra.mxu0 %v584
      %v699 = vpop.f32.mrf.mxu0
      %v700 = vadd.f32 0.0, %v699
      %701 = vmatmul.f32.gmra.mxu0 %v587
      %v702 = vpop.f32.mrf.mxu0
      %v703 = vadd.f32 0.0, %v702
      %704 = vdwg.mxu0
      %705 = vmatpush.msra.mxu0 0.0
      %706 = vmatpush.msra.mxu0 0.0
      %707 = vmatpush.msra.mxu0 0.0
      %708 = vmatpush.msra.mxu0 0.0
      %709 = vmatpush.msra.mxu0 0.0
      %710 = vmatpush.msra.mxu0 0.0
      %711 = vmatpush.msra.mxu0 0.0
      %712 = vmatpush.msra.mxu0 0.0
      %713 = vmatpush.msra.mxu0 0.0
      %714 = vmatpush.msra.mxu0 0.0
      %715 = vmatpush.msra.mxu0 0.0
      %716 = vmatpush.msra.mxu0 0.0
      %717 = vmatpush.msra.mxu0 0.0
      %718 = vmatpush.msra.mxu0 0.0
      %719 = vmatpush.msra.mxu0 %v560
      %720 = vmatpush.msra.mxu0 %v544
      %721 = vmatmul.f32.gmra.mxu0 %v578
      %v722 = vpop.f32.mrf.mxu0
      %v723 = vadd.f32 0.0, %v722
      %724 = vmatmul.f32.gmra.mxu0 %v581
      %v725 = vpop.f32.mrf.mxu0
      %v726 = vadd.f32 0.0, %v725
      %727 = vmatmul.f32.gmra.mxu0 %v584
      %v728 = vpop.f32.mrf.mxu0
      %v729 = vadd.f32 0.0, %v728
      %730 = vmatmul.f32.gmra.mxu0 %v587
      %v731 = vpop.f32.mrf.mxu0
      %v732 = vadd.f32 0.0, %v731
      %733 = vdwg.mxu0
      %734 = vmatpush.msra.mxu0 0.0
      %735 = vmatpush.msra.mxu0 0.0
      %736 = vmatpush.msra.mxu0 0.0
      %737 = vmatpush.msra.mxu0 0.0
      %738 = vmatpush.msra.mxu0 0.0
      %739 = vmatpush.msra.mxu0 0.0
      %740 = vmatpush.msra.mxu0 0.0
      %741 = vmatpush.msra.mxu0 0.0
      %742 = vmatpush.msra.mxu0 0.0
      %743 = vmatpush.msra.mxu0 0.0
      %744 = vmatpush.msra.mxu0 0.0
      %745 = vmatpush.msra.mxu0 0.0
      %746 = vmatpush.msra.mxu0 0.0
      %747 = vmatpush.msra.mxu0 0.0
      %748 = vmatpush.msra.mxu0 %v561
      %749 = vmatpush.msra.mxu0 %v545
      %750 = vmatmul.f32.gmra.mxu0 %v578
      %v751 = vpop.f32.mrf.mxu0
      %v752 = vadd.f32 0.0, %v751
      %753 = vmatmul.f32.gmra.mxu0 %v581
      %v754 = vpop.f32.mrf.mxu0
      %v755 = vadd.f32 0.0, %v754
      %756 = vmatmul.f32.gmra.mxu0 %v584
      %v757 = vpop.f32.mrf.mxu0
      %v758 = vadd.f32 0.0, %v757
      %759 = vmatmul.f32.gmra.mxu0 %v587
      %v760 = vpop.f32.mrf.mxu0
      %v761 = vadd.f32 0.0, %v760
      %762 = vdwg.mxu0
      %763 = vmatpush.msra.mxu0 0.0
      %764 = vmatpush.msra.mxu0 0.0
      %765 = vmatpush.msra.mxu0 0.0
      %766 = vmatpush.msra.mxu0 0.0
      %767 = vmatpush.msra.mxu0 0.0
      %768 = vmatpush.msra.mxu0 0.0
      %769 = vmatpush.msra.mxu0 0.0
      %770 = vmatpush.msra.mxu0 0.0
      %771 = vmatpush.msra.mxu0 0.0
      %772 = vmatpush.msra.mxu0 0.0
      %773 = vmatpush.msra.mxu0 0.0
      %774 = vmatpush.msra.mxu0 0.0
      %775 = vmatpush.msra.mxu0 0.0
      %776 = vmatpush.msra.mxu0 0.0
      %777 = vmatpush.msra.mxu0 %v562
      %778 = vmatpush.msra.mxu0 %v546
      %779 = vmatmul.f32.gmra.mxu0 %v578
      %v780 = vpop.f32.mrf.mxu0
      %v781 = vadd.f32 0.0, %v780
      %782 = vmatmul.f32.gmra.mxu0 %v581
      %v783 = vpop.f32.mrf.mxu0
      %v784 = vadd.f32 0.0, %v783
      %785 = vmatmul.f32.gmra.mxu0 %v584
      %v786 = vpop.f32.mrf.mxu0
      %v787 = vadd.f32 0.0, %v786
      %788 = vmatmul.f32.gmra.mxu0 %v587
      %v789 = vpop.f32.mrf.mxu0
      %v790 = vadd.f32 0.0, %v789
      %791 = vdwg.mxu0
      %792 = vmatpush.msra.mxu0 0.0
      %793 = vmatpush.msra.mxu0 0.0
      %794 = vmatpush.msra.mxu0 0.0
      %795 = vmatpush.msra.mxu0 0.0
      %796 = vmatpush.msra.mxu0 0.0
      %797 = vmatpush.msra.mxu0 0.0
      %798 = vmatpush.msra.mxu0 0.0
      %799 = vmatpush.msra.mxu0 0.0
      %800 = vmatpush.msra.mxu0 0.0
      %801 = vmatpush.msra.mxu0 0.0
      %802 = vmatpush.msra.mxu0 0.0
      %803 = vmatpush.msra.mxu0 0.0
      %804 = vmatpush.msra.mxu0 0.0
      %805 = vmatpush.msra.mxu0 0.0
      %806 = vmatpush.msra.mxu0 %v563
      %807 = vmatpush.msra.mxu0 %v547
      %808 = vmatmul.f32.gmra.mxu0 %v578
      %v809 = vpop.f32.mrf.mxu0
      %v810 = vadd.f32 0.0, %v809
      %811 = vmatmul.f32.gmra.mxu0 %v581
      %v812 = vpop.f32.mrf.mxu0
      %v813 = vadd.f32 0.0, %v812
      %814 = vmatmul.f32.gmra.mxu0 %v584
      %v815 = vpop.f32.mrf.mxu0
      %v816 = vadd.f32 0.0, %v815
      %817 = vmatmul.f32.gmra.mxu0 %v587
      %v818 = vpop.f32.mrf.mxu0
      %v819 = vadd.f32 0.0, %v818
      %820 = vdwg.mxu0
      %821 = vmatpush.msra.mxu0 0.0
      %822 = vmatpush.msra.mxu0 0.0
      %823 = vmatpush.msra.mxu0 0.0
      %824 = vmatpush.msra.mxu0 0.0
      %825 = vmatpush.msra.mxu0 0.0
      %826 = vmatpush.msra.mxu0 0.0
      %827 = vmatpush.msra.mxu0 0.0
      %828 = vmatpush.msra.mxu0 0.0
      %829 = vmatpush.msra.mxu0 0.0
      %830 = vmatpush.msra.mxu0 0.0
      %831 = vmatpush.msra.mxu0 0.0
      %832 = vmatpush.msra.mxu0 0.0
      %833 = vmatpush.msra.mxu0 0.0
      %834 = vmatpush.msra.mxu0 0.0
      %835 = vmatpush.msra.mxu0 %v564
      %836 = vmatpush.msra.mxu0 %v548
      %837 = vmatmul.f32.gmra.mxu0 %v578
      %v838 = vpop.f32.mrf.mxu0
      %v839 = vadd.f32 0.0, %v838
      %840 = vmatmul.f32.gmra.mxu0 %v581
      %v841 = vpop.f32.mrf.mxu0
      %v842 = vadd.f32 0.0, %v841
      %843 = vmatmul.f32.gmra.mxu0 %v584
      %v844 = vpop.f32.mrf.mxu0
      %v845 = vadd.f32 0.0, %v844
      %846 = vmatmul.f32.gmra.mxu0 %v587
      %v847 = vpop.f32.mrf.mxu0
      %v848 = vadd.f32 0.0, %v847
      %849 = vdwg.mxu0
      %850 = vmatpush.msra.mxu0 0.0
      %851 = vmatpush.msra.mxu0 0.0
      %852 = vmatpush.msra.mxu0 0.0
      %853 = vmatpush.msra.mxu0 0.0
      %854 = vmatpush.msra.mxu0 0.0
      %855 = vmatpush.msra.mxu0 0.0
      %856 = vmatpush.msra.mxu0 0.0
      %857 = vmatpush.msra.mxu0 0.0
      %858 = vmatpush.msra.mxu0 0.0
      %859 = vmatpush.msra.mxu0 0.0
      %860 = vmatpush.msra.mxu0 0.0
      %861 = vmatpush.msra.mxu0 0.0
      %862 = vmatpush.msra.mxu0 0.0
      %863 = vmatpush.msra.mxu0 0.0
      %864 = vmatpush.msra.mxu0 %v565
      %865 = vmatpush.msra.mxu0 %v549
      %866 = vmatmul.f32.gmra.mxu0 %v578
      %v867 = vpop.f32.mrf.mxu0
      %v868 = vadd.f32 0.0, %v867
      %869 = vmatmul.f32.gmra.mxu0 %v581
      %v870 = vpop.f32.mrf.mxu0
      %v871 = vadd.f32 0.0, %v870
      %872 = vmatmul.f32.gmra.mxu0 %v584
      %v873 = vpop.f32.mrf.mxu0
      %v874 = vadd.f32 0.0, %v873
      %875 = vmatmul.f32.gmra.mxu0 %v587
      %v876 = vpop.f32.mrf.mxu0
      %v877 = vadd.f32 0.0, %v876
      %878 = vdwg.mxu0
      %879 = vmatpush.msra.mxu0 0.0
      %880 = vmatpush.msra.mxu0 0.0
      %881 = vmatpush.msra.mxu0 0.0
      %882 = vmatpush.msra.mxu0 0.0
      %883 = vmatpush.msra.mxu0 0.0
      %884 = vmatpush.msra.mxu0 0.0
      %885 = vmatpush.msra.mxu0 0.0
      %886 = vmatpush.msra.mxu0 0.0
      %887 = vmatpush.msra.mxu0 0.0
      %888 = vmatpush.msra.mxu0 0.0
      %889 = vmatpush.msra.mxu0 0.0
      %890 = vmatpush.msra.mxu0 0.0
      %891 = vmatpush.msra.mxu0 0.0
      %892 = vmatpush.msra.mxu0 0.0
      %893 = vmatpush.msra.mxu0 %v566
      %894 = vmatpush.msra.mxu0 %v550
      %895 = vmatmul.f32.gmra.mxu0 %v578
      %v896 = vpop.f32.mrf.mxu0
      %v897 = vadd.f32 0.0, %v896
      %898 = vmatmul.f32.gmra.mxu0 %v581
      %v899 = vpop.f32.mrf.mxu0
      %v900 = vadd.f32 0.0, %v899
      %901 = vmatmul.f32.gmra.mxu0 %v584
      %v902 = vpop.f32.mrf.mxu0
      %v903 = vadd.f32 0.0, %v902
      %904 = vmatmul.f32.gmra.mxu0 %v587
      %v905 = vpop.f32.mrf.mxu0
      %v906 = vadd.f32 0.0, %v905
      %907 = vdwg.mxu0
      %908 = vmatpush.msra.mxu0 0.0
      %909 = vmatpush.msra.mxu0 0.0
      %910 = vmatpush.msra.mxu0 0.0
      %911 = vmatpush.msra.mxu0 0.0
      %912 = vmatpush.msra.mxu0 0.0
      %913 = vmatpush.msra.mxu0 0.0
      %914 = vmatpush.msra.mxu0 0.0
      %915 = vmatpush.msra.mxu0 0.0
      %916 = vmatpush.msra.mxu0 0.0
      %917 = vmatpush.msra.mxu0 0.0
      %918 = vmatpush.msra.mxu0 0.0
      %919 = vmatpush.msra.mxu0 0.0
      %920 = vmatpush.msra.mxu0 0.0
      %921 = vmatpush.msra.mxu0 0.0
      %922 = vmatpush.msra.mxu0 %v567
      %923 = vmatpush.msra.mxu0 %v551
      %924 = vmatmul.f32.gmra.mxu0 %v578
      %v925 = vpop.f32.mrf.mxu0
      %v926 = vadd.f32 0.0, %v925
      %927 = vmatmul.f32.gmra.mxu0 %v581
      %v928 = vpop.f32.mrf.mxu0
      %v929 = vadd.f32 0.0, %v928
      %930 = vmatmul.f32.gmra.mxu0 %v584
      %v931 = vpop.f32.mrf.mxu0
      %v932 = vadd.f32 0.0, %v931
      %933 = vmatmul.f32.gmra.mxu0 %v587
      %v934 = vpop.f32.mrf.mxu0
      %v935 = vadd.f32 0.0, %v934
      %936 = vdwg.mxu0
      %937 = vmatpush.msra.mxu0 0.0
      %938 = vmatpush.msra.mxu0 0.0
      %939 = vmatpush.msra.mxu0 0.0
      %940 = vmatpush.msra.mxu0 0.0
      %941 = vmatpush.msra.mxu0 0.0
      %942 = vmatpush.msra.mxu0 0.0
      %943 = vmatpush.msra.mxu0 0.0
      %944 = vmatpush.msra.mxu0 0.0
      %945 = vmatpush.msra.mxu0 0.0
      %946 = vmatpush.msra.mxu0 0.0
      %947 = vmatpush.msra.mxu0 0.0
      %948 = vmatpush.msra.mxu0 0.0
      %949 = vmatpush.msra.mxu0 0.0
      %950 = vmatpush.msra.mxu0 0.0
      %951 = vmatpush.msra.mxu0 %v568
      %952 = vmatpush.msra.mxu0 %v552
      %953 = vmatmul.f32.gmra.mxu0 %v578
      %v954 = vpop.f32.mrf.mxu0
      %v955 = vadd.f32 0.0, %v954
      %956 = vmatmul.f32.gmra.mxu0 %v581
      %v957 = vpop.f32.mrf.mxu0
      %v958 = vadd.f32 0.0, %v957
      %959 = vmatmul.f32.gmra.mxu0 %v584
      %v960 = vpop.f32.mrf.mxu0
      %v961 = vadd.f32 0.0, %v960
      %962 = vmatmul.f32.gmra.mxu0 %v587
      %v963 = vpop.f32.mrf.mxu0
      %v964 = vadd.f32 0.0, %v963
      %965 = vdwg.mxu0
      %966 = vmatpush.msra.mxu0 0.0
      %967 = vmatpush.msra.mxu0 0.0
      %968 = vmatpush.msra.mxu0 0.0
      %969 = vmatpush.msra.mxu0 0.0
      %970 = vmatpush.msra.mxu0 0.0
      %971 = vmatpush.msra.mxu0 0.0
      %972 = vmatpush.msra.mxu0 0.0
      %973 = vmatpush.msra.mxu0 0.0
      %974 = vmatpush.msra.mxu0 0.0
      %975 = vmatpush.msra.mxu0 0.0
      %976 = vmatpush.msra.mxu0 0.0
      %977 = vmatpush.msra.mxu0 0.0
      %978 = vmatpush.msra.mxu0 0.0
      %979 = vmatpush.msra.mxu0 0.0
      %980 = vmatpush.msra.mxu0 %v569
      %981 = vmatpush.msra.mxu0 %v553
      %982 = vmatmul.f32.gmra.mxu0 %v578
      %v983 = vpop.f32.mrf.mxu0
      %v984 = vadd.f32 0.0, %v983
      %985 = vmatmul.f32.gmra.mxu0 %v581
      %v986 = vpop.f32.mrf.mxu0
      %v987 = vadd.f32 0.0, %v986
      %988 = vmatmul.f32.gmra.mxu0 %v584
      %v989 = vpop.f32.mrf.mxu0
      %v990 = vadd.f32 0.0, %v989
      %991 = vmatmul.f32.gmra.mxu0 %v587
      %v992 = vpop.f32.mrf.mxu0
      %v993 = vadd.f32 0.0, %v992
      %994 = vdwg.mxu0
      %995 = vmatpush.msra.mxu0 0.0
      %996 = vmatpush.msra.mxu0 0.0
      %997 = vmatpush.msra.mxu0 0.0
      %998 = vmatpush.msra.mxu0 0.0
      %999 = vmatpush.msra.mxu0 0.0
      %1000 = vmatpush.msra.mxu0 0.0
      %1001 = vmatpush.msra.mxu0 0.0
      %1002 = vmatpush.msra.mxu0 0.0
      %1003 = vmatpush.msra.mxu0 0.0
      %1004 = vmatpush.msra.mxu0 0.0
      %1005 = vmatpush.msra.mxu0 0.0
      %1006 = vmatpush.msra.mxu0 0.0
      %1007 = vmatpush.msra.mxu0 0.0
      %1008 = vmatpush.msra.mxu0 0.0
      %1009 = vmatpush.msra.mxu0 %v570
      %1010 = vmatpush.msra.mxu0 %v554
      %1011 = vmatmul.f32.gmra.mxu0 %v578
      %v1012 = vpop.f32.mrf.mxu0
      %v1013 = vadd.f32 0.0, %v1012
      %1014 = vmatmul.f32.gmra.mxu0 %v581
      %v1015 = vpop.f32.mrf.mxu0
      %v1016 = vadd.f32 0.0, %v1015
      %1017 = vmatmul.f32.gmra.mxu0 %v584
      %v1018 = vpop.f32.mrf.mxu0
      %v1019 = vadd.f32 0.0, %v1018
      %1020 = vmatmul.f32.gmra.mxu0 %v587
      %v1021 = vpop.f32.mrf.mxu0
      %v1022 = vadd.f32 0.0, %v1021
      %1023 = vdwg.mxu0
      %1024 = vmatpush.msra.mxu0 0.0
      %1025 = vmatpush.msra.mxu0 0.0
      %1026 = vmatpush.msra.mxu0 0.0
      %1027 = vmatpush.msra.mxu0 0.0
      %1028 = vmatpush.msra.mxu0 0.0
      %1029 = vmatpush.msra.mxu0 0.0
      %1030 = vmatpush.msra.mxu0 0.0
      %1031 = vmatpush.msra.mxu0 0.0
      %1032 = vmatpush.msra.mxu0 0.0
      %1033 = vmatpush.msra.mxu0 0.0
      %1034 = vmatpush.msra.mxu0 0.0
      %1035 = vmatpush.msra.mxu0 0.0
      %1036 = vmatpush.msra.mxu0 0.0
      %1037 = vmatpush.msra.mxu0 0.0
      %1038 = vmatpush.msra.mxu0 %v571
      %1039 = vmatpush.msra.mxu0 %v555
      %1040 = vmatmul.f32.gmra.mxu0 %v578
      %v1041 = vpop.f32.mrf.mxu0
      %v1042 = vadd.f32 0.0, %v1041
      %1043 = vmatmul.f32.gmra.mxu0 %v581
      %v1044 = vpop.f32.mrf.mxu0
      %v1045 = vadd.f32 0.0, %v1044
      %1046 = vmatmul.f32.gmra.mxu0 %v584
      %v1047 = vpop.f32.mrf.mxu0
      %v1048 = vadd.f32 0.0, %v1047
      %1049 = vmatmul.f32.gmra.mxu0 %v587
      %v1050 = vpop.f32.mrf.mxu0
      %v1051 = vadd.f32 0.0, %v1050
      %1052 = vdwg.mxu0
      %v1053 = vmax.f32 %v607, 0.0
      %v1054 = vmax.f32 %v636, 0.0
      %v1055 = vmax.f32 %v665, 0.0
      %v1056 = vmax.f32 %v694, 0.0
      %v1057 = vmax.f32 %v723, 0.0
      %v1058 = vmax.f32 %v752, 0.0
      %v1059 = vmax.f32 %v781, 0.0
      %v1060 = vmax.f32 %v810, 0.0
      %v1061 = vmax.f32 %v839, 0.0
      %v1062 = vmax.f32 %v868, 0.0
      %v1063 = vmax.f32 %v897, 0.0
      %v1064 = vmax.f32 %v926, 0.0
      %v1065 = vmax.f32 %v955, 0.0
      %v1066 = vmax.f32 %v984, 0.0
      %v1067 = vmax.f32 %v1013, 0.0
      %v1068 = vmax.f32 %v1042, 0.0
      %v1069 = vmax.f32 %v610, 0.0
      %v1070 = vmax.f32 %v639, 0.0
      %v1071 = vmax.f32 %v668, 0.0
      %v1072 = vmax.f32 %v697, 0.0
      %v1073 = vmax.f32 %v726, 0.0
      %v1074 = vmax.f32 %v755, 0.0
      %v1075 = vmax.f32 %v784, 0.0
      %v1076 = vmax.f32 %v813, 0.0
      %v1077 = vmax.f32 %v842, 0.0
      %v1078 = vmax.f32 %v871, 0.0
      %v1079 = vmax.f32 %v900, 0.0
      %v1080 = vmax.f32 %v929, 0.0
      %v1081 = vmax.f32 %v958, 0.0
      %v1082 = vmax.f32 %v987, 0.0
      %v1083 = vmax.f32 %v1016, 0.0
      %v1084 = vmax.f32 %v1045, 0.0
      %v1085 = vmax.f32 %v613, 0.0
      %v1086 = vmax.f32 %v642, 0.0
      %v1087 = vmax.f32 %v671, 0.0
      %v1088 = vmax.f32 %v700, 0.0
      %v1089 = vmax.f32 %v729, 0.0
      %v1090 = vmax.f32 %v758, 0.0
      %v1091 = vmax.f32 %v787, 0.0
      %v1092 = vmax.f32 %v816, 0.0
      %v1093 = vmax.f32 %v845, 0.0
      %v1094 = vmax.f32 %v874, 0.0
      %v1095 = vmax.f32 %v903, 0.0
      %v1096 = vmax.f32 %v932, 0.0
      %v1097 = vmax.f32 %v961, 0.0
      %v1098 = vmax.f32 %v990, 0.0
      %v1099 = vmax.f32 %v1019, 0.0
      %v1100 = vmax.f32 %v1048, 0.0
      %v1101 = vmax.f32 %v616, 0.0
      %v1102 = vmax.f32 %v645, 0.0
      %v1103 = vmax.f32 %v674, 0.0
      %v1104 = vmax.f32 %v703, 0.0
      %v1105 = vmax.f32 %v732, 0.0
      %v1106 = vmax.f32 %v761, 0.0
      %v1107 = vmax.f32 %v790, 0.0
      %v1108 = vmax.f32 %v819, 0.0
      %v1109 = vmax.f32 %v848, 0.0
      %v1110 = vmax.f32 %v877, 0.0
      %v1111 = vmax.f32 %v906, 0.0
      %v1112 = vmax.f32 %v935, 0.0
      %v1113 = vmax.f32 %v964, 0.0
      %v1114 = vmax.f32 %v993, 0.0
      %v1115 = vmax.f32 %v1022, 0.0
      %v1116 = vmax.f32 %v1051, 0.0
      %v1117 = vmax.f32 %v1053, %v1057
      %v1118 = vmax.f32 %v1054, %v1058
      %v1119 = vmax.f32 %v1055, %v1059
      %v1120 = vmax.f32 %v1056, %v1060
      %v1121 = vmax.f32 %v1069, %v1073
      %v1122 = vmax.f32 %v1070, %v1074
      %v1123 = vmax.f32 %v1071, %v1075
      %v1124 = vmax.f32 %v1072, %v1076
      %v1125 = vmax.f32 %v1085, %v1089
      %v1126 = vmax.f32 %v1086, %v1090
      %v1127 = vmax.f32 %v1087, %v1091
      %v1128 = vmax.f32 %v1088, %v1092
      %v1129 = vmax.f32 %v1101, %v1105
      %v1130 = vmax.f32 %v1102, %v1106
      %v1131 = vmax.f32 %v1103, %v1107
      %v1132 = vmax.f32 %v1104, %v1108
      %v1133 = vmax.f32 %v1061, %v1065
      %v1134 = vmax.f32 %v1062, %v1066
      %v1135 = vmax.f32 %v1063, %v1067
      %v1136 = vmax.f32 %v1064, %v1068
      %v1137 = vmax.f32 %v1077, %v1081
      %v1138 = vmax.f32 %v1078, %v1082
      %v1139 = vmax.f32 %v1079, %v1083
      %v1140 = vmax.f32 %v1080, %v1084
      %v1141 = vmax.f32 %v1093, %v1097
      %v1142 = vmax.f32 %v1094, %v1098
      %v1143 = vmax.f32 %v1095, %v1099
      %v1144 = vmax.f32 %v1096, %v1100
      %v1145 = vmax.f32 %v1109, %v1113
      %v1146 = vmax.f32 %v1110, %v1114
      %v1147 = vmax.f32 %v1111, %v1115
      %v1148 = vmax.f32 %v1112, %v1116
      %v1149 = vmax.f32 %v1117, %v1133
      %v1150 = vmax.f32 %v1118, %v1134
      %v1151 = vmax.f32 %v1119, %v1135
      %v1152 = vmax.f32 %v1120, %v1136
      %v1153 = vmax.f32 %v1121, %v1137
      %v1154 = vmax.f32 %v1122, %v1138
      %v1155 = vmax.f32 %v1123, %v1139
      %v1156 = vmax.f32 %v1124, %v1140
      %v1157 = vmax.f32 %v1125, %v1141
      %v1158 = vmax.f32 %v1126, %v1142
      %v1159 = vmax.f32 %v1127, %v1143
      %v1160 = vmax.f32 %v1128, %v1144
      %v1161 = vmax.f32 %v1129, %v1145
      %v1162 = vmax.f32 %v1130, %v1146
      %v1163 = vmax.f32 %v1131, %v1147
      %v1164 = vmax.f32 %v1132, %v1148
      %v1165 = vld [vmem:[%s3] sm:$0xff]
      %v1166 = vld [vmem:[%s3 + $0x8] sm:$0xff]
      %v1167 = vld [vmem:[%s3 + $0x10] sm:$0xff]
      %v1168 = vld [vmem:[%s3 + $0x18] sm:$0xff]
      %v1169 = vld [vmem:[%s3 + $0x20] sm:$0xff]
      %v1170 = vld [vmem:[%s3 + $0x28] sm:$0xff]
      %v1171 = vld [vmem:[%s3 + $0x30] sm:$0xff]
      %v1172 = vld [vmem:[%s3 + $0x38] sm:$0xff]
      %v1173 = vld [vmem:[%s3 + $0x40] sm:$0xff]
      %v1174 = vld [vmem:[%s3 + $0x48] sm:$0xff]
      %v1175 = vld [vmem:[%s3 + $0x50] sm:$0xff]
      %v1176 = vld [vmem:[%s3 + $0x58] sm:$0xff]
      %v1177 = vld [vmem:[%s3 + $0x60] sm:$0xff]
      %v1178 = vld [vmem:[%s3 + $0x68] sm:$0xff]
      %v1179 = vld [vmem:[%s3 + $0x70] sm:$0xff]
      %v1180 = vld [vmem:[%s3 + $0x78] sm:$0xff]
      %v1181 = vld [vmem:[%s3 + $0x80] sm:$0xff]
      %v1182 = vld [vmem:[%s3 + $0x88] sm:$0xff]
      %v1183 = vld [vmem:[%s3 + $0x90] sm:$0xff]
      %v1184 = vld [vmem:[%s3 + $0x98] sm:$0xff]
      %v1185 = vld [vmem:[%s3 + $0xa0] sm:$0xff]
      %v1186 = vld [vmem:[%s3 + $0xa8] sm:$0xff]
      %v1187 = vld [vmem:[%s3 + $0xb0] sm:$0xff]
      %v1188 = vld [vmem:[%s3 + $0xb8] sm:$0xff]
      %v1189 = vld [vmem:[%s3 + $0xc0] sm:$0xff]
      %v1190 = vld [vmem:[%s3 + $0xc8] sm:$0xff]
      %v1191 = vld [vmem:[%s3 + $0xd0] sm:$0xff]
      %v1192 = vld [vmem:[%s3 + $0xd8] sm:$0xff]
      %v1193 = vld [vmem:[%s3 + $0xe0] sm:$0xff]
      %v1194 = vld [vmem:[%s3 + $0xe8] sm:$0xff]
      %v1195 = vld [vmem:[%s3 + $0xf0] sm:$0xff]
      %v1196 = vld [vmem:[%s3 + $0xf8] sm:$0xff]
      %v1197 = vld [vmem:[%s3 + $0x100] sm:$0xff]
      %v1198 = vld [vmem:[%s3 + $0x108] sm:$0xff]
      %v1199 = vld [vmem:[%s3 + $0x110] sm:$0xff]
      %v1200 = vld [vmem:[%s3 + $0x118] sm:$0xff]
      %v1201 = vld [vmem:[%s3 + $0x120] sm:$0xff]
      %v1202 = vld [vmem:[%s3 + $0x128] sm:$0xff]
      %v1203 = vld [vmem:[%s3 + $0x130] sm:$0xff]
      %v1204 = vld [vmem:[%s3 + $0x138] sm:$0xff]
      %v1205 = vld [vmem:[%s3 + $0x140] sm:$0xff]
      %v1206 = vld [vmem:[%s3 + $0x148] sm:$0xff]
      %v1207 = vld [vmem:[%s3 + $0x150] sm:$0xff]
      %v1208 = vld [vmem:[%s3 + $0x158] sm:$0xff]
      %v1209 = vld [vmem:[%s3 + $0x160] sm:$0xff]
      %v1210 = vld [vmem:[%s3 + $0x168] sm:$0xff]
      %v1211 = vld [vmem:[%s3 + $0x170] sm:$0xff]
      %v1212 = vld [vmem:[%s3 + $0x178] sm:$0xff]
      %v1213 = vld [vmem:[%s3 + $0x180] sm:$0xff]
      %v1214 = vld [vmem:[%s3 + $0x188] sm:$0xff]
      %v1215 = vld [vmem:[%s3 + $0x190] sm:$0xff]
      %v1216 = vld [vmem:[%s3 + $0x198] sm:$0xff]
      %v1217 = vld [vmem:[%s3 + $0x1a0] sm:$0xff]
      %v1218 = vld [vmem:[%s3 + $0x1a8] sm:$0xff]
      %v1219 = vld [vmem:[%s3 + $0x1b0] sm:$0xff]
      %v1220 = vld [vmem:[%s3 + $0x1b8] sm:$0xff]
      %v1221 = vld [vmem:[%s3 + $0x1c0] sm:$0xff]
      %v1222 = vld [vmem:[%s3 + $0x1c8] sm:$0xff]
      %v1223 = vld [vmem:[%s3 + $0x1d0] sm:$0xff]
      %v1224 = vld [vmem:[%s3 + $0x1d8] sm:$0xff]
      %v1225 = vld [vmem:[%s3 + $0x1e0] sm:$0xff]
      %v1226 = vld [vmem:[%s3 + $0x1e8] sm:$0xff]
      %v1227 = vld [vmem:[%s3 + $0x1f0] sm:$0xff]
      %v1228 = vld [vmem:[%s3 + $0x1f8] sm:$0xff]
      %v1229 = vld [vmem:[%s3 + $0x200] sm:$0xff]
      %v1230 = vld [vmem:[%s3 + $0x208] sm:$0xff]
      %v1231 = vld [vmem:[%s3 + $0x210] sm:$0xff]
      %v1232 = vld [vmem:[%s3 + $0x218] sm:$0xff]
      %v1233 = vld [vmem:[%s3 + $0x220] sm:$0xff]
      %v1234 = vld [vmem:[%s3 + $0x228] sm:$0xff]
      %v1235 = vld [vmem:[%s3 + $0x230] sm:$0xff]
      %v1236 = vld [vmem:[%s3 + $0x238] sm:$0xff]
      %v1237 = vld [vmem:[%s3 + $0x240] sm:$0xff]
      %v1238 = vld [vmem:[%s3 + $0x248] sm:$0xff]
      %v1239 = vld [vmem:[%s3 + $0x250] sm:$0xff]
      %v1240 = vld [vmem:[%s3 + $0x258] sm:$0xff]
      %v1241 = vld [vmem:[%s3 + $0x260] sm:$0xff]
      %v1242 = vld [vmem:[%s3 + $0x268] sm:$0xff]
      %v1243 = vld [vmem:[%s3 + $0x270] sm:$0xff]
      %v1244 = vld [vmem:[%s3 + $0x278] sm:$0xff]
      %v1245 = vld [vmem:[%s3 + $0x280] sm:$0xff]
      %v1246 = vld [vmem:[%s3 + $0x288] sm:$0xff]
      %v1247 = vld [vmem:[%s3 + $0x290] sm:$0xff]
      %v1248 = vld [vmem:[%s3 + $0x298] sm:$0xff]
      %v1249 = vld [vmem:[%s3 + $0x2a0] sm:$0xff]
      %v1250 = vld [vmem:[%s3 + $0x2a8] sm:$0xff]
      %v1251 = vld [vmem:[%s3 + $0x2b0] sm:$0xff]
      %v1252 = vld [vmem:[%s3 + $0x2b8] sm:$0xff]
      %v1253 = vld [vmem:[%s3 + $0x2c0] sm:$0xff]
      %v1254 = vld [vmem:[%s3 + $0x2c8] sm:$0xff]
      %v1255 = vld [vmem:[%s3 + $0x2d0] sm:$0xff]
      %v1256 = vld [vmem:[%s3 + $0x2d8] sm:$0xff]
      %v1257 = vld [vmem:[%s3 + $0x2e0] sm:$0xff]
      %v1258 = vld [vmem:[%s3 + $0x2e8] sm:$0xff]
      %v1259 = vld [vmem:[%s3 + $0x2f0] sm:$0xff]
      %v1260 = vld [vmem:[%s3 + $0x2f8] sm:$0xff]
      %v1261 = vld [vmem:[%s3 + $0x300] sm:$0xff]
      %v1262 = vld [vmem:[%s3 + $0x308] sm:$0xff]
      %v1263 = vld [vmem:[%s3 + $0x310] sm:$0xff]
      %v1264 = vld [vmem:[%s3 + $0x318] sm:$0xff]
      %v1265 = vld [vmem:[%s3 + $0x320] sm:$0xff]
      %v1266 = vld [vmem:[%s3 + $0x328] sm:$0xff]
      %v1267 = vld [vmem:[%s3 + $0x330] sm:$0xff]
      %v1268 = vld [vmem:[%s3 + $0x338] sm:$0xff]
      %v1269 = vld [vmem:[%s3 + $0x340] sm:$0xff]
      %v1270 = vld [vmem:[%s3 + $0x348] sm:$0xff]
      %v1271 = vld [vmem:[%s3 + $0x350] sm:$0xff]
      %v1272 = vld [vmem:[%s3 + $0x358] sm:$0xff]
      %v1273 = vld [vmem:[%s3 + $0x360] sm:$0xff]
      %v1274 = vld [vmem:[%s3 + $0x368] sm:$0xff]
      %v1275 = vld [vmem:[%s3 + $0x370] sm:$0xff]
      %v1276 = vld [vmem:[%s3 + $0x378] sm:$0xff]
      %v1277 = vld [vmem:[%s3 + $0x380] sm:$0xff]
      %v1278 = vld [vmem:[%s3 + $0x388] sm:$0xff]
      %v1279 = vld [vmem:[%s3 + $0x390] sm:$0xff]
      %v1280 = vld [vmem:[%s3 + $0x398] sm:$0xff]
      %v1281 = vld [vmem:[%s3 + $0x3a0] sm:$0xff]
      %v1282 = vld [vmem:[%s3 + $0x3a8] sm:$0xff]
      %v1283 = vld [vmem:[%s3 + $0x3b0] sm:$0xff]
      %v1284 = vld [vmem:[%s3 + $0x3b8] sm:$0xff]
      %v1285 = vld [vmem:[%s3 + $0x3c0] sm:$0xff]
      %v1286 = vld [vmem:[%s3 + $0x3c8] sm:$0xff]
      %v1287 = vld [vmem:[%s3 + $0x3d0] sm:$0xff]
      %v1288 = vld [vmem:[%s3 + $0x3d8] sm:$0xff]
      %v1289 = vld [vmem:[%s3 + $0x3e0] sm:$0xff]
      %v1290 = vld [vmem:[%s3 + $0x3e8] sm:$0xff]
      %v1291 = vld [vmem:[%s3 + $0x3f0] sm:$0xff]
      %v1292 = vld [vmem:[%s3 + $0x3f8] sm:$0xff]
      %v1293 = vld [vmem:[%s3 + $0x400] sm:$0xff]
      %v1294 = vld [vmem:[%s3 + $0x408] sm:$0xff]
      %v1295 = vld [vmem:[%s3 + $0x410] sm:$0xff]
      %v1296 = vld [vmem:[%s3 + $0x418] sm:$0xff]
      %v1297 = vld [vmem:[%s3 + $0x420] sm:$0xff]
      %v1298 = vld [vmem:[%s3 + $0x428] sm:$0xff]
      %v1299 = vld [vmem:[%s3 + $0x430] sm:$0xff]
      %v1300 = vld [vmem:[%s3 + $0x438] sm:$0xff]
      %v1301 = vld [vmem:[%s3 + $0x440] sm:$0xff]
      %v1302 = vld [vmem:[%s3 + $0x448] sm:$0xff]
      %v1303 = vld [vmem:[%s3 + $0x450] sm:$0xff]
      %v1304 = vld [vmem:[%s3 + $0x458] sm:$0xff]
      %v1305 = vld [vmem:[%s3 + $0x460] sm:$0xff]
      %v1306 = vld [vmem:[%s3 + $0x468] sm:$0xff]
      %v1307 = vld [vmem:[%s3 + $0x470] sm:$0xff]
      %v1308 = vld [vmem:[%s3 + $0x478] sm:$0xff]
      %v1309 = vld [vmem:[%s3 + $0x480] sm:$0xff]
      %v1310 = vld [vmem:[%s3 + $0x488] sm:$0xff]
      %v1311 = vld [vmem:[%s3 + $0x490] sm:$0xff]
      %v1312 = vld [vmem:[%s3 + $0x498] sm:$0xff]
      %v1313 = vld [vmem:[%s3 + $0x4a0] sm:$0xff]
      %v1314 = vld [vmem:[%s3 + $0x4a8] sm:$0xff]
      %v1315 = vld [vmem:[%s3 + $0x4b0] sm:$0xff]
      %v1316 = vld [vmem:[%s3 + $0x4b8] sm:$0xff]
      %v1317 = vld [vmem:[%s3 + $0x4c0] sm:$0xff]
      %v1318 = vld [vmem:[%s3 + $0x4c8] sm:$0xff]
      %v1319 = vld [vmem:[%s3 + $0x4d0] sm:$0xff]
      %v1320 = vld [vmem:[%s3 + $0x4d8] sm:$0xff]
      %v1321 = vld [vmem:[%s3 + $0x4e0] sm:$0xff]
      %v1322 = vld [vmem:[%s3 + $0x4e8] sm:$0xff]
      %v1323 = vld [vmem:[%s3 + $0x4f0] sm:$0xff]
      %v1324 = vld [vmem:[%s3 + $0x4f8] sm:$0xff]
      %v1325 = vld [vmem:[%s3 + $0x500] sm:$0xff]
      %v1326 = vld [vmem:[%s3 + $0x508] sm:$0xff]
      %v1327 = vld [vmem:[%s3 + $0x510] sm:$0xff]
      %v1328 = vld [vmem:[%s3 + $0x518] sm:$0xff]
      %v1329 = vld [vmem:[%s3 + $0x520] sm:$0xff]
      %v1330 = vld [vmem:[%s3 + $0x528] sm:$0xff]
      %v1331 = vld [vmem:[%s3 + $0x530] sm:$0xff]
      %v1332 = vld [vmem:[%s3 + $0x538] sm:$0xff]
      %v1333 = vld [vmem:[%s3 + $0x540] sm:$0xff]
      %v1334 = vld [vmem:[%s3 + $0x548] sm:$0xff]
      %v1335 = vld [vmem:[%s3 + $0x550] sm:$0xff]
      %v1336 = vld [vmem:[%s3 + $0x558] sm:$0xff]
      %v1337 = vld [vmem:[%s3 + $0x560] sm:$0xff]
      %v1338 = vld [vmem:[%s3 + $0x568] sm:$0xff]
      %v1339 = vld [vmem:[%s3 + $0x570] sm:$0xff]
      %v1340 = vld [vmem:[%s3 + $0x578] sm:$0xff]
      %v1341 = vld [vmem:[%s3 + $0x580] sm:$0xff]
      %v1342 = vld [vmem:[%s3 + $0x588] sm:$0xff]
      %v1343 = vld [vmem:[%s3 + $0x590] sm:$0xff]
      %v1344 = vld [vmem:[%s3 + $0x598] sm:$0xff]
      %v1345 = vld [vmem:[%s3 + $0x5a0] sm:$0xff]
      %v1346 = vld [vmem:[%s3 + $0x5a8] sm:$0xff]
      %v1347 = vld [vmem:[%s3 + $0x5b0] sm:$0xff]
      %v1348 = vld [vmem:[%s3 + $0x5b8] sm:$0xff]
      %v1349 = vld [vmem:[%s3 + $0x5c0] sm:$0xff]
      %v1350 = vld [vmem:[%s3 + $0x5c8] sm:$0xff]
      %v1351 = vld [vmem:[%s3 + $0x5d0] sm:$0xff]
      %v1352 = vld [vmem:[%s3 + $0x5d8] sm:$0xff]
      %v1353 = vld [vmem:[%s3 + $0x5e0] sm:$0xff]
      %v1354 = vld [vmem:[%s3 + $0x5e8] sm:$0xff]
      %v1355 = vld [vmem:[%s3 + $0x5f0] sm:$0xff]
      %v1356 = vld [vmem:[%s3 + $0x5f8] sm:$0xff]
      %v1357 = vld [vmem:[%s3 + $0x600] sm:$0xff]
      %v1358 = vld [vmem:[%s3 + $0x608] sm:$0xff]
      %v1359 = vld [vmem:[%s3 + $0x610] sm:$0xff]
      %v1360 = vld [vmem:[%s3 + $0x618] sm:$0xff]
      %v1361 = vld [vmem:[%s3 + $0x620] sm:$0xff]
      %v1362 = vld [vmem:[%s3 + $0x628] sm:$0xff]
      %v1363 = vld [vmem:[%s3 + $0x630] sm:$0xff]
      %v1364 = vld [vmem:[%s3 + $0x638] sm:$0xff]
      %v1365 = vld [vmem:[%s3 + $0x640] sm:$0xff]
      %v1366 = vld [vmem:[%s3 + $0x648] sm:$0xff]
      %v1367 = vld [vmem:[%s3 + $0x650] sm:$0xff]
      %v1368 = vld [vmem:[%s3 + $0x658] sm:$0xff]
      %v1369 = vld [vmem:[%s3 + $0x660] sm:$0xff]
      %v1370 = vld [vmem:[%s3 + $0x668] sm:$0xff]
      %v1371 = vld [vmem:[%s3 + $0x670] sm:$0xff]
      %v1372 = vld [vmem:[%s3 + $0x678] sm:$0xff]
      %v1373 = vld [vmem:[%s3 + $0x680] sm:$0xff]
      %v1374 = vld [vmem:[%s3 + $0x688] sm:$0xff]
      %v1375 = vld [vmem:[%s3 + $0x690] sm:$0xff]
      %v1376 = vld [vmem:[%s3 + $0x698] sm:$0xff]
      %v1377 = vld [vmem:[%s3 + $0x6a0] sm:$0xff]
      %v1378 = vld [vmem:[%s3 + $0x6a8] sm:$0xff]
      %v1379 = vld [vmem:[%s3 + $0x6b0] sm:$0xff]
      %v1380 = vld [vmem:[%s3 + $0x6b8] sm:$0xff]
      %v1381 = vld [vmem:[%s3 + $0x6c0] sm:$0xff]
      %v1382 = vld [vmem:[%s3 + $0x6c8] sm:$0xff]
      %v1383 = vld [vmem:[%s3 + $0x6d0] sm:$0xff]
      %v1384 = vld [vmem:[%s3 + $0x6d8] sm:$0xff]
      %v1385 = vld [vmem:[%s3 + $0x6e0] sm:$0xff]
      %v1386 = vld [vmem:[%s3 + $0x6e8] sm:$0xff]
      %v1387 = vld [vmem:[%s3 + $0x6f0] sm:$0xff]
      %v1388 = vld [vmem:[%s3 + $0x6f8] sm:$0xff]
      %v1389 = vld [vmem:[%s3 + $0x700] sm:$0xff]
      %v1390 = vld [vmem:[%s3 + $0x708] sm:$0xff]
      %v1391 = vld [vmem:[%s3 + $0x710] sm:$0xff]
      %v1392 = vld [vmem:[%s3 + $0x718] sm:$0xff]
      %v1393 = vld [vmem:[%s3 + $0x720] sm:$0xff]
      %v1394 = vld [vmem:[%s3 + $0x728] sm:$0xff]
      %v1395 = vld [vmem:[%s3 + $0x730] sm:$0xff]
      %v1396 = vld [vmem:[%s3 + $0x738] sm:$0xff]
      %v1397 = vld [vmem:[%s3 + $0x740] sm:$0xff]
      %v1398 = vld [vmem:[%s3 + $0x748] sm:$0xff]
      %v1399 = vld [vmem:[%s3 + $0x750] sm:$0xff]
      %v1400 = vld [vmem:[%s3 + $0x758] sm:$0xff]
      %v1401 = vld [vmem:[%s3 + $0x760] sm:$0xff]
      %v1402 = vld [vmem:[%s3 + $0x768] sm:$0xff]
      %v1403 = vld [vmem:[%s3 + $0x770] sm:$0xff]
      %v1404 = vld [vmem:[%s3 + $0x778] sm:$0xff]
      %v1405 = vld [vmem:[%s3 + $0x780] sm:$0xff]
      %v1406 = vld [vmem:[%s3 + $0x788] sm:$0xff]
      %v1407 = vld [vmem:[%s3 + $0x790] sm:$0xff]
      %v1408 = vld [vmem:[%s3 + $0x798] sm:$0xff]
      %v1409 = vld [vmem:[%s3 + $0x7a0] sm:$0xff]
      %v1410 = vld [vmem:[%s3 + $0x7a8] sm:$0xff]
      %v1411 = vld [vmem:[%s3 + $0x7b0] sm:$0xff]
      %v1412 = vld [vmem:[%s3 + $0x7b8] sm:$0xff]
      %v1413 = vld [vmem:[%s3 + $0x7c0] sm:$0xff]
      %v1414 = vld [vmem:[%s3 + $0x7c8] sm:$0xff]
      %v1415 = vld [vmem:[%s3 + $0x7d0] sm:$0xff]
      %v1416 = vld [vmem:[%s3 + $0x7d8] sm:$0xff]
      %v1417 = vld [vmem:[%s3 + $0x7e0] sm:$0xff]
      %v1418 = vld [vmem:[%s3 + $0x7e8] sm:$0xff]
      %v1419 = vld [vmem:[%s3 + $0x7f0] sm:$0xff]
      %v1420 = vld [vmem:[%s3 + $0x7f8] sm:$0xff]
      %v1421 = vld [vmem:[%s3 + $0x800] sm:$0xff]
      %v1422 = vld [vmem:[%s3 + $0x808] sm:$0xff]
      %v1423 = vld [vmem:[%s3 + $0x810] sm:$0xff]
      %v1424 = vld [vmem:[%s3 + $0x818] sm:$0xff]
      %v1425 = vld [vmem:[%s3 + $0x820] sm:$0xff]
      %v1426 = vld [vmem:[%s3 + $0x828] sm:$0xff]
      %v1427 = vld [vmem:[%s3 + $0x830] sm:$0xff]
      %v1428 = vld [vmem:[%s3 + $0x838] sm:$0xff]
      %v1429 = vld [vmem:[%s3 + $0x840] sm:$0xff]
      %v1430 = vld [vmem:[%s3 + $0x848] sm:$0xff]
      %v1431 = vld [vmem:[%s3 + $0x850] sm:$0xff]
      %v1432 = vld [vmem:[%s3 + $0x858] sm:$0xff]
      %v1433 = vld [vmem:[%s3 + $0x860] sm:$0xff]
      %v1434 = vld [vmem:[%s3 + $0x868] sm:$0xff]
      %v1435 = vld [vmem:[%s3 + $0x870] sm:$0xff]
      %v1436 = vld [vmem:[%s3 + $0x878] sm:$0xff]
      %v1437 = vld [vmem:[%s3 + $0x880] sm:$0xff]
      %v1438 = vld [vmem:[%s3 + $0x888] sm:$0xff]
      %v1439 = vld [vmem:[%s3 + $0x890] sm:$0xff]
      %v1440 = vld [vmem:[%s3 + $0x898] sm:$0xff]
      %v1441 = vld [vmem:[%s3 + $0x8a0] sm:$0xff]
      %v1442 = vld [vmem:[%s3 + $0x8a8] sm:$0xff]
      %v1443 = vld [vmem:[%s3 + $0x8b0] sm:$0xff]
      %v1444 = vld [vmem:[%s3 + $0x8b8] sm:$0xff]
      %v1445 = vld [vmem:[%s3 + $0x8c0] sm:$0xff]
      %v1446 = vld [vmem:[%s3 + $0x8c8] sm:$0xff]
      %v1447 = vld [vmem:[%s3 + $0x8d0] sm:$0xff]
      %v1448 = vld [vmem:[%s3 + $0x8d8] sm:$0xff]
      %v1449 = vld [vmem:[%s3 + $0x8e0] sm:$0xff]
      %v1450 = vld [vmem:[%s3 + $0x8e8] sm:$0xff]
      %v1451 = vld [vmem:[%s3 + $0x8f0] sm:$0xff]
      %v1452 = vld [vmem:[%s3 + $0x8f8] sm:$0xff]
      %v1453 = vld [vmem:[%s3 + $0x900] sm:$0xff]
      %v1454 = vld [vmem:[%s3 + $0x908] sm:$0xff]
      %v1455 = vld [vmem:[%s3 + $0x910] sm:$0xff]
      %v1456 = vld [vmem:[%s3 + $0x918] sm:$0xff]
      %v1457 = vld [vmem:[%s3 + $0x920] sm:$0xff]
      %v1458 = vld [vmem:[%s3 + $0x928] sm:$0xff]
      %v1459 = vld [vmem:[%s3 + $0x930] sm:$0xff]
      %v1460 = vld [vmem:[%s3 + $0x938] sm:$0xff]
      %v1461 = vld [vmem:[%s3 + $0x940] sm:$0xff]
      %v1462 = vld [vmem:[%s3 + $0x948] sm:$0xff]
      %v1463 = vld [vmem:[%s3 + $0x950] sm:$0xff]
      %v1464 = vld [vmem:[%s3 + $0x958] sm:$0xff]
      %v1465 = vld [vmem:[%s3 + $0x960] sm:$0xff]
      %v1466 = vld [vmem:[%s3 + $0x968] sm:$0xff]
      %v1467 = vld [vmem:[%s3 + $0x970] sm:$0xff]
      %v1468 = vld [vmem:[%s3 + $0x978] sm:$0xff]
      %v1469 = vld [vmem:[%s3 + $0x980] sm:$0xff]
      %v1470 = vld [vmem:[%s3 + $0x988] sm:$0xff]
      %v1471 = vld [vmem:[%s3 + $0x990] sm:$0xff]
      %v1472 = vld [vmem:[%s3 + $0x998] sm:$0xff]
      %v1473 = vld [vmem:[%s3 + $0x9a0] sm:$0xff]
      %v1474 = vld [vmem:[%s3 + $0x9a8] sm:$0xff]
      %v1475 = vld [vmem:[%s3 + $0x9b0] sm:$0xff]
      %v1476 = vld [vmem:[%s3 + $0x9b8] sm:$0xff]
      %v1477 = vld [vmem:[%s3 + $0x9c0] sm:$0xff]
      %v1478 = vld [vmem:[%s3 + $0x9c8] sm:$0xff]
      %v1479 = vld [vmem:[%s3 + $0x9d0] sm:$0xff]
      %v1480 = vld [vmem:[%s3 + $0x9d8] sm:$0xff]
      %v1481 = vld [vmem:[%s3 + $0x9e0] sm:$0xff]
      %v1482 = vld [vmem:[%s3 + $0x9e8] sm:$0xff]
      %v1483 = vld [vmem:[%s3 + $0x9f0] sm:$0xff]
      %v1484 = vld [vmem:[%s3 + $0x9f8] sm:$0xff]
      %v1485 = vld [vmem:[%s3 + $0xa00] sm:$0xff]
      %v1486 = vld [vmem:[%s3 + $0xa08] sm:$0xff]
      %v1487 = vld [vmem:[%s3 + $0xa10] sm:$0xff]
      %v1488 = vld [vmem:[%s3 + $0xa18] sm:$0xff]
      %v1489 = vld [vmem:[%s3 + $0xa20] sm:$0xff]
      %v1490 = vld [vmem:[%s3 + $0xa28] sm:$0xff]
      %v1491 = vld [vmem:[%s3 + $0xa30] sm:$0xff]
      %v1492 = vld [vmem:[%s3 + $0xa38] sm:$0xff]
      %v1493 = vld [vmem:[%s3 + $0xa40] sm:$0xff]
      %v1494 = vld [vmem:[%s3 + $0xa48] sm:$0xff]
      %v1495 = vld [vmem:[%s3 + $0xa50] sm:$0xff]
      %v1496 = vld [vmem:[%s3 + $0xa58] sm:$0xff]
      %v1497 = vld [vmem:[%s3 + $0xa60] sm:$0xff]
      %v1498 = vld [vmem:[%s3 + $0xa68] sm:$0xff]
      %v1499 = vld [vmem:[%s3 + $0xa70] sm:$0xff]
      %v1500 = vld [vmem:[%s3 + $0xa78] sm:$0xff]
      %v1501 = vld [vmem:[%s3 + $0xa80] sm:$0xff]
      %v1502 = vld [vmem:[%s3 + $0xa88] sm:$0xff]
      %v1503 = vld [vmem:[%s3 + $0xa90] sm:$0xff]
      %v1504 = vld [vmem:[%s3 + $0xa98] sm:$0xff]
      %v1505 = vld [vmem:[%s3 + $0xaa0] sm:$0xff]
      %v1506 = vld [vmem:[%s3 + $0xaa8] sm:$0xff]
      %v1507 = vld [vmem:[%s3 + $0xab0] sm:$0xff]
      %v1508 = vld [vmem:[%s3 + $0xab8] sm:$0xff]
      %v1509 = vld [vmem:[%s3 + $0xac0] sm:$0xff]
      %v1510 = vld [vmem:[%s3 + $0xac8] sm:$0xff]
      %v1511 = vld [vmem:[%s3 + $0xad0] sm:$0xff]
      %v1512 = vld [vmem:[%s3 + $0xad8] sm:$0xff]
      %v1513 = vld [vmem:[%s3 + $0xae0] sm:$0xff]
      %v1514 = vld [vmem:[%s3 + $0xae8] sm:$0xff]
      %v1515 = vld [vmem:[%s3 + $0xaf0] sm:$0xff]
      %v1516 = vld [vmem:[%s3 + $0xaf8] sm:$0xff]
      %v1517 = vld [vmem:[%s3 + $0xb00] sm:$0xff]
      %v1518 = vld [vmem:[%s3 + $0xb08] sm:$0xff]
      %v1519 = vld [vmem:[%s3 + $0xb10] sm:$0xff]
      %v1520 = vld [vmem:[%s3 + $0xb18] sm:$0xff]
      %v1521 = vld [vmem:[%s3 + $0xb20] sm:$0xff]
      %v1522 = vld [vmem:[%s3 + $0xb28] sm:$0xff]
      %v1523 = vld [vmem:[%s3 + $0xb30] sm:$0xff]
      %v1524 = vld [vmem:[%s3 + $0xb38] sm:$0xff]
      %v1525 = vld [vmem:[%s3 + $0xb40] sm:$0xff]
      %v1526 = vld [vmem:[%s3 + $0xb48] sm:$0xff]
      %v1527 = vld [vmem:[%s3 + $0xb50] sm:$0xff]
      %v1528 = vld [vmem:[%s3 + $0xb58] sm:$0xff]
      %v1529 = vld [vmem:[%s3 + $0xb60] sm:$0xff]
      %v1530 = vld [vmem:[%s3 + $0xb68] sm:$0xff]
      %v1531 = vld [vmem:[%s3 + $0xb70] sm:$0xff]
      %v1532 = vld [vmem:[%s3 + $0xb78] sm:$0xff]
      %v1533 = vld [vmem:[%s3 + $0xb80] sm:$0xff]
      %v1534 = vld [vmem:[%s3 + $0xb88] sm:$0xff]
      %v1535 = vld [vmem:[%s3 + $0xb90] sm:$0xff]
      %v1536 = vld [vmem:[%s3 + $0xb98] sm:$0xff]
      %v1537 = vld [vmem:[%s3 + $0xba0] sm:$0xff]
      %v1538 = vld [vmem:[%s3 + $0xba8] sm:$0xff]
      %v1539 = vld [vmem:[%s3 + $0xbb0] sm:$0xff]
      %v1540 = vld [vmem:[%s3 + $0xbb8] sm:$0xff]
      %v1541 = vld [vmem:[%s3 + $0xbc0] sm:$0xff]
      %v1542 = vld [vmem:[%s3 + $0xbc8] sm:$0xff]
      %v1543 = vld [vmem:[%s3 + $0xbd0] sm:$0xff]
      %v1544 = vld [vmem:[%s3 + $0xbd8] sm:$0xff]
      %v1545 = vld [vmem:[%s3 + $0xbe0] sm:$0xff]
      %v1546 = vld [vmem:[%s3 + $0xbe8] sm:$0xff]
      %v1547 = vld [vmem:[%s3 + $0xbf0] sm:$0xff]
      %v1548 = vld [vmem:[%s3 + $0xbf8] sm:$0xff]
      %v1549 = vld [vmem:[%s3 + $0xc00] sm:$0xff]
      %v1550 = vld [vmem:[%s3 + $0xc08] sm:$0xff]
      %v1551 = vld [vmem:[%s3 + $0xc10] sm:$0xff]
      %v1552 = vld [vmem:[%s3 + $0xc18] sm:$0xff]
      %v1553 = vld [vmem:[%s3 + $0xc20] sm:$0xff]
      %v1554 = vld [vmem:[%s3 + $0xc28] sm:$0xff]
      %v1555 = vld [vmem:[%s3 + $0xc30] sm:$0xff]
      %v1556 = vld [vmem:[%s3 + $0xc38] sm:$0xff]
      %v1557 = vld [vmem:[%s3 + $0xc40] sm:$0xff]
      %v1558 = vld [vmem:[%s3 + $0xc48] sm:$0xff]
      %v1559 = vld [vmem:[%s3 + $0xc50] sm:$0xff]
      %v1560 = vld [vmem:[%s3 + $0xc58] sm:$0xff]
      %v1561 = vld [vmem:[%s3 + $0xc60] sm:$0xff]
      %v1562 = vld [vmem:[%s3 + $0xc68] sm:$0xff]
      %v1563 = vld [vmem:[%s3 + $0xc70] sm:$0xff]
      %v1564 = vld [vmem:[%s3 + $0xc78] sm:$0xff]
      %v1565 = vld [vmem:[%s3 + $0xc80] sm:$0xff]
      %v1566 = vld [vmem:[%s3 + $0xc88] sm:$0xff]
      %v1567 = vld [vmem:[%s3 + $0xc90] sm:$0xff]
      %v1568 = vld [vmem:[%s3 + $0xc98] sm:$0xff]
      %v1569 = vld [vmem:[%s3 + $0xca0] sm:$0xff]
      %v1570 = vld [vmem:[%s3 + $0xca8] sm:$0xff]
      %v1571 = vld [vmem:[%s3 + $0xcb0] sm:$0xff]
      %v1572 = vld [vmem:[%s3 + $0xcb8] sm:$0xff]
      %v1573 = vld [vmem:[%s3 + $0xcc0] sm:$0xff]
      %v1574 = vld [vmem:[%s3 + $0xcc8] sm:$0xff]
      %v1575 = vld [vmem:[%s3 + $0xcd0] sm:$0xff]
      %v1576 = vld [vmem:[%s3 + $0xcd8] sm:$0xff]
      %v1577 = vld [vmem:[%s3 + $0xce0] sm:$0xff]
      %v1578 = vld [vmem:[%s3 + $0xce8] sm:$0xff]
      %v1579 = vld [vmem:[%s3 + $0xcf0] sm:$0xff]
      %v1580 = vld [vmem:[%s3 + $0xcf8] sm:$0xff]
      %v1581 = vld [vmem:[%s3 + $0xd00] sm:$0xff]
      %v1582 = vld [vmem:[%s3 + $0xd08] sm:$0xff]
      %v1583 = vld [vmem:[%s3 + $0xd10] sm:$0xff]
      %v1584 = vld [vmem:[%s3 + $0xd18] sm:$0xff]
      %v1585 = vld [vmem:[%s3 + $0xd20] sm:$0xff]
      %v1586 = vld [vmem:[%s3 + $0xd28] sm:$0xff]
      %v1587 = vld [vmem:[%s3 + $0xd30] sm:$0xff]
      %v1588 = vld [vmem:[%s3 + $0xd38] sm:$0xff]
      %v1589 = vld [vmem:[%s3 + $0xd40] sm:$0xff]
      %v1590 = vld [vmem:[%s3 + $0xd48] sm:$0xff]
      %v1591 = vld [vmem:[%s3 + $0xd50] sm:$0xff]
      %v1592 = vld [vmem:[%s3 + $0xd58] sm:$0xff]
      %v1593 = vld [vmem:[%s3 + $0xd60] sm:$0xff]
      %v1594 = vld [vmem:[%s3 + $0xd68] sm:$0xff]
      %v1595 = vld [vmem:[%s3 + $0xd70] sm:$0xff]
      %v1596 = vld [vmem:[%s3 + $0xd78] sm:$0xff]
      %v1597 = vld [vmem:[%s3 + $0xd80] sm:$0xff]
      %v1598 = vld [vmem:[%s3 + $0xd88] sm:$0xff]
      %v1599 = vld [vmem:[%s3 + $0xd90] sm:$0xff]
      %v1600 = vld [vmem:[%s3 + $0xd98] sm:$0xff]
      %v1601 = vld [vmem:[%s3 + $0xda0] sm:$0xff]
      %v1602 = vld [vmem:[%s3 + $0xda8] sm:$0xff]
      %v1603 = vld [vmem:[%s3 + $0xdb0] sm:$0xff]
      %v1604 = vld [vmem:[%s3 + $0xdb8] sm:$0xff]
      %v1605 = vld [vmem:[%s3 + $0xdc0] sm:$0xff]
      %v1606 = vld [vmem:[%s3 + $0xdc8] sm:$0xff]
      %v1607 = vld [vmem:[%s3 + $0xdd0] sm:$0xff]
      %v1608 = vld [vmem:[%s3 + $0xdd8] sm:$0xff]
      %v1609 = vld [vmem:[%s3 + $0xde0] sm:$0xff]
      %v1610 = vld [vmem:[%s3 + $0xde8] sm:$0xff]
      %v1611 = vld [vmem:[%s3 + $0xdf0] sm:$0xff]
      %v1612 = vld [vmem:[%s3 + $0xdf8] sm:$0xff]
      %v1613 = vld [vmem:[%s3 + $0xe00] sm:$0xff]
      %v1614 = vld [vmem:[%s3 + $0xe08] sm:$0xff]
      %v1615 = vld [vmem:[%s3 + $0xe10] sm:$0xff]
      %v1616 = vld [vmem:[%s3 + $0xe18] sm:$0xff]
      %v1617 = vld [vmem:[%s3 + $0xe20] sm:$0xff]
      %v1618 = vld [vmem:[%s3 + $0xe28] sm:$0xff]
      %v1619 = vld [vmem:[%s3 + $0xe30] sm:$0xff]
      %v1620 = vld [vmem:[%s3 + $0xe38] sm:$0xff]
      %v1621 = vld [vmem:[%s3 + $0xe40] sm:$0xff]
      %v1622 = vld [vmem:[%s3 + $0xe48] sm:$0xff]
      %v1623 = vld [vmem:[%s3 + $0xe50] sm:$0xff]
      %v1624 = vld [vmem:[%s3 + $0xe58] sm:$0xff]
      %v1625 = vld [vmem:[%s3 + $0xe60] sm:$0xff]
      %v1626 = vld [vmem:[%s3 + $0xe68] sm:$0xff]
      %v1627 = vld [vmem:[%s3 + $0xe70] sm:$0xff]
      %v1628 = vld [vmem:[%s3 + $0xe78] sm:$0xff]
      %v1629 = vld [vmem:[%s3 + $0xe80] sm:$0xff]
      %v1630 = vld [vmem:[%s3 + $0xe88] sm:$0xff]
      %v1631 = vld [vmem:[%s3 + $0xe90] sm:$0xff]
      %v1632 = vld [vmem:[%s3 + $0xe98] sm:$0xff]
      %v1633 = vld [vmem:[%s3 + $0xea0] sm:$0xff]
      %v1634 = vld [vmem:[%s3 + $0xea8] sm:$0xff]
      %v1635 = vld [vmem:[%s3 + $0xeb0] sm:$0xff]
      %v1636 = vld [vmem:[%s3 + $0xeb8] sm:$0xff]
      %v1637 = vld [vmem:[%s3 + $0xec0] sm:$0xff]
      %v1638 = vld [vmem:[%s3 + $0xec8] sm:$0xff]
      %v1639 = vld [vmem:[%s3 + $0xed0] sm:$0xff]
      %v1640 = vld [vmem:[%s3 + $0xed8] sm:$0xff]
      %v1641 = vld [vmem:[%s3 + $0xee0] sm:$0xff]
      %v1642 = vld [vmem:[%s3 + $0xee8] sm:$0xff]
      %v1643 = vld [vmem:[%s3 + $0xef0] sm:$0xff]
      %v1644 = vld [vmem:[%s3 + $0xef8] sm:$0xff]
      %v1645 = vld [vmem:[%s3 + $0xf00] sm:$0xff]
      %v1646 = vld [vmem:[%s3 + $0xf08] sm:$0xff]
      %v1647 = vld [vmem:[%s3 + $0xf10] sm:$0xff]
      %v1648 = vld [vmem:[%s3 + $0xf18] sm:$0xff]
      %v1649 = vld [vmem:[%s3 + $0xf20] sm:$0xff]
      %v1650 = vld [vmem:[%s3 + $0xf28] sm:$0xff]
      %v1651 = vld [vmem:[%s3 + $0xf30] sm:$0xff]
      %v1652 = vld [vmem:[%s3 + $0xf38] sm:$0xff]
      %v1653 = vld [vmem:[%s3 + $0xf40] sm:$0xff]
      %v1654 = vld [vmem:[%s3 + $0xf48] sm:$0xff]
      %v1655 = vld [vmem:[%s3 + $0xf50] sm:$0xff]
      %v1656 = vld [vmem:[%s3 + $0xf58] sm:$0xff]
      %v1657 = vld [vmem:[%s3 + $0xf60] sm:$0xff]
      %v1658 = vld [vmem:[%s3 + $0xf68] sm:$0xff]
      %v1659 = vld [vmem:[%s3 + $0xf70] sm:$0xff]
      %v1660 = vld [vmem:[%s3 + $0xf78] sm:$0xff]
      %v1661 = vld [vmem:[%s3 + $0xf80] sm:$0xff]
      %v1662 = vld [vmem:[%s3 + $0xf88] sm:$0xff]
      %v1663 = vld [vmem:[%s3 + $0xf90] sm:$0xff]
      %v1664 = vld [vmem:[%s3 + $0xf98] sm:$0xff]
      %v1665 = vld [vmem:[%s3 + $0xfa0] sm:$0xff]
      %v1666 = vld [vmem:[%s3 + $0xfa8] sm:$0xff]
      %v1667 = vld [vmem:[%s3 + $0xfb0] sm:$0xff]
      %v1668 = vld [vmem:[%s3 + $0xfb8] sm:$0xff]
      %v1669 = vld [vmem:[%s3 + $0xfc0] sm:$0xff]
      %v1670 = vld [vmem:[%s3 + $0xfc8] sm:$0xff]
      %v1671 = vld [vmem:[%s3 + $0xfd0] sm:$0xff]
      %v1672 = vld [vmem:[%s3 + $0xfd8] sm:$0xff]
      %v1673 = vld [vmem:[%s3 + $0xfe0] sm:$0xff]
      %v1674 = vld [vmem:[%s3 + $0xfe8] sm:$0xff]
      %v1675 = vld [vmem:[%s3 + $0xff0] sm:$0xff]
      %v1676 = vld [vmem:[%s3 + $0xff8] sm:$0xff]
      %v1677 = vld [vmem:[%s3 + $0x1000] sm:$0xff]
      %v1678 = vld [vmem:[%s3 + $0x1008] sm:$0xff]
      %v1679 = vld [vmem:[%s3 + $0x1010] sm:$0xff]
      %v1680 = vld [vmem:[%s3 + $0x1018] sm:$0xff]
      %v1681 = vld [vmem:[%s3 + $0x1020] sm:$0xff]
      %v1682 = vld [vmem:[%s3 + $0x1028] sm:$0xff]
      %v1683 = vld [vmem:[%s3 + $0x1030] sm:$0xff]
      %v1684 = vld [vmem:[%s3 + $0x1038] sm:$0xff]
      %v1685 = vld [vmem:[%s3 + $0x1040] sm:$0xff]
      %v1686 = vld [vmem:[%s3 + $0x1048] sm:$0xff]
      %v1687 = vld [vmem:[%s3 + $0x1050] sm:$0xff]
      %v1688 = vld [vmem:[%s3 + $0x1058] sm:$0xff]
      %v1689 = vld [vmem:[%s3 + $0x1060] sm:$0xff]
      %v1690 = vld [vmem:[%s3 + $0x1068] sm:$0xff]
      %v1691 = vld [vmem:[%s3 + $0x1070] sm:$0xff]
      %v1692 = vld [vmem:[%s3 + $0x1078] sm:$0xff]
      %v1693 = vld [vmem:[%s3 + $0x1080] sm:$0xff]
      %v1694 = vld [vmem:[%s3 + $0x1088] sm:$0xff]
      %v1695 = vld [vmem:[%s3 + $0x1090] sm:$0xff]
      %v1696 = vld [vmem:[%s3 + $0x1098] sm:$0xff]
      %v1697 = vld [vmem:[%s3 + $0x10a0] sm:$0xff]
      %v1698 = vld [vmem:[%s3 + $0x10a8] sm:$0xff]
      %v1699 = vld [vmem:[%s3 + $0x10b0] sm:$0xff]
      %v1700 = vld [vmem:[%s3 + $0x10b8] sm:$0xff]
      %v1701 = vld [vmem:[%s3 + $0x10c0] sm:$0xff]
      %v1702 = vld [vmem:[%s3 + $0x10c8] sm:$0xff]
      %v1703 = vld [vmem:[%s3 + $0x10d0] sm:$0xff]
      %v1704 = vld [vmem:[%s3 + $0x10d8] sm:$0xff]
      %v1705 = vld [vmem:[%s3 + $0x10e0] sm:$0xff]
      %v1706 = vld [vmem:[%s3 + $0x10e8] sm:$0xff]
      %v1707 = vld [vmem:[%s3 + $0x10f0] sm:$0xff]
      %v1708 = vld [vmem:[%s3 + $0x10f8] sm:$0xff]
      %v1709 = vld [vmem:[%s3 + $0x1100] sm:$0xff]
      %v1710 = vld [vmem:[%s3 + $0x1108] sm:$0xff]
      %v1711 = vld [vmem:[%s3 + $0x1110] sm:$0xff]
      %v1712 = vld [vmem:[%s3 + $0x1118] sm:$0xff]
      %v1713 = vld [vmem:[%s3 + $0x1120] sm:$0xff]
      %v1714 = vld [vmem:[%s3 + $0x1128] sm:$0xff]
      %v1715 = vld [vmem:[%s3 + $0x1130] sm:$0xff]
      %v1716 = vld [vmem:[%s3 + $0x1138] sm:$0xff]
      %v1717 = vld [vmem:[%s3 + $0x1140] sm:$0xff]
      %v1718 = vld [vmem:[%s3 + $0x1148] sm:$0xff]
      %v1719 = vld [vmem:[%s3 + $0x1150] sm:$0xff]
      %v1720 = vld [vmem:[%s3 + $0x1158] sm:$0xff]
      %v1721 = vld [vmem:[%s3 + $0x1160] sm:$0xff]
      %v1722 = vld [vmem:[%s3 + $0x1168] sm:$0xff]
      %v1723 = vld [vmem:[%s3 + $0x1170] sm:$0xff]
      %v1724 = vld [vmem:[%s3 + $0x1178] sm:$0xff]
      %v1725 = vld [vmem:[%s3 + $0x1180] sm:$0xff]
      %v1726 = vld [vmem:[%s3 + $0x1188] sm:$0xff]
      %v1727 = vld [vmem:[%s3 + $0x1190] sm:$0xff]
      %v1728 = vld [vmem:[%s3 + $0x1198] sm:$0xff]
      %v1729 = vld [vmem:[%s3 + $0x11a0] sm:$0xff]
      %v1730 = vld [vmem:[%s3 + $0x11a8] sm:$0xff]
      %v1731 = vld [vmem:[%s3 + $0x11b0] sm:$0xff]
      %v1732 = vld [vmem:[%s3 + $0x11b8] sm:$0xff]
      %v1733 = vld [vmem:[%s3 + $0x11c0] sm:$0xff]
      %v1734 = vld [vmem:[%s3 + $0x11c8] sm:$0xff]
      %v1735 = vld [vmem:[%s3 + $0x11d0] sm:$0xff]
      %v1736 = vld [vmem:[%s3 + $0x11d8] sm:$0xff]
      %v1737 = vld [vmem:[%s3 + $0x11e0] sm:$0xff]
      %v1738 = vld [vmem:[%s3 + $0x11e8] sm:$0xff]
      %v1739 = vld [vmem:[%s3 + $0x11f0] sm:$0xff]
      %v1740 = vld [vmem:[%s3 + $0x11f8] sm:$0xff]
      %1741 = vmatpush.msra.mxu0 %v1300
      %1742 = vmatpush.msra.mxu0 %v1291
      %1743 = vmatpush.msra.mxu0 %v1282
      %1744 = vmatpush.msra.mxu0 %v1273
      %1745 = vmatpush.msra.mxu0 %v1264
      %1746 = vmatpush.msra.mxu0 %v1255
      %1747 = vmatpush.msra.mxu0 %v1246
      %1748 = vmatpush.msra.mxu0 %v1237
      %1749 = vmatpush.msra.mxu0 %v1228
      %1750 = vmatpush.msra.mxu0 %v1219
      %1751 = vmatpush.msra.mxu0 %v1210
      %1752 = vmatpush.msra.mxu0 %v1201
      %1753 = vmatpush.msra.mxu0 %v1192
      %1754 = vmatpush.msra.mxu0 %v1183
      %1755 = vmatpush.msra.mxu0 %v1174
      %1756 = vmatpush.msra.mxu0 %v1165
      %1757 = vmatmul.f32.gmra.mxu0 %v1149
      %v1758 = vpop.f32.mrf.mxu0
      %v1759 = vadd.f32 0.0, %v1758
      %1760 = vmatmul.f32.gmra.mxu0 %v1153
      %v1761 = vpop.f32.mrf.mxu0
      %v1762 = vadd.f32 0.0, %v1761
      %1763 = vmatmul.f32.gmra.mxu0 %v1157
      %v1764 = vpop.f32.mrf.mxu0
      %v1765 = vadd.f32 0.0, %v1764
      %1766 = vmatmul.f32.gmra.mxu0 %v1161
      %v1767 = vpop.f32.mrf.mxu0
      %v1768 = vadd.f32 0.0, %v1767
      %1769 = vdwg.mxu0
      %1770 = vmatpush.msra.mxu0 %v1444
      %1771 = vmatpush.msra.mxu0 %v1435
      %1772 = vmatpush.msra.mxu0 %v1426
      %1773 = vmatpush.msra.mxu0 %v1417
      %1774 = vmatpush.msra.mxu0 %v1408
      %1775 = vmatpush.msra.mxu0 %v1399
      %1776 = vmatpush.msra.mxu0 %v1390
      %1777 = vmatpush.msra.mxu0 %v1381
      %1778 = vmatpush.msra.mxu0 %v1372
      %1779 = vmatpush.msra.mxu0 %v1363
      %1780 = vmatpush.msra.mxu0 %v1354
      %1781 = vmatpush.msra.mxu0 %v1345
      %1782 = vmatpush.msra.mxu0 %v1336
      %1783 = vmatpush.msra.mxu0 %v1327
      %1784 = vmatpush.msra.mxu0 %v1318
      %1785 = vmatpush.msra.mxu0 %v1309
      %1786 = vmatmul.f32.gmra.mxu0 %v1150
      %v1787 = vpop.f32.mrf.mxu0
      %v1788 = vadd.f32 %v1759, %v1787
      %1789 = vmatmul.f32.gmra.mxu0 %v1154
      %v1790 = vpop.f32.mrf.mxu0
      %v1791 = vadd.f32 %v1762, %v1790
      %1792 = vmatmul.f32.gmra.mxu0 %v1158
      %v1793 = vpop.f32.mrf.mxu0
      %v1794 = vadd.f32 %v1765, %v1793
      %1795 = vmatmul.f32.gmra.mxu0 %v1162
      %v1796 = vpop.f32.mrf.mxu0
      %v1797 = vadd.f32 %v1768, %v1796
      %1798 = vdwg.mxu0
      %1799 = vmatpush.msra.mxu0 %v1588
      %1800 = vmatpush.msra.mxu0 %v1579
      %1801 = vmatpush.msra.mxu0 %v1570
      %1802 = vmatpush.msra.mxu0 %v1561
      %1803 = vmatpush.msra.mxu0 %v1552
      %1804 = vmatpush.msra.mxu0 %v1543
      %1805 = vmatpush.msra.mxu0 %v1534
      %1806 = vmatpush.msra.mxu0 %v1525
      %1807 = vmatpush.msra.mxu0 %v1516
      %1808 = vmatpush.msra.mxu0 %v1507
      %1809 = vmatpush.msra.mxu0 %v1498
      %1810 = vmatpush.msra.mxu0 %v1489
      %1811 = vmatpush.msra.mxu0 %v1480
      %1812 = vmatpush.msra.mxu0 %v1471
      %1813 = vmatpush.msra.mxu0 %v1462
      %1814 = vmatpush.msra.mxu0 %v1453
      %1815 = vmatmul.f32.gmra.mxu0 %v1151
      %v1816 = vpop.f32.mrf.mxu0
      %v1817 = vadd.f32 %v1788, %v1816
      %1818 = vmatmul.f32.gmra.mxu0 %v1155
      %v1819 = vpop.f32.mrf.mxu0
      %v1820 = vadd.f32 %v1791, %v1819
      %1821 = vmatmul.f32.gmra.mxu0 %v1159
      %v1822 = vpop.f32.mrf.mxu0
      %v1823 = vadd.f32 %v1794, %v1822
      %1824 = vmatmul.f32.gmra.mxu0 %v1163
      %v1825 = vpop.f32.mrf.mxu0
      %v1826 = vadd.f32 %v1797, %v1825
      %1827 = vdwg.mxu0
      %1828 = vmatpush.msra.mxu0 %v1732
      %1829 = vmatpush.msra.mxu0 %v1723
      %1830 = vmatpush.msra.mxu0 %v1714
      %1831 = vmatpush.msra.mxu0 %v1705
      %1832 = vmatpush.msra.mxu0 %v1696
      %1833 = vmatpush.msra.mxu0 %v1687
      %1834 = vmatpush.msra.mxu0 %v1678
      %1835 = vmatpush.msra.mxu0 %v1669
      %1836 = vmatpush.msra.mxu0 %v1660
      %1837 = vmatpush.msra.mxu0 %v1651
      %1838 = vmatpush.msra.mxu0 %v1642
      %1839 = vmatpush.msra.mxu0 %v1633
      %1840 = vmatpush.msra.mxu0 %v1624
      %1841 = vmatpush.msra.mxu0 %v1615
      %1842 = vmatpush.msra.mxu0 %v1606
      %1843 = vmatpush.msra.mxu0 %v1597
      %1844 = vmatmul.f32.gmra.mxu0 %v1152
      %v1845 = vpop.f32.mrf.mxu0
      %v1846 = vadd.f32 %v1817, %v1845
      %1847 = vmatmul.f32.gmra.mxu0 %v1156
      %v1848 = vpop.f32.mrf.mxu0
      %v1849 = vadd.f32 %v1820, %v1848
      %1850 = vmatmul.f32.gmra.mxu0 %v1160
      %v1851 = vpop.f32.mrf.mxu0
      %v1852 = vadd.f32 %v1823, %v1851
      %1853 = vmatmul.f32.gmra.mxu0 %v1164
      %v1854 = vpop.f32.mrf.mxu0
      %v1855 = vadd.f32 %v1826, %v1854
      %1856 = vdwg.mxu0
      %1857 = vmatpush.msra.mxu0 %v1301
      %1858 = vmatpush.msra.mxu0 %v1292
      %1859 = vmatpush.msra.mxu0 %v1283
      %1860 = vmatpush.msra.mxu0 %v1274
      %1861 = vmatpush.msra.mxu0 %v1265
      %1862 = vmatpush.msra.mxu0 %v1256
      %1863 = vmatpush.msra.mxu0 %v1247
      %1864 = vmatpush.msra.mxu0 %v1238
      %1865 = vmatpush.msra.mxu0 %v1229
      %1866 = vmatpush.msra.mxu0 %v1220
      %1867 = vmatpush.msra.mxu0 %v1211
      %1868 = vmatpush.msra.mxu0 %v1202
      %1869 = vmatpush.msra.mxu0 %v1193
      %1870 = vmatpush.msra.mxu0 %v1184
      %1871 = vmatpush.msra.mxu0 %v1175
      %1872 = vmatpush.msra.mxu0 %v1166
      %1873 = vmatmul.f32.gmra.mxu0 %v1149
      %v1874 = vpop.f32.mrf.mxu0
      %v1875 = vadd.f32 0.0, %v1874
      %1876 = vmatmul.f32.gmra.mxu0 %v1153
      %v1877 = vpop.f32.mrf.mxu0
      %v1878 = vadd.f32 0.0, %v1877
      %1879 = vmatmul.f32.gmra.mxu0 %v1157
      %v1880 = vpop.f32.mrf.mxu0
      %v1881 = vadd.f32 0.0, %v1880
      %1882 = vmatmul.f32.gmra.mxu0 %v1161
      %v1883 = vpop.f32.mrf.mxu0
      %v1884 = vadd.f32 0.0, %v1883
      %1885 = vdwg.mxu0
      %1886 = vmatpush.msra.mxu0 %v1445
      %1887 = vmatpush.msra.mxu0 %v1436
      %1888 = vmatpush.msra.mxu0 %v1427
      %1889 = vmatpush.msra.mxu0 %v1418
      %1890 = vmatpush.msra.mxu0 %v1409
      %1891 = vmatpush.msra.mxu0 %v1400
      %1892 = vmatpush.msra.mxu0 %v1391
      %1893 = vmatpush.msra.mxu0 %v1382
      %1894 = vmatpush.msra.mxu0 %v1373
      %1895 = vmatpush.msra.mxu0 %v1364
      %1896 = vmatpush.msra.mxu0 %v1355
      %1897 = vmatpush.msra.mxu0 %v1346
      %1898 = vmatpush.msra.mxu0 %v1337
      %1899 = vmatpush.msra.mxu0 %v1328
      %1900 = vmatpush.msra.mxu0 %v1319
      %1901 = vmatpush.msra.mxu0 %v1310
      %1902 = vmatmul.f32.gmra.mxu0 %v1150
      %v1903 = vpop.f32.mrf.mxu0
      %v1904 = vadd.f32 %v1875, %v1903
      %1905 = vmatmul.f32.gmra.mxu0 %v1154
      %v1906 = vpop.f32.mrf.mxu0
      %v1907 = vadd.f32 %v1878, %v1906
      %1908 = vmatmul.f32.gmra.mxu0 %v1158
      %v1909 = vpop.f32.mrf.mxu0
      %v1910 = vadd.f32 %v1881, %v1909
      %1911 = vmatmul.f32.gmra.mxu0 %v1162
      %v1912 = vpop.f32.mrf.mxu0
      %v1913 = vadd.f32 %v1884, %v1912
      %1914 = vdwg.mxu0
      %1915 = vmatpush.msra.mxu0 %v1589
      %1916 = vmatpush.msra.mxu0 %v1580
      %1917 = vmatpush.msra.mxu0 %v1571
      %1918 = vmatpush.msra.mxu0 %v1562
      %1919 = vmatpush.msra.mxu0 %v1553
      %1920 = vmatpush.msra.mxu0 %v1544
      %1921 = vmatpush.msra.mxu0 %v1535
      %1922 = vmatpush.msra.mxu0 %v1526
      %1923 = vmatpush.msra.mxu0 %v1517
      %1924 = vmatpush.msra.mxu0 %v1508
      %1925 = vmatpush.msra.mxu0 %v1499
      %1926 = vmatpush.msra.mxu0 %v1490
      %1927 = vmatpush.msra.mxu0 %v1481
      %1928 = vmatpush.msra.mxu0 %v1472
      %1929 = vmatpush.msra.mxu0 %v1463
      %1930 = vmatpush.msra.mxu0 %v1454
      %1931 = vmatmul.f32.gmra.mxu0 %v1151
      %v1932 = vpop.f32.mrf.mxu0
      %v1933 = vadd.f32 %v1904, %v1932
      %1934 = vmatmul.f32.gmra.mxu0 %v1155
      %v1935 = vpop.f32.mrf.mxu0
      %v1936 = vadd.f32 %v1907, %v1935
      %1937 = vmatmul.f32.gmra.mxu0 %v1159
      %v1938 = vpop.f32.mrf.mxu0
      %v1939 = vadd.f32 %v1910, %v1938
      %1940 = vmatmul.f32.gmra.mxu0 %v1163
      %v1941 = vpop.f32.mrf.mxu0
      %v1942 = vadd.f32 %v1913, %v1941
      %1943 = vdwg.mxu0
      %1944 = vmatpush.msra.mxu0 %v1733
      %1945 = vmatpush.msra.mxu0 %v1724
      %1946 = vmatpush.msra.mxu0 %v1715
      %1947 = vmatpush.msra.mxu0 %v1706
      %1948 = vmatpush.msra.mxu0 %v1697
      %1949 = vmatpush.msra.mxu0 %v1688
      %1950 = vmatpush.msra.mxu0 %v1679
      %1951 = vmatpush.msra.mxu0 %v1670
      %1952 = vmatpush.msra.mxu0 %v1661
      %1953 = vmatpush.msra.mxu0 %v1652
      %1954 = vmatpush.msra.mxu0 %v1643
      %1955 = vmatpush.msra.mxu0 %v1634
      %1956 = vmatpush.msra.mxu0 %v1625
      %1957 = vmatpush.msra.mxu0 %v1616
      %1958 = vmatpush.msra.mxu0 %v1607
      %1959 = vmatpush.msra.mxu0 %v1598
      %1960 = vmatmul.f32.gmra.mxu0 %v1152
      %v1961 = vpop.f32.mrf.mxu0
      %v1962 = vadd.f32 %v1933, %v1961
      %1963 = vmatmul.f32.gmra.mxu0 %v1156
      %v1964 = vpop.f32.mrf.mxu0
      %v1965 = vadd.f32 %v1936, %v1964
      %1966 = vmatmul.f32.gmra.mxu0 %v1160
      %v1967 = vpop.f32.mrf.mxu0
      %v1968 = vadd.f32 %v1939, %v1967
      %1969 = vmatmul.f32.gmra.mxu0 %v1164
      %v1970 = vpop.f32.mrf.mxu0
      %v1971 = vadd.f32 %v1942, %v1970
      %1972 = vdwg.mxu0
      %1973 = vmatpush.msra.mxu0 %v1302
      %1974 = vmatpush.msra.mxu0 %v1293
      %1975 = vmatpush.msra.mxu0 %v1284
      %1976 = vmatpush.msra.mxu0 %v1275
      %1977 = vmatpush.msra.mxu0 %v1266
      %1978 = vmatpush.msra.mxu0 %v1257
      %1979 = vmatpush.msra.mxu0 %v1248
      %1980 = vmatpush.msra.mxu0 %v1239
      %1981 = vmatpush.msra.mxu0 %v1230
      %1982 = vmatpush.msra.mxu0 %v1221
      %1983 = vmatpush.msra.mxu0 %v1212
      %1984 = vmatpush.msra.mxu0 %v1203
      %1985 = vmatpush.msra.mxu0 %v1194
      %1986 = vmatpush.msra.mxu0 %v1185
      %1987 = vmatpush.msra.mxu0 %v1176
      %1988 = vmatpush.msra.mxu0 %v1167
      %1989 = vmatmul.f32.gmra.mxu0 %v1149
      %v1990 = vpop.f32.mrf.mxu0
      %v1991 = vadd.f32 0.0, %v1990
      %1992 = vmatmul.f32.gmra.mxu0 %v1153
      %v1993 = vpop.f32.mrf.mxu0
      %v1994 = vadd.f32 0.0, %v1993
      %1995 = vmatmul.f32.gmra.mxu0 %v1157
      %v1996 = vpop.f32.mrf.mxu0
      %v1997 = vadd.f32 0.0, %v1996
      %1998 = vmatmul.f32.gmra.mxu0 %v1161
      %v1999 = vpop.f32.mrf.mxu0
      %v2000 = vadd.f32 0.0, %v1999
      %2001 = vdwg.mxu0
      %2002 = vmatpush.msra.mxu0 %v1446
      %2003 = vmatpush.msra.mxu0 %v1437
      %2004 = vmatpush.msra.mxu0 %v1428
      %2005 = vmatpush.msra.mxu0 %v1419
      %2006 = vmatpush.msra.mxu0 %v1410
      %2007 = vmatpush.msra.mxu0 %v1401
      %2008 = vmatpush.msra.mxu0 %v1392
      %2009 = vmatpush.msra.mxu0 %v1383
      %2010 = vmatpush.msra.mxu0 %v1374
      %2011 = vmatpush.msra.mxu0 %v1365
      %2012 = vmatpush.msra.mxu0 %v1356
      %2013 = vmatpush.msra.mxu0 %v1347
      %2014 = vmatpush.msra.mxu0 %v1338
      %2015 = vmatpush.msra.mxu0 %v1329
      %2016 = vmatpush.msra.mxu0 %v1320
      %2017 = vmatpush.msra.mxu0 %v1311
      %2018 = vmatmul.f32.gmra.mxu0 %v1150
      %v2019 = vpop.f32.mrf.mxu0
      %v2020 = vadd.f32 %v1991, %v2019
      %2021 = vmatmul.f32.gmra.mxu0 %v1154
      %v2022 = vpop.f32.mrf.mxu0
      %v2023 = vadd.f32 %v1994, %v2022
      %2024 = vmatmul.f32.gmra.mxu0 %v1158
      %v2025 = vpop.f32.mrf.mxu0
      %v2026 = vadd.f32 %v1997, %v2025
      %2027 = vmatmul.f32.gmra.mxu0 %v1162
      %v2028 = vpop.f32.mrf.mxu0
      %v2029 = vadd.f32 %v2000, %v2028
      %2030 = vdwg.mxu0
      %2031 = vmatpush.msra.mxu0 %v1590
      %2032 = vmatpush.msra.mxu0 %v1581
      %2033 = vmatpush.msra.mxu0 %v1572
      %2034 = vmatpush.msra.mxu0 %v1563
      %2035 = vmatpush.msra.mxu0 %v1554
      %2036 = vmatpush.msra.mxu0 %v1545
      %2037 = vmatpush.msra.mxu0 %v1536
      %2038 = vmatpush.msra.mxu0 %v1527
      %2039 = vmatpush.msra.mxu0 %v1518
      %2040 = vmatpush.msra.mxu0 %v1509
      %2041 = vmatpush.msra.mxu0 %v1500
      %2042 = vmatpush.msra.mxu0 %v1491
      %2043 = vmatpush.msra.mxu0 %v1482
      %2044 = vmatpush.msra.mxu0 %v1473
      %2045 = vmatpush.msra.mxu0 %v1464
      %2046 = vmatpush.msra.mxu0 %v1455
      %2047 = vmatmul.f32.gmra.mxu0 %v1151
      %v2048 = vpop.f32.mrf.mxu0
      %v2049 = vadd.f32 %v2020, %v2048
      %2050 = vmatmul.f32.gmra.mxu0 %v1155
      %v2051 = vpop.f32.mrf.mxu0
      %v2052 = vadd.f32 %v2023, %v2051
      %2053 = vmatmul.f32.gmra.mxu0 %v1159
      %v2054 = vpop.f32.mrf.mxu0
      %v2055 = vadd.f32 %v2026, %v2054
      %2056 = vmatmul.f32.gmra.mxu0 %v1163
      %v2057 = vpop.f32.mrf.mxu0
      %v2058 = vadd.f32 %v2029, %v2057
      %2059 = vdwg.mxu0
      %2060 = vmatpush.msra.mxu0 %v1734
      %2061 = vmatpush.msra.mxu0 %v1725
      %2062 = vmatpush.msra.mxu0 %v1716
      %2063 = vmatpush.msra.mxu0 %v1707
      %2064 = vmatpush.msra.mxu0 %v1698
      %2065 = vmatpush.msra.mxu0 %v1689
      %2066 = vmatpush.msra.mxu0 %v1680
      %2067 = vmatpush.msra.mxu0 %v1671
      %2068 = vmatpush.msra.mxu0 %v1662
      %2069 = vmatpush.msra.mxu0 %v1653
      %2070 = vmatpush.msra.mxu0 %v1644
      %2071 = vmatpush.msra.mxu0 %v1635
      %2072 = vmatpush.msra.mxu0 %v1626
      %2073 = vmatpush.msra.mxu0 %v1617
      %2074 = vmatpush.msra.mxu0 %v1608
      %2075 = vmatpush.msra.mxu0 %v1599
      %2076 = vmatmul.f32.gmra.mxu0 %v1152
      %v2077 = vpop.f32.mrf.mxu0
      %v2078 = vadd.f32 %v2049, %v2077
      %2079 = vmatmul.f32.gmra.mxu0 %v1156
      %v2080 = vpop.f32.mrf.mxu0
      %v2081 = vadd.f32 %v2052, %v2080
      %2082 = vmatmul.f32.gmra.mxu0 %v1160
      %v2083 = vpop.f32.mrf.mxu0
      %v2084 = vadd.f32 %v2055, %v2083
      %2085 = vmatmul.f32.gmra.mxu0 %v1164
      %v2086 = vpop.f32.mrf.mxu0
      %v2087 = vadd.f32 %v2058, %v2086
      %2088 = vdwg.mxu0
      %2089 = vmatpush.msra.mxu0 %v1303
      %2090 = vmatpush.msra.mxu0 %v1294
      %2091 = vmatpush.msra.mxu0 %v1285
      %2092 = vmatpush.msra.mxu0 %v1276
      %2093 = vmatpush.msra.mxu0 %v1267
      %2094 = vmatpush.msra.mxu0 %v1258
      %2095 = vmatpush.msra.mxu0 %v1249
      %2096 = vmatpush.msra.mxu0 %v1240
      %2097 = vmatpush.msra.mxu0 %v1231
      %2098 = vmatpush.msra.mxu0 %v1222
      %2099 = vmatpush.msra.mxu0 %v1213
      %2100 = vmatpush.msra.mxu0 %v1204
      %2101 = vmatpush.msra.mxu0 %v1195
      %2102 = vmatpush.msra.mxu0 %v1186
      %2103 = vmatpush.msra.mxu0 %v1177
      %2104 = vmatpush.msra.mxu0 %v1168
      %2105 = vmatmul.f32.gmra.mxu0 %v1149
      %v2106 = vpop.f32.mrf.mxu0
      %v2107 = vadd.f32 0.0, %v2106
      %2108 = vmatmul.f32.gmra.mxu0 %v1153
      %v2109 = vpop.f32.mrf.mxu0
      %v2110 = vadd.f32 0.0, %v2109
      %2111 = vmatmul.f32.gmra.mxu0 %v1157
      %v2112 = vpop.f32.mrf.mxu0
      %v2113 = vadd.f32 0.0, %v2112
      %2114 = vmatmul.f32.gmra.mxu0 %v1161
      %v2115 = vpop.f32.mrf.mxu0
      %v2116 = vadd.f32 0.0, %v2115
      %2117 = vdwg.mxu0
      %2118 = vmatpush.msra.mxu0 %v1447
      %2119 = vmatpush.msra.mxu0 %v1438
      %2120 = vmatpush.msra.mxu0 %v1429
      %2121 = vmatpush.msra.mxu0 %v1420
      %2122 = vmatpush.msra.mxu0 %v1411
      %2123 = vmatpush.msra.mxu0 %v1402
      %2124 = vmatpush.msra.mxu0 %v1393
      %2125 = vmatpush.msra.mxu0 %v1384
      %2126 = vmatpush.msra.mxu0 %v1375
      %2127 = vmatpush.msra.mxu0 %v1366
      %2128 = vmatpush.msra.mxu0 %v1357
      %2129 = vmatpush.msra.mxu0 %v1348
      %2130 = vmatpush.msra.mxu0 %v1339
      %2131 = vmatpush.msra.mxu0 %v1330
      %2132 = vmatpush.msra.mxu0 %v1321
      %2133 = vmatpush.msra.mxu0 %v1312
      %2134 = vmatmul.f32.gmra.mxu0 %v1150
      %v2135 = vpop.f32.mrf.mxu0
      %v2136 = vadd.f32 %v2107, %v2135
      %2137 = vmatmul.f32.gmra.mxu0 %v1154
      %v2138 = vpop.f32.mrf.mxu0
      %v2139 = vadd.f32 %v2110, %v2138
      %2140 = vmatmul.f32.gmra.mxu0 %v1158
      %v2141 = vpop.f32.mrf.mxu0
      %v2142 = vadd.f32 %v2113, %v2141
      %2143 = vmatmul.f32.gmra.mxu0 %v1162
      %v2144 = vpop.f32.mrf.mxu0
      %v2145 = vadd.f32 %v2116, %v2144
      %2146 = vdwg.mxu0
      %2147 = vmatpush.msra.mxu0 %v1591
      %2148 = vmatpush.msra.mxu0 %v1582
      %2149 = vmatpush.msra.mxu0 %v1573
      %2150 = vmatpush.msra.mxu0 %v1564
      %2151 = vmatpush.msra.mxu0 %v1555
      %2152 = vmatpush.msra.mxu0 %v1546
      %2153 = vmatpush.msra.mxu0 %v1537
      %2154 = vmatpush.msra.mxu0 %v1528
      %2155 = vmatpush.msra.mxu0 %v1519
      %2156 = vmatpush.msra.mxu0 %v1510
      %2157 = vmatpush.msra.mxu0 %v1501
      %2158 = vmatpush.msra.mxu0 %v1492
      %2159 = vmatpush.msra.mxu0 %v1483
      %2160 = vmatpush.msra.mxu0 %v1474
      %2161 = vmatpush.msra.mxu0 %v1465
      %2162 = vmatpush.msra.mxu0 %v1456
      %2163 = vmatmul.f32.gmra.mxu0 %v1151
      %v2164 = vpop.f32.mrf.mxu0
      %v2165 = vadd.f32 %v2136, %v2164
      %2166 = vmatmul.f32.gmra.mxu0 %v1155
      %v2167 = vpop.f32.mrf.mxu0
      %v2168 = vadd.f32 %v2139, %v2167
      %2169 = vmatmul.f32.gmra.mxu0 %v1159
      %v2170 = vpop.f32.mrf.mxu0
      %v2171 = vadd.f32 %v2142, %v2170
      %2172 = vmatmul.f32.gmra.mxu0 %v1163
      %v2173 = vpop.f32.mrf.mxu0
      %v2174 = vadd.f32 %v2145, %v2173
      %2175 = vdwg.mxu0
      %2176 = vmatpush.msra.mxu0 %v1735
      %2177 = vmatpush.msra.mxu0 %v1726
      %2178 = vmatpush.msra.mxu0 %v1717
      %2179 = vmatpush.msra.mxu0 %v1708
      %2180 = vmatpush.msra.mxu0 %v1699
      %2181 = vmatpush.msra.mxu0 %v1690
      %2182 = vmatpush.msra.mxu0 %v1681
      %2183 = vmatpush.msra.mxu0 %v1672
      %2184 = vmatpush.msra.mxu0 %v1663
      %2185 = vmatpush.msra.mxu0 %v1654
      %2186 = vmatpush.msra.mxu0 %v1645
      %2187 = vmatpush.msra.mxu0 %v1636
      %2188 = vmatpush.msra.mxu0 %v1627
      %2189 = vmatpush.msra.mxu0 %v1618
      %2190 = vmatpush.msra.mxu0 %v1609
      %2191 = vmatpush.msra.mxu0 %v1600
      %2192 = vmatmul.f32.gmra.mxu0 %v1152
      %v2193 = vpop.f32.mrf.mxu0
      %v2194 = vadd.f32 %v2165, %v2193
      %2195 = vmatmul.f32.gmra.mxu0 %v1156
      %v2196 = vpop.f32.mrf.mxu0
      %v2197 = vadd.f32 %v2168, %v2196
      %2198 = vmatmul.f32.gmra.mxu0 %v1160
      %v2199 = vpop.f32.mrf.mxu0
      %v2200 = vadd.f32 %v2171, %v2199
      %2201 = vmatmul.f32.gmra.mxu0 %v1164
      %v2202 = vpop.f32.mrf.mxu0
      %v2203 = vadd.f32 %v2174, %v2202
      %2204 = vdwg.mxu0
      %2205 = vmatpush.msra.mxu0 %v1304
      %2206 = vmatpush.msra.mxu0 %v1295
      %2207 = vmatpush.msra.mxu0 %v1286
      %2208 = vmatpush.msra.mxu0 %v1277
      %2209 = vmatpush.msra.mxu0 %v1268
      %2210 = vmatpush.msra.mxu0 %v1259
      %2211 = vmatpush.msra.mxu0 %v1250
      %2212 = vmatpush.msra.mxu0 %v1241
      %2213 = vmatpush.msra.mxu0 %v1232
      %2214 = vmatpush.msra.mxu0 %v1223
      %2215 = vmatpush.msra.mxu0 %v1214
      %2216 = vmatpush.msra.mxu0 %v1205
      %2217 = vmatpush.msra.mxu0 %v1196
      %2218 = vmatpush.msra.mxu0 %v1187
      %2219 = vmatpush.msra.mxu0 %v1178
      %2220 = vmatpush.msra.mxu0 %v1169
      %2221 = vmatmul.f32.gmra.mxu0 %v1149
      %v2222 = vpop.f32.mrf.mxu0
      %v2223 = vadd.f32 0.0, %v2222
      %2224 = vmatmul.f32.gmra.mxu0 %v1153
      %v2225 = vpop.f32.mrf.mxu0
      %v2226 = vadd.f32 0.0, %v2225
      %2227 = vmatmul.f32.gmra.mxu0 %v1157
      %v2228 = vpop.f32.mrf.mxu0
      %v2229 = vadd.f32 0.0, %v2228
      %2230 = vmatmul.f32.gmra.mxu0 %v1161
      %v2231 = vpop.f32.mrf.mxu0
      %v2232 = vadd.f32 0.0, %v2231
      %2233 = vdwg.mxu0
      %2234 = vmatpush.msra.mxu0 %v1448
      %2235 = vmatpush.msra.mxu0 %v1439
      %2236 = vmatpush.msra.mxu0 %v1430
      %2237 = vmatpush.msra.mxu0 %v1421
      %2238 = vmatpush.msra.mxu0 %v1412
      %2239 = vmatpush.msra.mxu0 %v1403
      %2240 = vmatpush.msra.mxu0 %v1394
      %2241 = vmatpush.msra.mxu0 %v1385
      %2242 = vmatpush.msra.mxu0 %v1376
      %2243 = vmatpush.msra.mxu0 %v1367
      %2244 = vmatpush.msra.mxu0 %v1358
      %2245 = vmatpush.msra.mxu0 %v1349
      %2246 = vmatpush.msra.mxu0 %v1340
      %2247 = vmatpush.msra.mxu0 %v1331
      %2248 = vmatpush.msra.mxu0 %v1322
      %2249 = vmatpush.msra.mxu0 %v1313
      %2250 = vmatmul.f32.gmra.mxu0 %v1150
      %v2251 = vpop.f32.mrf.mxu0
      %v2252 = vadd.f32 %v2223, %v2251
      %2253 = vmatmul.f32.gmra.mxu0 %v1154
      %v2254 = vpop.f32.mrf.mxu0
      %v2255 = vadd.f32 %v2226, %v2254
      %2256 = vmatmul.f32.gmra.mxu0 %v1158
      %v2257 = vpop.f32.mrf.mxu0
      %v2258 = vadd.f32 %v2229, %v2257
      %2259 = vmatmul.f32.gmra.mxu0 %v1162
      %v2260 = vpop.f32.mrf.mxu0
      %v2261 = vadd.f32 %v2232, %v2260
      %2262 = vdwg.mxu0
      %2263 = vmatpush.msra.mxu0 %v1592
      %2264 = vmatpush.msra.mxu0 %v1583
      %2265 = vmatpush.msra.mxu0 %v1574
      %2266 = vmatpush.msra.mxu0 %v1565
      %2267 = vmatpush.msra.mxu0 %v1556
      %2268 = vmatpush.msra.mxu0 %v1547
      %2269 = vmatpush.msra.mxu0 %v1538
      %2270 = vmatpush.msra.mxu0 %v1529
      %2271 = vmatpush.msra.mxu0 %v1520
      %2272 = vmatpush.msra.mxu0 %v1511
      %2273 = vmatpush.msra.mxu0 %v1502
      %2274 = vmatpush.msra.mxu0 %v1493
      %2275 = vmatpush.msra.mxu0 %v1484
      %2276 = vmatpush.msra.mxu0 %v1475
      %2277 = vmatpush.msra.mxu0 %v1466
      %2278 = vmatpush.msra.mxu0 %v1457
      %2279 = vmatmul.f32.gmra.mxu0 %v1151
      %v2280 = vpop.f32.mrf.mxu0
      %v2281 = vadd.f32 %v2252, %v2280
      %2282 = vmatmul.f32.gmra.mxu0 %v1155
      %v2283 = vpop.f32.mrf.mxu0
      %v2284 = vadd.f32 %v2255, %v2283
      %2285 = vmatmul.f32.gmra.mxu0 %v1159
      %v2286 = vpop.f32.mrf.mxu0
      %v2287 = vadd.f32 %v2258, %v2286
      %2288 = vmatmul.f32.gmra.mxu0 %v1163
      %v2289 = vpop.f32.mrf.mxu0
      %v2290 = vadd.f32 %v2261, %v2289
      %2291 = vdwg.mxu0
      %2292 = vmatpush.msra.mxu0 %v1736
      %2293 = vmatpush.msra.mxu0 %v1727
      %2294 = vmatpush.msra.mxu0 %v1718
      %2295 = vmatpush.msra.mxu0 %v1709
      %2296 = vmatpush.msra.mxu0 %v1700
      %2297 = vmatpush.msra.mxu0 %v1691
      %2298 = vmatpush.msra.mxu0 %v1682
      %2299 = vmatpush.msra.mxu0 %v1673
      %2300 = vmatpush.msra.mxu0 %v1664
      %2301 = vmatpush.msra.mxu0 %v1655
      %2302 = vmatpush.msra.mxu0 %v1646
      %2303 = vmatpush.msra.mxu0 %v1637
      %2304 = vmatpush.msra.mxu0 %v1628
      %2305 = vmatpush.msra.mxu0 %v1619
      %2306 = vmatpush.msra.mxu0 %v1610
      %2307 = vmatpush.msra.mxu0 %v1601
      %2308 = vmatmul.f32.gmra.mxu0 %v1152
      %v2309 = vpop.f32.mrf.mxu0
      %v2310 = vadd.f32 %v2281, %v2309
      %2311 = vmatmul.f32.gmra.mxu0 %v1156
      %v2312 = vpop.f32.mrf.mxu0
      %v2313 = vadd.f32 %v2284, %v2312
      %2314 = vmatmul.f32.gmra.mxu0 %v1160
      %v2315 = vpop.f32.mrf.mxu0
      %v2316 = vadd.f32 %v2287, %v2315
      %2317 = vmatmul.f32.gmra.mxu0 %v1164
      %v2318 = vpop.f32.mrf.mxu0
      %v2319 = vadd.f32 %v2290, %v2318
      %2320 = vdwg.mxu0
      %2321 = vmatpush.msra.mxu0 %v1305
      %2322 = vmatpush.msra.mxu0 %v1296
      %2323 = vmatpush.msra.mxu0 %v1287
      %2324 = vmatpush.msra.mxu0 %v1278
      %2325 = vmatpush.msra.mxu0 %v1269
      %2326 = vmatpush.msra.mxu0 %v1260
      %2327 = vmatpush.msra.mxu0 %v1251
      %2328 = vmatpush.msra.mxu0 %v1242
      %2329 = vmatpush.msra.mxu0 %v1233
      %2330 = vmatpush.msra.mxu0 %v1224
      %2331 = vmatpush.msra.mxu0 %v1215
      %2332 = vmatpush.msra.mxu0 %v1206
      %2333 = vmatpush.msra.mxu0 %v1197
      %2334 = vmatpush.msra.mxu0 %v1188
      %2335 = vmatpush.msra.mxu0 %v1179
      %2336 = vmatpush.msra.mxu0 %v1170
      %2337 = vmatmul.f32.gmra.mxu0 %v1149
      %v2338 = vpop.f32.mrf.mxu0
      %v2339 = vadd.f32 0.0, %v2338
      %2340 = vmatmul.f32.gmra.mxu0 %v1153
      %v2341 = vpop.f32.mrf.mxu0
      %v2342 = vadd.f32 0.0, %v2341
      %2343 = vmatmul.f32.gmra.mxu0 %v1157
      %v2344 = vpop.f32.mrf.mxu0
      %v2345 = vadd.f32 0.0, %v2344
      %2346 = vmatmul.f32.gmra.mxu0 %v1161
      %v2347 = vpop.f32.mrf.mxu0
      %v2348 = vadd.f32 0.0, %v2347
      %2349 = vdwg.mxu0
      %2350 = vmatpush.msra.mxu0 %v1449
      %2351 = vmatpush.msra.mxu0 %v1440
      %2352 = vmatpush.msra.mxu0 %v1431
      %2353 = vmatpush.msra.mxu0 %v1422
      %2354 = vmatpush.msra.mxu0 %v1413
      %2355 = vmatpush.msra.mxu0 %v1404
      %2356 = vmatpush.msra.mxu0 %v1395
      %2357 = vmatpush.msra.mxu0 %v1386
      %2358 = vmatpush.msra.mxu0 %v1377
      %2359 = vmatpush.msra.mxu0 %v1368
      %2360 = vmatpush.msra.mxu0 %v1359
      %2361 = vmatpush.msra.mxu0 %v1350
      %2362 = vmatpush.msra.mxu0 %v1341
      %2363 = vmatpush.msra.mxu0 %v1332
      %2364 = vmatpush.msra.mxu0 %v1323
      %2365 = vmatpush.msra.mxu0 %v1314
      %2366 = vmatmul.f32.gmra.mxu0 %v1150
      %v2367 = vpop.f32.mrf.mxu0
      %v2368 = vadd.f32 %v2339, %v2367
      %2369 = vmatmul.f32.gmra.mxu0 %v1154
      %v2370 = vpop.f32.mrf.mxu0
      %v2371 = vadd.f32 %v2342, %v2370
      %2372 = vmatmul.f32.gmra.mxu0 %v1158
      %v2373 = vpop.f32.mrf.mxu0
      %v2374 = vadd.f32 %v2345, %v2373
      %2375 = vmatmul.f32.gmra.mxu0 %v1162
      %v2376 = vpop.f32.mrf.mxu0
      %v2377 = vadd.f32 %v2348, %v2376
      %2378 = vdwg.mxu0
      %2379 = vmatpush.msra.mxu0 %v1593
      %2380 = vmatpush.msra.mxu0 %v1584
      %2381 = vmatpush.msra.mxu0 %v1575
      %2382 = vmatpush.msra.mxu0 %v1566
      %2383 = vmatpush.msra.mxu0 %v1557
      %2384 = vmatpush.msra.mxu0 %v1548
      %2385 = vmatpush.msra.mxu0 %v1539
      %2386 = vmatpush.msra.mxu0 %v1530
      %2387 = vmatpush.msra.mxu0 %v1521
      %2388 = vmatpush.msra.mxu0 %v1512
      %2389 = vmatpush.msra.mxu0 %v1503
      %2390 = vmatpush.msra.mxu0 %v1494
      %2391 = vmatpush.msra.mxu0 %v1485
      %2392 = vmatpush.msra.mxu0 %v1476
      %2393 = vmatpush.msra.mxu0 %v1467
      %2394 = vmatpush.msra.mxu0 %v1458
      %2395 = vmatmul.f32.gmra.mxu0 %v1151
      %v2396 = vpop.f32.mrf.mxu0
      %v2397 = vadd.f32 %v2368, %v2396
      %2398 = vmatmul.f32.gmra.mxu0 %v1155
      %v2399 = vpop.f32.mrf.mxu0
      %v2400 = vadd.f32 %v2371, %v2399
      %2401 = vmatmul.f32.gmra.mxu0 %v1159
      %v2402 = vpop.f32.mrf.mxu0
      %v2403 = vadd.f32 %v2374, %v2402
      %2404 = vmatmul.f32.gmra.mxu0 %v1163
      %v2405 = vpop.f32.mrf.mxu0
      %v2406 = vadd.f32 %v2377, %v2405
      %2407 = vdwg.mxu0
      %2408 = vmatpush.msra.mxu0 %v1737
      %2409 = vmatpush.msra.mxu0 %v1728
      %2410 = vmatpush.msra.mxu0 %v1719
      %2411 = vmatpush.msra.mxu0 %v1710
      %2412 = vmatpush.msra.mxu0 %v1701
      %2413 = vmatpush.msra.mxu0 %v1692
      %2414 = vmatpush.msra.mxu0 %v1683
      %2415 = vmatpush.msra.mxu0 %v1674
      %2416 = vmatpush.msra.mxu0 %v1665
      %2417 = vmatpush.msra.mxu0 %v1656
      %2418 = vmatpush.msra.mxu0 %v1647
      %2419 = vmatpush.msra.mxu0 %v1638
      %2420 = vmatpush.msra.mxu0 %v1629
      %2421 = vmatpush.msra.mxu0 %v1620
      %2422 = vmatpush.msra.mxu0 %v1611
      %2423 = vmatpush.msra.mxu0 %v1602
      %2424 = vmatmul.f32.gmra.mxu0 %v1152
      %v2425 = vpop.f32.mrf.mxu0
      %v2426 = vadd.f32 %v2397, %v2425
      %2427 = vmatmul.f32.gmra.mxu0 %v1156
      %v2428 = vpop.f32.mrf.mxu0
      %v2429 = vadd.f32 %v2400, %v2428
      %2430 = vmatmul.f32.gmra.mxu0 %v1160
      %v2431 = vpop.f32.mrf.mxu0
      %v2432 = vadd.f32 %v2403, %v2431
      %2433 = vmatmul.f32.gmra.mxu0 %v1164
      %v2434 = vpop.f32.mrf.mxu0
      %v2435 = vadd.f32 %v2406, %v2434
      %2436 = vdwg.mxu0
      %2437 = vmatpush.msra.mxu0 %v1306
      %2438 = vmatpush.msra.mxu0 %v1297
      %2439 = vmatpush.msra.mxu0 %v1288
      %2440 = vmatpush.msra.mxu0 %v1279
      %2441 = vmatpush.msra.mxu0 %v1270
      %2442 = vmatpush.msra.mxu0 %v1261
      %2443 = vmatpush.msra.mxu0 %v1252
      %2444 = vmatpush.msra.mxu0 %v1243
      %2445 = vmatpush.msra.mxu0 %v1234
      %2446 = vmatpush.msra.mxu0 %v1225
      %2447 = vmatpush.msra.mxu0 %v1216
      %2448 = vmatpush.msra.mxu0 %v1207
      %2449 = vmatpush.msra.mxu0 %v1198
      %2450 = vmatpush.msra.mxu0 %v1189
      %2451 = vmatpush.msra.mxu0 %v1180
      %2452 = vmatpush.msra.mxu0 %v1171
      %2453 = vmatmul.f32.gmra.mxu0 %v1149
      %v2454 = vpop.f32.mrf.mxu0
      %v2455 = vadd.f32 0.0, %v2454
      %2456 = vmatmul.f32.gmra.mxu0 %v1153
      %v2457 = vpop.f32.mrf.mxu0
      %v2458 = vadd.f32 0.0, %v2457
      %2459 = vmatmul.f32.gmra.mxu0 %v1157
      %v2460 = vpop.f32.mrf.mxu0
      %v2461 = vadd.f32 0.0, %v2460
      %2462 = vmatmul.f32.gmra.mxu0 %v1161
      %v2463 = vpop.f32.mrf.mxu0
      %v2464 = vadd.f32 0.0, %v2463
      %2465 = vdwg.mxu0
      %2466 = vmatpush.msra.mxu0 %v1450
      %2467 = vmatpush.msra.mxu0 %v1441
      %2468 = vmatpush.msra.mxu0 %v1432
      %2469 = vmatpush.msra.mxu0 %v1423
      %2470 = vmatpush.msra.mxu0 %v1414
      %2471 = vmatpush.msra.mxu0 %v1405
      %2472 = vmatpush.msra.mxu0 %v1396
      %2473 = vmatpush.msra.mxu0 %v1387
      %2474 = vmatpush.msra.mxu0 %v1378
      %2475 = vmatpush.msra.mxu0 %v1369
      %2476 = vmatpush.msra.mxu0 %v1360
      %2477 = vmatpush.msra.mxu0 %v1351
      %2478 = vmatpush.msra.mxu0 %v1342
      %2479 = vmatpush.msra.mxu0 %v1333
      %2480 = vmatpush.msra.mxu0 %v1324
      %2481 = vmatpush.msra.mxu0 %v1315
      %2482 = vmatmul.f32.gmra.mxu0 %v1150
      %v2483 = vpop.f32.mrf.mxu0
      %v2484 = vadd.f32 %v2455, %v2483
      %2485 = vmatmul.f32.gmra.mxu0 %v1154
      %v2486 = vpop.f32.mrf.mxu0
      %v2487 = vadd.f32 %v2458, %v2486
      %2488 = vmatmul.f32.gmra.mxu0 %v1158
      %v2489 = vpop.f32.mrf.mxu0
      %v2490 = vadd.f32 %v2461, %v2489
      %2491 = vmatmul.f32.gmra.mxu0 %v1162
      %v2492 = vpop.f32.mrf.mxu0
      %v2493 = vadd.f32 %v2464, %v2492
      %2494 = vdwg.mxu0
      %2495 = vmatpush.msra.mxu0 %v1594
      %2496 = vmatpush.msra.mxu0 %v1585
      %2497 = vmatpush.msra.mxu0 %v1576
      %2498 = vmatpush.msra.mxu0 %v1567
      %2499 = vmatpush.msra.mxu0 %v1558
      %2500 = vmatpush.msra.mxu0 %v1549
      %2501 = vmatpush.msra.mxu0 %v1540
      %2502 = vmatpush.msra.mxu0 %v1531
      %2503 = vmatpush.msra.mxu0 %v1522
      %2504 = vmatpush.msra.mxu0 %v1513
      %2505 = vmatpush.msra.mxu0 %v1504
      %2506 = vmatpush.msra.mxu0 %v1495
      %2507 = vmatpush.msra.mxu0 %v1486
      %2508 = vmatpush.msra.mxu0 %v1477
      %2509 = vmatpush.msra.mxu0 %v1468
      %2510 = vmatpush.msra.mxu0 %v1459
      %2511 = vmatmul.f32.gmra.mxu0 %v1151
      %v2512 = vpop.f32.mrf.mxu0
      %v2513 = vadd.f32 %v2484, %v2512
      %2514 = vmatmul.f32.gmra.mxu0 %v1155
      %v2515 = vpop.f32.mrf.mxu0
      %v2516 = vadd.f32 %v2487, %v2515
      %2517 = vmatmul.f32.gmra.mxu0 %v1159
      %v2518 = vpop.f32.mrf.mxu0
      %v2519 = vadd.f32 %v2490, %v2518
      %2520 = vmatmul.f32.gmra.mxu0 %v1163
      %v2521 = vpop.f32.mrf.mxu0
      %v2522 = vadd.f32 %v2493, %v2521
      %2523 = vdwg.mxu0
      %2524 = vmatpush.msra.mxu0 %v1738
      %2525 = vmatpush.msra.mxu0 %v1729
      %2526 = vmatpush.msra.mxu0 %v1720
      %2527 = vmatpush.msra.mxu0 %v1711
      %2528 = vmatpush.msra.mxu0 %v1702
      %2529 = vmatpush.msra.mxu0 %v1693
      %2530 = vmatpush.msra.mxu0 %v1684
      %2531 = vmatpush.msra.mxu0 %v1675
      %2532 = vmatpush.msra.mxu0 %v1666
      %2533 = vmatpush.msra.mxu0 %v1657
      %2534 = vmatpush.msra.mxu0 %v1648
      %2535 = vmatpush.msra.mxu0 %v1639
      %2536 = vmatpush.msra.mxu0 %v1630
      %2537 = vmatpush.msra.mxu0 %v1621
      %2538 = vmatpush.msra.mxu0 %v1612
      %2539 = vmatpush.msra.mxu0 %v1603
      %2540 = vmatmul.f32.gmra.mxu0 %v1152
      %v2541 = vpop.f32.mrf.mxu0
      %v2542 = vadd.f32 %v2513, %v2541
      %2543 = vmatmul.f32.gmra.mxu0 %v1156
      %v2544 = vpop.f32.mrf.mxu0
      %v2545 = vadd.f32 %v2516, %v2544
      %2546 = vmatmul.f32.gmra.mxu0 %v1160
      %v2547 = vpop.f32.mrf.mxu0
      %v2548 = vadd.f32 %v2519, %v2547
      %2549 = vmatmul.f32.gmra.mxu0 %v1164
      %v2550 = vpop.f32.mrf.mxu0
      %v2551 = vadd.f32 %v2522, %v2550
      %2552 = vdwg.mxu0
      %2553 = vmatpush.msra.mxu0 %v1307
      %2554 = vmatpush.msra.mxu0 %v1298
      %2555 = vmatpush.msra.mxu0 %v1289
      %2556 = vmatpush.msra.mxu0 %v1280
      %2557 = vmatpush.msra.mxu0 %v1271
      %2558 = vmatpush.msra.mxu0 %v1262
      %2559 = vmatpush.msra.mxu0 %v1253
      %2560 = vmatpush.msra.mxu0 %v1244
      %2561 = vmatpush.msra.mxu0 %v1235
      %2562 = vmatpush.msra.mxu0 %v1226
      %2563 = vmatpush.msra.mxu0 %v1217
      %2564 = vmatpush.msra.mxu0 %v1208
      %2565 = vmatpush.msra.mxu0 %v1199
      %2566 = vmatpush.msra.mxu0 %v1190
      %2567 = vmatpush.msra.mxu0 %v1181
      %2568 = vmatpush.msra.mxu0 %v1172
      %2569 = vmatmul.f32.gmra.mxu0 %v1149
      %v2570 = vpop.f32.mrf.mxu0
      %v2571 = vadd.f32 0.0, %v2570
      %2572 = vmatmul.f32.gmra.mxu0 %v1153
      %v2573 = vpop.f32.mrf.mxu0
      %v2574 = vadd.f32 0.0, %v2573
      %2575 = vmatmul.f32.gmra.mxu0 %v1157
      %v2576 = vpop.f32.mrf.mxu0
      %v2577 = vadd.f32 0.0, %v2576
      %2578 = vmatmul.f32.gmra.mxu0 %v1161
      %v2579 = vpop.f32.mrf.mxu0
      %v2580 = vadd.f32 0.0, %v2579
      %2581 = vdwg.mxu0
      %2582 = vmatpush.msra.mxu0 %v1451
      %2583 = vmatpush.msra.mxu0 %v1442
      %2584 = vmatpush.msra.mxu0 %v1433
      %2585 = vmatpush.msra.mxu0 %v1424
      %2586 = vmatpush.msra.mxu0 %v1415
      %2587 = vmatpush.msra.mxu0 %v1406
      %2588 = vmatpush.msra.mxu0 %v1397
      %2589 = vmatpush.msra.mxu0 %v1388
      %2590 = vmatpush.msra.mxu0 %v1379
      %2591 = vmatpush.msra.mxu0 %v1370
      %2592 = vmatpush.msra.mxu0 %v1361
      %2593 = vmatpush.msra.mxu0 %v1352
      %2594 = vmatpush.msra.mxu0 %v1343
      %2595 = vmatpush.msra.mxu0 %v1334
      %2596 = vmatpush.msra.mxu0 %v1325
      %2597 = vmatpush.msra.mxu0 %v1316
      %2598 = vmatmul.f32.gmra.mxu0 %v1150
      %v2599 = vpop.f32.mrf.mxu0
      %v2600 = vadd.f32 %v2571, %v2599
      %2601 = vmatmul.f32.gmra.mxu0 %v1154
      %v2602 = vpop.f32.mrf.mxu0
      %v2603 = vadd.f32 %v2574, %v2602
      %2604 = vmatmul.f32.gmra.mxu0 %v1158
      %v2605 = vpop.f32.mrf.mxu0
      %v2606 = vadd.f32 %v2577, %v2605
      %2607 = vmatmul.f32.gmra.mxu0 %v1162
      %v2608 = vpop.f32.mrf.mxu0
      %v2609 = vadd.f32 %v2580, %v2608
      %2610 = vdwg.mxu0
      %2611 = vmatpush.msra.mxu0 %v1595
      %2612 = vmatpush.msra.mxu0 %v1586
      %2613 = vmatpush.msra.mxu0 %v1577
      %2614 = vmatpush.msra.mxu0 %v1568
      %2615 = vmatpush.msra.mxu0 %v1559
      %2616 = vmatpush.msra.mxu0 %v1550
      %2617 = vmatpush.msra.mxu0 %v1541
      %2618 = vmatpush.msra.mxu0 %v1532
      %2619 = vmatpush.msra.mxu0 %v1523
      %2620 = vmatpush.msra.mxu0 %v1514
      %2621 = vmatpush.msra.mxu0 %v1505
      %2622 = vmatpush.msra.mxu0 %v1496
      %2623 = vmatpush.msra.mxu0 %v1487
      %2624 = vmatpush.msra.mxu0 %v1478
      %2625 = vmatpush.msra.mxu0 %v1469
      %2626 = vmatpush.msra.mxu0 %v1460
      %2627 = vmatmul.f32.gmra.mxu0 %v1151
      %v2628 = vpop.f32.mrf.mxu0
      %v2629 = vadd.f32 %v2600, %v2628
      %2630 = vmatmul.f32.gmra.mxu0 %v1155
      %v2631 = vpop.f32.mrf.mxu0
      %v2632 = vadd.f32 %v2603, %v2631
      %2633 = vmatmul.f32.gmra.mxu0 %v1159
      %v2634 = vpop.f32.mrf.mxu0
      %v2635 = vadd.f32 %v2606, %v2634
      %2636 = vmatmul.f32.gmra.mxu0 %v1163
      %v2637 = vpop.f32.mrf.mxu0
      %v2638 = vadd.f32 %v2609, %v2637
      %2639 = vdwg.mxu0
      %2640 = vmatpush.msra.mxu0 %v1739
      %2641 = vmatpush.msra.mxu0 %v1730
      %2642 = vmatpush.msra.mxu0 %v1721
      %2643 = vmatpush.msra.mxu0 %v1712
      %2644 = vmatpush.msra.mxu0 %v1703
      %2645 = vmatpush.msra.mxu0 %v1694
      %2646 = vmatpush.msra.mxu0 %v1685
      %2647 = vmatpush.msra.mxu0 %v1676
      %2648 = vmatpush.msra.mxu0 %v1667
      %2649 = vmatpush.msra.mxu0 %v1658
      %2650 = vmatpush.msra.mxu0 %v1649
      %2651 = vmatpush.msra.mxu0 %v1640
      %2652 = vmatpush.msra.mxu0 %v1631
      %2653 = vmatpush.msra.mxu0 %v1622
      %2654 = vmatpush.msra.mxu0 %v1613
      %2655 = vmatpush.msra.mxu0 %v1604
      %2656 = vmatmul.f32.gmra.mxu0 %v1152
      %v2657 = vpop.f32.mrf.mxu0
      %v2658 = vadd.f32 %v2629, %v2657
      %2659 = vmatmul.f32.gmra.mxu0 %v1156
      %v2660 = vpop.f32.mrf.mxu0
      %v2661 = vadd.f32 %v2632, %v2660
      %2662 = vmatmul.f32.gmra.mxu0 %v1160
      %v2663 = vpop.f32.mrf.mxu0
      %v2664 = vadd.f32 %v2635, %v2663
      %2665 = vmatmul.f32.gmra.mxu0 %v1164
      %v2666 = vpop.f32.mrf.mxu0
      %v2667 = vadd.f32 %v2638, %v2666
      %2668 = vdwg.mxu0
      %2669 = vmatpush.msra.mxu0 %v1308
      %2670 = vmatpush.msra.mxu0 %v1299
      %2671 = vmatpush.msra.mxu0 %v1290
      %2672 = vmatpush.msra.mxu0 %v1281
      %2673 = vmatpush.msra.mxu0 %v1272
      %2674 = vmatpush.msra.mxu0 %v1263
      %2675 = vmatpush.msra.mxu0 %v1254
      %2676 = vmatpush.msra.mxu0 %v1245
      %2677 = vmatpush.msra.mxu0 %v1236
      %2678 = vmatpush.msra.mxu0 %v1227
      %2679 = vmatpush.msra.mxu0 %v1218
      %2680 = vmatpush.msra.mxu0 %v1209
      %2681 = vmatpush.msra.mxu0 %v1200
      %2682 = vmatpush.msra.mxu0 %v1191
      %2683 = vmatpush.msra.mxu0 %v1182
      %2684 = vmatpush.msra.mxu0 %v1173
      %2685 = vmatmul.f32.gmra.mxu0 %v1149
      %v2686 = vpop.f32.mrf.mxu0
      %v2687 = vadd.f32 0.0, %v2686
      %2688 = vmatmul.f32.gmra.mxu0 %v1153
      %v2689 = vpop.f32.mrf.mxu0
      %v2690 = vadd.f32 0.0, %v2689
      %2691 = vmatmul.f32.gmra.mxu0 %v1157
      %v2692 = vpop.f32.mrf.mxu0
      %v2693 = vadd.f32 0.0, %v2692
      %2694 = vmatmul.f32.gmra.mxu0 %v1161
      %v2695 = vpop.f32.mrf.mxu0
      %v2696 = vadd.f32 0.0, %v2695
      %2697 = vdwg.mxu0
      %2698 = vmatpush.msra.mxu0 %v1452
      %2699 = vmatpush.msra.mxu0 %v1443
      %2700 = vmatpush.msra.mxu0 %v1434
      %2701 = vmatpush.msra.mxu0 %v1425
      %2702 = vmatpush.msra.mxu0 %v1416
      %2703 = vmatpush.msra.mxu0 %v1407
      %2704 = vmatpush.msra.mxu0 %v1398
      %2705 = vmatpush.msra.mxu0 %v1389
      %2706 = vmatpush.msra.mxu0 %v1380
      %2707 = vmatpush.msra.mxu0 %v1371
      %2708 = vmatpush.msra.mxu0 %v1362
      %2709 = vmatpush.msra.mxu0 %v1353
      %2710 = vmatpush.msra.mxu0 %v1344
      %2711 = vmatpush.msra.mxu0 %v1335
      %2712 = vmatpush.msra.mxu0 %v1326
      %2713 = vmatpush.msra.mxu0 %v1317
      %2714 = vmatmul.f32.gmra.mxu0 %v1150
      %v2715 = vpop.f32.mrf.mxu0
      %v2716 = vadd.f32 %v2687, %v2715
      %2717 = vmatmul.f32.gmra.mxu0 %v1154
      %v2718 = vpop.f32.mrf.mxu0
      %v2719 = vadd.f32 %v2690, %v2718
      %2720 = vmatmul.f32.gmra.mxu0 %v1158
      %v2721 = vpop.f32.mrf.mxu0
      %v2722 = vadd.f32 %v2693, %v2721
      %2723 = vmatmul.f32.gmra.mxu0 %v1162
      %v2724 = vpop.f32.mrf.mxu0
      %v2725 = vadd.f32 %v2696, %v2724
      %2726 = vdwg.mxu0
      %2727 = vmatpush.msra.mxu0 %v1596
      %2728 = vmatpush.msra.mxu0 %v1587
      %2729 = vmatpush.msra.mxu0 %v1578
      %2730 = vmatpush.msra.mxu0 %v1569
      %2731 = vmatpush.msra.mxu0 %v1560
      %2732 = vmatpush.msra.mxu0 %v1551
      %2733 = vmatpush.msra.mxu0 %v1542
      %2734 = vmatpush.msra.mxu0 %v1533
      %2735 = vmatpush.msra.mxu0 %v1524
      %2736 = vmatpush.msra.mxu0 %v1515
      %2737 = vmatpush.msra.mxu0 %v1506
      %2738 = vmatpush.msra.mxu0 %v1497
      %2739 = vmatpush.msra.mxu0 %v1488
      %2740 = vmatpush.msra.mxu0 %v1479
      %2741 = vmatpush.msra.mxu0 %v1470
      %2742 = vmatpush.msra.mxu0 %v1461
      %2743 = vmatmul.f32.gmra.mxu0 %v1151
      %v2744 = vpop.f32.mrf.mxu0
      %v2745 = vadd.f32 %v2716, %v2744
      %2746 = vmatmul.f32.gmra.mxu0 %v1155
      %v2747 = vpop.f32.mrf.mxu0
      %v2748 = vadd.f32 %v2719, %v2747
      %2749 = vmatmul.f32.gmra.mxu0 %v1159
      %v2750 = vpop.f32.mrf.mxu0
      %v2751 = vadd.f32 %v2722, %v2750
      %2752 = vmatmul.f32.gmra.mxu0 %v1163
      %v2753 = vpop.f32.mrf.mxu0
      %v2754 = vadd.f32 %v2725, %v2753
      %2755 = vdwg.mxu0
      %2756 = vmatpush.msra.mxu0 %v1740
      %2757 = vmatpush.msra.mxu0 %v1731
      %2758 = vmatpush.msra.mxu0 %v1722
      %2759 = vmatpush.msra.mxu0 %v1713
      %2760 = vmatpush.msra.mxu0 %v1704
      %2761 = vmatpush.msra.mxu0 %v1695
      %2762 = vmatpush.msra.mxu0 %v1686
      %2763 = vmatpush.msra.mxu0 %v1677
      %2764 = vmatpush.msra.mxu0 %v1668
      %2765 = vmatpush.msra.mxu0 %v1659
      %2766 = vmatpush.msra.mxu0 %v1650
      %2767 = vmatpush.msra.mxu0 %v1641
      %2768 = vmatpush.msra.mxu0 %v1632
      %2769 = vmatpush.msra.mxu0 %v1623
      %2770 = vmatpush.msra.mxu0 %v1614
      %2771 = vmatpush.msra.mxu0 %v1605
      %2772 = vmatmul.f32.gmra.mxu0 %v1152
      %v2773 = vpop.f32.mrf.mxu0
      %v2774 = vadd.f32 %v2745, %v2773
      %2775 = vmatmul.f32.gmra.mxu0 %v1156
      %v2776 = vpop.f32.mrf.mxu0
      %v2777 = vadd.f32 %v2748, %v2776
      %2778 = vmatmul.f32.gmra.mxu0 %v1160
      %v2779 = vpop.f32.mrf.mxu0
      %v2780 = vadd.f32 %v2751, %v2779
      %2781 = vmatmul.f32.gmra.mxu0 %v1164
      %v2782 = vpop.f32.mrf.mxu0
      %v2783 = vadd.f32 %v2754, %v2782
      %2784 = vdwg.mxu0
      %v2785 = vld [vmem:[%s4] sm:$0xff]
      %v2786 = vld [vmem:[%s4 + $0x8] sm:$0xff]
      %s2787 = scalar_lea.vmem %s4, 16
      %v2788 = vld [vmem:[%s2787] sm:$0xff]
      %v2789 = vld [vmem:[%s2787 + $0x8] sm:$0xff]
      %vm2790 = vcmask 261120
      %v2792 = vsel %vm2790, %v2788, 0
      %v2795 = vsel %vm2790, %v2789, 0
      %2797 = vmatpush.msra.mxu0 0.0
      %2798 = vmatpush.msra.mxu0 0.0
      %2799 = vmatpush.msra.mxu0 0.0
      %2800 = vmatpush.msra.mxu0 0.0
      %2801 = vmatpush.msra.mxu0 0.0
      %2802 = vmatpush.msra.mxu0 0.0
      %2803 = vmatpush.msra.mxu0 0.0
      %2804 = vmatpush.msra.mxu0 0.0
      %2805 = vmatpush.msra.mxu0 0.0
      %2806 = vmatpush.msra.mxu0 0.0
      %2807 = vmatpush.msra.mxu0 0.0
      %2808 = vmatpush.msra.mxu0 0.0
      %2809 = vmatpush.msra.mxu0 %v1971
      %2810 = vmatpush.msra.mxu0 %v1968
      %2811 = vmatpush.msra.mxu0 %v1965
      %2812 = vmatpush.msra.mxu0 %v1962
      %2813 = vmatmul.f32.gmra.mxu0 %v2792
      %v2814 = vpop.f32.mrf.mxu0
      %v2815 = vadd.f32 0.0, %v2814
      %2816 = vmatmul.f32.gmra.mxu0 %v2795
      %v2817 = vpop.f32.mrf.mxu0
      %v2818 = vadd.f32 0.0, %v2817
      %2819 = vdwg.mxu0
      %v2821 = vsel %vm2790, %v2785, 0
      %v2824 = vsel %vm2790, %v2786, 0
      %2826 = vmatpush.msra.mxu0 0.0
      %2827 = vmatpush.msra.mxu0 0.0
      %2828 = vmatpush.msra.mxu0 0.0
      %2829 = vmatpush.msra.mxu0 0.0
      %2830 = vmatpush.msra.mxu0 0.0
      %2831 = vmatpush.msra.mxu0 0.0
      %2832 = vmatpush.msra.mxu0 0.0
      %2833 = vmatpush.msra.mxu0 0.0
      %2834 = vmatpush.msra.mxu0 0.0
      %2835 = vmatpush.msra.mxu0 0.0
      %2836 = vmatpush.msra.mxu0 0.0
      %2837 = vmatpush.msra.mxu0 0.0
      %2838 = vmatpush.msra.mxu0 %v1855
      %2839 = vmatpush.msra.mxu0 %v1852
      %2840 = vmatpush.msra.mxu0 %v1849
      %2841 = vmatpush.msra.mxu0 %v1846
      %2842 = vmatmul.f32.gmra.mxu0 %v2821
      %v2843 = vpop.f32.mrf.mxu0
      %v2844 = vadd.f32 %v2815, %v2843
      %2845 = vmatmul.f32.gmra.mxu0 %v2824
      %v2846 = vpop.f32.mrf.mxu0
      %v2847 = vadd.f32 %v2818, %v2846
      %2848 = vdwg.mxu0
      %s2849 = scalar_lea.vmem %s4, 32
      %v2850 = vld [vmem:[%s2849] sm:$0xff]
      %v2851 = vld [vmem:[%s2849 + $0x8] sm:$0xff]
      %v2853 = vsel %vm2790, %v2850, 0
      %v2856 = vsel %vm2790, %v2851, 0
      %2858 = vmatpush.msra.mxu0 0.0
      %2859 = vmatpush.msra.mxu0 0.0
      %2860 = vmatpush.msra.mxu0 0.0
      %2861 = vmatpush.msra.mxu0 0.0
      %2862 = vmatpush.msra.mxu0 0.0
      %2863 = vmatpush.msra.mxu0 0.0
      %2864 = vmatpush.msra.mxu0 0.0
      %2865 = vmatpush.msra.mxu0 0.0
      %2866 = vmatpush.msra.mxu0 0.0
      %2867 = vmatpush.msra.mxu0 0.0
      %2868 = vmatpush.msra.mxu0 0.0
      %2869 = vmatpush.msra.mxu0 0.0
      %2870 = vmatpush.msra.mxu0 %v2087
      %2871 = vmatpush.msra.mxu0 %v2084
      %2872 = vmatpush.msra.mxu0 %v2081
      %2873 = vmatpush.msra.mxu0 %v2078
      %2874 = vmatmul.f32.gmra.mxu0 %v2853
      %v2875 = vpop.f32.mrf.mxu0
      %v2876 = vadd.f32 0.0, %v2875
      %2877 = vmatmul.f32.gmra.mxu0 %v2856
      %v2878 = vpop.f32.mrf.mxu0
      %v2879 = vadd.f32 0.0, %v2878
      %2880 = vdwg.mxu0
      %v2881 = vadd.f32 %v2844, %v2876
      %v2882 = vadd.f32 %v2847, %v2879
      %s2883 = scalar_lea.vmem %s4, 48
      %v2884 = vld [vmem:[%s2883] sm:$0xff]
      %v2885 = vld [vmem:[%s2883 + $0x8] sm:$0xff]
      %v2887 = vsel %vm2790, %v2884, 0
      %v2890 = vsel %vm2790, %v2885, 0
      %2892 = vmatpush.msra.mxu0 0.0
      %2893 = vmatpush.msra.mxu0 0.0
      %2894 = vmatpush.msra.mxu0 0.0
      %2895 = vmatpush.msra.mxu0 0.0
      %2896 = vmatpush.msra.mxu0 0.0
      %2897 = vmatpush.msra.mxu0 0.0
      %2898 = vmatpush.msra.mxu0 0.0
      %2899 = vmatpush.msra.mxu0 0.0
      %2900 = vmatpush.msra.mxu0 0.0
      %2901 = vmatpush.msra.mxu0 0.0
      %2902 = vmatpush.msra.mxu0 0.0
      %2903 = vmatpush.msra.mxu0 0.0
      %2904 = vmatpush.msra.mxu0 %v2203
      %2905 = vmatpush.msra.mxu0 %v2200
      %2906 = vmatpush.msra.mxu0 %v2197
      %2907 = vmatpush.msra.mxu0 %v2194
      %2908 = vmatmul.f32.gmra.mxu0 %v2887
      %v2909 = vpop.f32.mrf.mxu0
      %v2910 = vadd.f32 0.0, %v2909
      %2911 = vmatmul.f32.gmra.mxu0 %v2890
      %v2912 = vpop.f32.mrf.mxu0
      %v2913 = vadd.f32 0.0, %v2912
      %2914 = vdwg.mxu0
      %v2915 = vadd.f32 %v2881, %v2910
      %v2916 = vadd.f32 %v2882, %v2913
      %s2917 = scalar_lea.vmem %s4, 64
      %v2918 = vld [vmem:[%s2917] sm:$0xff]
      %v2919 = vld [vmem:[%s2917 + $0x8] sm:$0xff]
      %v2921 = vsel %vm2790, %v2918, 0
      %v2924 = vsel %vm2790, %v2919, 0
      %2926 = vmatpush.msra.mxu0 0.0
      %2927 = vmatpush.msra.mxu0 0.0
      %2928 = vmatpush.msra.mxu0 0.0
      %2929 = vmatpush.msra.mxu0 0.0
      %2930 = vmatpush.msra.mxu0 0.0
      %2931 = vmatpush.msra.mxu0 0.0
      %2932 = vmatpush.msra.mxu0 0.0
      %2933 = vmatpush.msra.mxu0 0.0
      %2934 = vmatpush.msra.mxu0 0.0
      %2935 = vmatpush.msra.mxu0 0.0
      %2936 = vmatpush.msra.mxu0 0.0
      %2937 = vmatpush.msra.mxu0 0.0
      %2938 = vmatpush.msra.mxu0 %v2319
      %2939 = vmatpush.msra.mxu0 %v2316
      %2940 = vmatpush.msra.mxu0 %v2313
      %2941 = vmatpush.msra.mxu0 %v2310
      %2942 = vmatmul.f32.gmra.mxu0 %v2921
      %v2943 = vpop.f32.mrf.mxu0
      %v2944 = vadd.f32 0.0, %v2943
      %2945 = vmatmul.f32.gmra.mxu0 %v2924
      %v2946 = vpop.f32.mrf.mxu0
      %v2947 = vadd.f32 0.0, %v2946
      %2948 = vdwg.mxu0
      %v2949 = vadd.f32 %v2915, %v2944
      %v2950 = vadd.f32 %v2916, %v2947
      %s2951 = scalar_lea.vmem %s4, 80
      %v2952 = vld [vmem:[%s2951] sm:$0xff]
      %v2953 = vld [vmem:[%s2951 + $0x8] sm:$0xff]
      %v2955 = vsel %vm2790, %v2952, 0
      %v2958 = vsel %vm2790, %v2953, 0
      %2960 = vmatpush.msra.mxu0 0.0
      %2961 = vmatpush.msra.mxu0 0.0
      %2962 = vmatpush.msra.mxu0 0.0
      %2963 = vmatpush.msra.mxu0 0.0
      %2964 = vmatpush.msra.mxu0 0.0
      %2965 = vmatpush.msra.mxu0 0.0
      %2966 = vmatpush.msra.mxu0 0.0
      %2967 = vmatpush.msra.mxu0 0.0
      %2968 = vmatpush.msra.mxu0 0.0
      %2969 = vmatpush.msra.mxu0 0.0
      %2970 = vmatpush.msra.mxu0 0.0
      %2971 = vmatpush.msra.mxu0 0.0
      %2972 = vmatpush.msra.mxu0 %v2435
      %2973 = vmatpush.msra.mxu0 %v2432
      %2974 = vmatpush.msra.mxu0 %v2429
      %2975 = vmatpush.msra.mxu0 %v2426
      %2976 = vmatmul.f32.gmra.mxu0 %v2955
      %v2977 = vpop.f32.mrf.mxu0
      %v2978 = vadd.f32 0.0, %v2977
      %2979 = vmatmul.f32.gmra.mxu0 %v2958
      %v2980 = vpop.f32.mrf.mxu0
      %v2981 = vadd.f32 0.0, %v2980
      %2982 = vdwg.mxu0
      %v2983 = vadd.f32 %v2949, %v2978
      %v2984 = vadd.f32 %v2950, %v2981
      %s2985 = scalar_lea.vmem %s4, 96
      %v2986 = vld [vmem:[%s2985] sm:$0xff]
      %v2987 = vld [vmem:[%s2985 + $0x8] sm:$0xff]
      %v2989 = vsel %vm2790, %v2986, 0
      %v2992 = vsel %vm2790, %v2987, 0
      %2994 = vmatpush.msra.mxu0 0.0
      %2995 = vmatpush.msra.mxu0 0.0
      %2996 = vmatpush.msra.mxu0 0.0
      %2997 = vmatpush.msra.mxu0 0.0
      %2998 = vmatpush.msra.mxu0 0.0
      %2999 = vmatpush.msra.mxu0 0.0
      %3000 = vmatpush.msra.mxu0 0.0
      %3001 = vmatpush.msra.mxu0 0.0
      %3002 = vmatpush.msra.mxu0 0.0
      %3003 = vmatpush.msra.mxu0 0.0
      %3004 = vmatpush.msra.mxu0 0.0
      %3005 = vmatpush.msra.mxu0 0.0
      %3006 = vmatpush.msra.mxu0 %v2551
      %3007 = vmatpush.msra.mxu0 %v2548
      %3008 = vmatpush.msra.mxu0 %v2545
      %3009 = vmatpush.msra.mxu0 %v2542
      %3010 = vmatmul.f32.gmra.mxu0 %v2989
      %v3011 = vpop.f32.mrf.mxu0
      %v3012 = vadd.f32 0.0, %v3011
      %3013 = vmatmul.f32.gmra.mxu0 %v2992
      %v3014 = vpop.f32.mrf.mxu0
      %v3015 = vadd.f32 0.0, %v3014
      %3016 = vdwg.mxu0
      %v3017 = vadd.f32 %v2983, %v3012
      %v3018 = vadd.f32 %v2984, %v3015
      %s3019 = scalar_lea.vmem %s4, 112
      %v3020 = vld [vmem:[%s3019] sm:$0xff]
      %v3021 = vld [vmem:[%s3019 + $0x8] sm:$0xff]
      %v3023 = vsel %vm2790, %v3020, 0
      %v3026 = vsel %vm2790, %v3021, 0
      %3028 = vmatpush.msra.mxu0 0.0
      %3029 = vmatpush.msra.mxu0 0.0
      %3030 = vmatpush.msra.mxu0 0.0
      %3031 = vmatpush.msra.mxu0 0.0
      %3032 = vmatpush.msra.mxu0 0.0
      %3033 = vmatpush.msra.mxu0 0.0
      %3034 = vmatpush.msra.mxu0 0.0
      %3035 = vmatpush.msra.mxu0 0.0
      %3036 = vmatpush.msra.mxu0 0.0
      %3037 = vmatpush.msra.mxu0 0.0
      %3038 = vmatpush.msra.mxu0 0.0
      %3039 = vmatpush.msra.mxu0 0.0
      %3040 = vmatpush.msra.mxu0 %v2667
      %3041 = vmatpush.msra.mxu0 %v2664
      %3042 = vmatpush.msra.mxu0 %v2661
      %3043 = vmatpush.msra.mxu0 %v2658
      %3044 = vmatmul.f32.gmra.mxu0 %v3023
      %v3045 = vpop.f32.mrf.mxu0
      %v3046 = vadd.f32 0.0, %v3045
      %3047 = vmatmul.f32.gmra.mxu0 %v3026
      %v3048 = vpop.f32.mrf.mxu0
      %v3049 = vadd.f32 0.0, %v3048
      %3050 = vdwg.mxu0
      %v3051 = vadd.f32 %v3017, %v3046
      %v3052 = vadd.f32 %v3018, %v3049
      %s3053 = scalar_lea.vmem %s4, 128
      %v3054 = vld [vmem:[%s3053] sm:$0xff]
      %v3055 = vld [vmem:[%s3053 + $0x8] sm:$0xff]
      %v3057 = vsel %vm2790, %v3054, 0
      %v3060 = vsel %vm2790, %v3055, 0
      %3062 = vmatpush.msra.mxu0 0.0
      %3063 = vmatpush.msra.mxu0 0.0
      %3064 = vmatpush.msra.mxu0 0.0
      %3065 = vmatpush.msra.mxu0 0.0
      %3066 = vmatpush.msra.mxu0 0.0
      %3067 = vmatpush.msra.mxu0 0.0
      %3068 = vmatpush.msra.mxu0 0.0
      %3069 = vmatpush.msra.mxu0 0.0
      %3070 = vmatpush.msra.mxu0 0.0
      %3071 = vmatpush.msra.mxu0 0.0
      %3072 = vmatpush.msra.mxu0 0.0
      %3073 = vmatpush.msra.mxu0 0.0
      %3074 = vmatpush.msra.mxu0 %v2783
      %3075 = vmatpush.msra.mxu0 %v2780
      %3076 = vmatpush.msra.mxu0 %v2777
      %3077 = vmatpush.msra.mxu0 %v2774
      %3078 = vmatmul.f32.gmra.mxu0 %v3057
      %v3079 = vpop.f32.mrf.mxu0
      %v3080 = vadd.f32 0.0, %v3079
      %3081 = vmatmul.f32.gmra.mxu0 %v3060
      %v3082 = vpop.f32.mrf.mxu0
      %v3083 = vadd.f32 0.0, %v3082
      %3084 = vdwg.mxu0
      %v3085 = vadd.f32 %v3051, %v3080
      %v3086 = vadd.f32 %v3052, %v3083
      %v3087 = vld [vmem:[%s5] sm:$0xff]
      %v3088 = vld [vmem:[%s5 + $0x8] sm:$0xff]
      %3090 = vset.pattern.permute.xlu0 0
      %3091 = vperm.xlu0 %3090, %v3087
      %v3092 = vpop.permute.xlu0 %3091
      %3095 = vset.pattern.permute.xlu0 0
      %3096 = vperm.xlu0 %3095, %v3088
      %v3097 = vpop.permute.xlu0 %3096
      %v3099 = vadd.f32 %v3085, %v3092
      %v3100 = vadd.f32 %v3086, %v3097
      %v3101 = vmax.f32 %v3099, 0.0
      %v3102 = vmax.f32 %v3100, 0.0
      %3105 = vrot.lane.b32.xlu0 %v3101, 96
      %v3106 = vpop.permute.xlu0 %3105
      %3107 = vrot.lane.b32.xlu0 %v3102, 96
      %v3108 = vpop.permute.xlu0 %3107
      %v3111 = vmax.f32 %v3101, %v3106
      %v3112 = vmax.f32 %v3102, %v3108
      %3115 = vrot.lane.b32.xlu0 %v3111, 64
      %v3116 = vpop.permute.xlu0 %3115
      %3117 = vrot.lane.b32.xlu0 %v3112, 64
      %v3118 = vpop.permute.xlu0 %3117
      %v3121 = vmax.f32 %v3111, %v3116
      %v3122 = vmax.f32 %v3112, %v3118
      %v3123 = vld [vmem:[%s6] sm:$0xff]
      %v3124 = vld [vmem:[%s6 + $0x8] sm:$0xff]
      %v3125 = vld [vmem:[%s6 + $0x10] sm:$0xff]
      %v3126 = vld [vmem:[%s6 + $0x18] sm:$0xff]
      %v3127 = vld [vmem:[%s6 + $0x20] sm:$0xff]
      %v3128 = vld [vmem:[%s6 + $0x28] sm:$0xff]
      %v3129 = vld [vmem:[%s6 + $0x30] sm:$0xff]
      %v3130 = vld [vmem:[%s6 + $0x38] sm:$0xff]
      %v3131 = vld [vmem:[%s6 + $0x40] sm:$0xff]
      %v3132 = vld [vmem:[%s6 + $0x48] sm:$0xff]
      %v3133 = vld [vmem:[%s6 + $0x50] sm:$0xff]
      %v3134 = vld [vmem:[%s6 + $0x58] sm:$0xff]
      %v3135 = vld [vmem:[%s6 + $0x60] sm:$0xff]
      %v3136 = vld [vmem:[%s6 + $0x68] sm:$0xff]
      %v3137 = vld [vmem:[%s6 + $0x70] sm:$0xff]
      %v3138 = vld [vmem:[%s6 + $0x78] sm:$0xff]
      %s3139 = scalar_lea.vmem %s6, 128
      %v3140 = vld [vmem:[%s3139] sm:$0xff]
      %v3141 = vld [vmem:[%s3139 + $0x8] sm:$0xff]
      %v3142 = vld [vmem:[%s3139 + $0x10] sm:$0xff]
      %v3143 = vld [vmem:[%s3139 + $0x18] sm:$0xff]
      %v3144 = vld [vmem:[%s3139 + $0x20] sm:$0xff]
      %v3145 = vld [vmem:[%s3139 + $0x28] sm:$0xff]
      %v3146 = vld [vmem:[%s3139 + $0x30] sm:$0xff]
      %v3147 = vld [vmem:[%s3139 + $0x38] sm:$0xff]
      %v3148 = vld [vmem:[%s3139 + $0x40] sm:$0xff]
      %v3149 = vld [vmem:[%s3139 + $0x48] sm:$0xff]
      %v3150 = vld [vmem:[%s3139 + $0x50] sm:$0xff]
      %v3151 = vld [vmem:[%s3139 + $0x58] sm:$0xff]
      %v3152 = vld [vmem:[%s3139 + $0x60] sm:$0xff]
      %v3153 = vld [vmem:[%s3139 + $0x68] sm:$0xff]
      %v3154 = vld [vmem:[%s3139 + $0x70] sm:$0xff]
      %v3155 = vld [vmem:[%s3139 + $0x78] sm:$0xff]
      %3158 = vrot.lane.b32.xlu0 %v3121, 120
      %v3159 = vpop.permute.xlu0 %3158
      %3160 = vrot.lane.b32.xlu0 %v3122, 120
      %v3161 = vpop.permute.xlu0 %3160
      %v3165 = vsel %vm576, %v3140, 0
      %v3168 = vsel %vm576, %v3141, 0
      %v3171 = vsel %vm576, %v3142, 0
      %v3174 = vsel %vm576, %v3143, 0
      %v3177 = vsel %vm576, %v3144, 0
      %v3180 = vsel %vm576, %v3145, 0
      %v3183 = vsel %vm576, %v3146, 0
      %v3186 = vsel %vm576, %v3147, 0
      %v3189 = vsel %vm576, %v3148, 0
      %v3192 = vsel %vm576, %v3149, 0
      %v3195 = vsel %vm576, %v3150, 0
      %v3198 = vsel %vm576, %v3151, 0
      %v3201 = vsel %vm576, %v3152, 0
      %v3204 = vsel %vm576, %v3153, 0
      %v3207 = vsel %vm576, %v3154, 0
      %v3210 = vsel %vm576, %v3155, 0
      %3212 = vmatpush.msra.mxu0 0.0
      %3213 = vmatpush.msra.mxu0 0.0
      %3214 = vmatpush.msra.mxu0 0.0
      %3215 = vmatpush.msra.mxu0 0.0
      %3216 = vmatpush.msra.mxu0 0.0
      %3217 = vmatpush.msra.mxu0 0.0
      %3218 = vmatpush.msra.mxu0 0.0
      %3219 = vmatpush.msra.mxu0 0.0
      %3220 = vmatpush.msra.mxu0 0.0
      %3221 = vmatpush.msra.mxu0 0.0
      %3222 = vmatpush.msra.mxu0 0.0
      %3223 = vmatpush.msra.mxu0 0.0
      %3224 = vmatpush.msra.mxu0 0.0
      %3225 = vmatpush.msra.mxu0 0.0
      %3226 = vmatpush.msra.mxu0 %v3161
      %3227 = vmatpush.msra.mxu0 %v3159
      %3228 = vmatmul.f32.gmra.mxu0 %v3165
      %v3229 = vpop.f32.mrf.mxu0
      %v3230 = vadd.f32 0.0, %v3229
      %3231 = vmatmul.f32.gmra.mxu0 %v3168
      %v3232 = vpop.f32.mrf.mxu0
      %v3233 = vadd.f32 0.0, %v3232
      %3234 = vmatmul.f32.gmra.mxu0 %v3171
      %v3235 = vpop.f32.mrf.mxu0
      %v3236 = vadd.f32 0.0, %v3235
      %3237 = vmatmul.f32.gmra.mxu0 %v3174
      %v3238 = vpop.f32.mrf.mxu0
      %v3239 = vadd.f32 0.0, %v3238
      %3240 = vmatmul.f32.gmra.mxu0 %v3177
      %v3241 = vpop.f32.mrf.mxu0
      %v3242 = vadd.f32 0.0, %v3241
      %3243 = vmatmul.f32.gmra.mxu0 %v3180
      %v3244 = vpop.f32.mrf.mxu0
      %v3245 = vadd.f32 0.0, %v3244
      %3246 = vmatmul.f32.gmra.mxu0 %v3183
      %v3247 = vpop.f32.mrf.mxu0
      %v3248 = vadd.f32 0.0, %v3247
      %3249 = vmatmul.f32.gmra.mxu0 %v3186
      %v3250 = vpop.f32.mrf.mxu0
      %v3251 = vadd.f32 0.0, %v3250
      %3252 = vmatmul.f32.gmra.mxu0 %v3189
      %v3253 = vpop.f32.mrf.mxu0
      %v3254 = vadd.f32 0.0, %v3253
      %3255 = vmatmul.f32.gmra.mxu0 %v3192
      %v3256 = vpop.f32.mrf.mxu0
      %v3257 = vadd.f32 0.0, %v3256
      %3258 = vmatmul.f32.gmra.mxu0 %v3195
      %v3259 = vpop.f32.mrf.mxu0
      %v3260 = vadd.f32 0.0, %v3259
      %3261 = vmatmul.f32.gmra.mxu0 %v3198
      %v3262 = vpop.f32.mrf.mxu0
      %v3263 = vadd.f32 0.0, %v3262
      %3264 = vmatmul.f32.gmra.mxu0 %v3201
      %v3265 = vpop.f32.mrf.mxu0
      %v3266 = vadd.f32 0.0, %v3265
      %3267 = vmatmul.f32.gmra.mxu0 %v3204
      %v3268 = vpop.f32.mrf.mxu0
      %v3269 = vadd.f32 0.0, %v3268
      %3270 = vmatmul.f32.gmra.mxu0 %v3207
      %v3271 = vpop.f32.mrf.mxu0
      %v3272 = vadd.f32 0.0, %v3271
      %3273 = vmatmul.f32.gmra.mxu0 %v3210
      %v3274 = vpop.f32.mrf.mxu0
      %v3275 = vadd.f32 0.0, %v3274
      %3276 = vdwg.mxu0
      %v3278 = vsel %vm576, %v3123, 0
      %v3281 = vsel %vm576, %v3124, 0
      %v3284 = vsel %vm576, %v3125, 0
      %v3287 = vsel %vm576, %v3126, 0
      %v3290 = vsel %vm576, %v3127, 0
      %v3293 = vsel %vm576, %v3128, 0
      %v3296 = vsel %vm576, %v3129, 0
      %v3299 = vsel %vm576, %v3130, 0
      %v3302 = vsel %vm576, %v3131, 0
      %v3305 = vsel %vm576, %v3132, 0
      %v3308 = vsel %vm576, %v3133, 0
      %v3311 = vsel %vm576, %v3134, 0
      %v3314 = vsel %vm576, %v3135, 0
      %v3317 = vsel %vm576, %v3136, 0
      %v3320 = vsel %vm576, %v3137, 0
      %v3323 = vsel %vm576, %v3138, 0
      %3325 = vmatpush.msra.mxu0 0.0
      %3326 = vmatpush.msra.mxu0 0.0
      %3327 = vmatpush.msra.mxu0 0.0
      %3328 = vmatpush.msra.mxu0 0.0
      %3329 = vmatpush.msra.mxu0 0.0
      %3330 = vmatpush.msra.mxu0 0.0
      %3331 = vmatpush.msra.mxu0 0.0
      %3332 = vmatpush.msra.mxu0 0.0
      %3333 = vmatpush.msra.mxu0 0.0
      %3334 = vmatpush.msra.mxu0 0.0
      %3335 = vmatpush.msra.mxu0 0.0
      %3336 = vmatpush.msra.mxu0 0.0
      %3337 = vmatpush.msra.mxu0 0.0
      %3338 = vmatpush.msra.mxu0 0.0
      %3339 = vmatpush.msra.mxu0 %v3122
      %3340 = vmatpush.msra.mxu0 %v3121
      %3341 = vmatmul.f32.gmra.mxu0 %v3278
      %v3342 = vpop.f32.mrf.mxu0
      %v3343 = vadd.f32 %v3230, %v3342
      %3344 = vmatmul.f32.gmra.mxu0 %v3281
      %v3345 = vpop.f32.mrf.mxu0
      %v3346 = vadd.f32 %v3233, %v3345
      %3347 = vmatmul.f32.gmra.mxu0 %v3284
      %v3348 = vpop.f32.mrf.mxu0
      %v3349 = vadd.f32 %v3236, %v3348
      %3350 = vmatmul.f32.gmra.mxu0 %v3287
      %v3351 = vpop.f32.mrf.mxu0
      %v3352 = vadd.f32 %v3239, %v3351
      %3353 = vmatmul.f32.gmra.mxu0 %v3290
      %v3354 = vpop.f32.mrf.mxu0
      %v3355 = vadd.f32 %v3242, %v3354
      %3356 = vmatmul.f32.gmra.mxu0 %v3293
      %v3357 = vpop.f32.mrf.mxu0
      %v3358 = vadd.f32 %v3245, %v3357
      %3359 = vmatmul.f32.gmra.mxu0 %v3296
      %v3360 = vpop.f32.mrf.mxu0
      %v3361 = vadd.f32 %v3248, %v3360
      %3362 = vmatmul.f32.gmra.mxu0 %v3299
      %v3363 = vpop.f32.mrf.mxu0
      %v3364 = vadd.f32 %v3251, %v3363
      %3365 = vmatmul.f32.gmra.mxu0 %v3302
      %v3366 = vpop.f32.mrf.mxu0
      %v3367 = vadd.f32 %v3254, %v3366
      %3368 = vmatmul.f32.gmra.mxu0 %v3305
      %v3369 = vpop.f32.mrf.mxu0
      %v3370 = vadd.f32 %v3257, %v3369
      %3371 = vmatmul.f32.gmra.mxu0 %v3308
      %v3372 = vpop.f32.mrf.mxu0
      %v3373 = vadd.f32 %v3260, %v3372
      %3374 = vmatmul.f32.gmra.mxu0 %v3311
      %v3375 = vpop.f32.mrf.mxu0
      %v3376 = vadd.f32 %v3263, %v3375
      %3377 = vmatmul.f32.gmra.mxu0 %v3314
      %v3378 = vpop.f32.mrf.mxu0
      %v3379 = vadd.f32 %v3266, %v3378
      %3380 = vmatmul.f32.gmra.mxu0 %v3317
      %v3381 = vpop.f32.mrf.mxu0
      %v3382 = vadd.f32 %v3269, %v3381
      %3383 = vmatmul.f32.gmra.mxu0 %v3320
      %v3384 = vpop.f32.mrf.mxu0
      %v3385 = vadd.f32 %v3272, %v3384
      %3386 = vmatmul.f32.gmra.mxu0 %v3323
      %v3387 = vpop.f32.mrf.mxu0
      %v3388 = vadd.f32 %v3275, %v3387
      %3389 = vdwg.mxu0
      %s3390 = scalar_lea.vmem %s6, 256
      %v3391 = vld [vmem:[%s3390] sm:$0xff]
      %v3392 = vld [vmem:[%s3390 + $0x8] sm:$0xff]
      %v3393 = vld [vmem:[%s3390 + $0x10] sm:$0xff]
      %v3394 = vld [vmem:[%s3390 + $0x18] sm:$0xff]
      %v3395 = vld [vmem:[%s3390 + $0x20] sm:$0xff]
      %v3396 = vld [vmem:[%s3390 + $0x28] sm:$0xff]
      %v3397 = vld [vmem:[%s3390 + $0x30] sm:$0xff]
      %v3398 = vld [vmem:[%s3390 + $0x38] sm:$0xff]
      %v3399 = vld [vmem:[%s3390 + $0x40] sm:$0xff]
      %v3400 = vld [vmem:[%s3390 + $0x48] sm:$0xff]
      %v3401 = vld [vmem:[%s3390 + $0x50] sm:$0xff]
      %v3402 = vld [vmem:[%s3390 + $0x58] sm:$0xff]
      %v3403 = vld [vmem:[%s3390 + $0x60] sm:$0xff]
      %v3404 = vld [vmem:[%s3390 + $0x68] sm:$0xff]
      %v3405 = vld [vmem:[%s3390 + $0x70] sm:$0xff]
      %v3406 = vld [vmem:[%s3390 + $0x78] sm:$0xff]
      %3407 = vrot.lane.b32.xlu0 %v3121, 112
      %v3408 = vpop.permute.xlu0 %3407
      %3409 = vrot.lane.b32.xlu0 %v3122, 112
      %v3410 = vpop.permute.xlu0 %3409
      %v3414 = vsel %vm576, %v3391, 0
      %v3417 = vsel %vm576, %v3392, 0
      %v3420 = vsel %vm576, %v3393, 0
      %v3423 = vsel %vm576, %v3394, 0
      %v3426 = vsel %vm576, %v3395, 0
      %v3429 = vsel %vm576, %v3396, 0
      %v3432 = vsel %vm576, %v3397, 0
      %v3435 = vsel %vm576, %v3398, 0
      %v3438 = vsel %vm576, %v3399, 0
      %v3441 = vsel %vm576, %v3400, 0
      %v3444 = vsel %vm576, %v3401, 0
      %v3447 = vsel %vm576, %v3402, 0
      %v3450 = vsel %vm576, %v3403, 0
      %v3453 = vsel %vm576, %v3404, 0
      %v3456 = vsel %vm576, %v3405, 0
      %v3459 = vsel %vm576, %v3406, 0
      %3461 = vmatpush.msra.mxu0 0.0
      %3462 = vmatpush.msra.mxu0 0.0
      %3463 = vmatpush.msra.mxu0 0.0
      %3464 = vmatpush.msra.mxu0 0.0
      %3465 = vmatpush.msra.mxu0 0.0
      %3466 = vmatpush.msra.mxu0 0.0
      %3467 = vmatpush.msra.mxu0 0.0
      %3468 = vmatpush.msra.mxu0 0.0
      %3469 = vmatpush.msra.mxu0 0.0
      %3470 = vmatpush.msra.mxu0 0.0
      %3471 = vmatpush.msra.mxu0 0.0
      %3472 = vmatpush.msra.mxu0 0.0
      %3473 = vmatpush.msra.mxu0 0.0
      %3474 = vmatpush.msra.mxu0 0.0
      %3475 = vmatpush.msra.mxu0 %v3410
      %3476 = vmatpush.msra.mxu0 %v3408
      %3477 = vmatmul.f32.gmra.mxu0 %v3414
      %v3478 = vpop.f32.mrf.mxu0
      %v3479 = vadd.f32 0.0, %v3478
      %3480 = vmatmul.f32.gmra.mxu0 %v3417
      %v3481 = vpop.f32.mrf.mxu0
      %v3482 = vadd.f32 0.0, %v3481
      %3483 = vmatmul.f32.gmra.mxu0 %v3420
      %v3484 = vpop.f32.mrf.mxu0
      %v3485 = vadd.f32 0.0, %v3484
      %3486 = vmatmul.f32.gmra.mxu0 %v3423
      %v3487 = vpop.f32.mrf.mxu0
      %v3488 = vadd.f32 0.0, %v3487
      %3489 = vmatmul.f32.gmra.mxu0 %v3426
      %v3490 = vpop.f32.mrf.mxu0
      %v3491 = vadd.f32 0.0, %v3490
      %3492 = vmatmul.f32.gmra.mxu0 %v3429
      %v3493 = vpop.f32.mrf.mxu0
      %v3494 = vadd.f32 0.0, %v3493
      %3495 = vmatmul.f32.gmra.mxu0 %v3432
      %v3496 = vpop.f32.mrf.mxu0
      %v3497 = vadd.f32 0.0, %v3496
      %3498 = vmatmul.f32.gmra.mxu0 %v3435
      %v3499 = vpop.f32.mrf.mxu0
      %v3500 = vadd.f32 0.0, %v3499
      %3501 = vmatmul.f32.gmra.mxu0 %v3438
      %v3502 = vpop.f32.mrf.mxu0
      %v3503 = vadd.f32 0.0, %v3502
      %3504 = vmatmul.f32.gmra.mxu0 %v3441
      %v3505 = vpop.f32.mrf.mxu0
      %v3506 = vadd.f32 0.0, %v3505
      %3507 = vmatmul.f32.gmra.mxu0 %v3444
      %v3508 = vpop.f32.mrf.mxu0
      %v3509 = vadd.f32 0.0, %v3508
      %3510 = vmatmul.f32.gmra.mxu0 %v3447
      %v3511 = vpop.f32.mrf.mxu0
      %v3512 = vadd.f32 0.0, %v3511
      %3513 = vmatmul.f32.gmra.mxu0 %v3450
      %v3514 = vpop.f32.mrf.mxu0
      %v3515 = vadd.f32 0.0, %v3514
      %3516 = vmatmul.f32.gmra.mxu0 %v3453
      %v3517 = vpop.f32.mrf.mxu0
      %v3518 = vadd.f32 0.0, %v3517
      %3519 = vmatmul.f32.gmra.mxu0 %v3456
      %v3520 = vpop.f32.mrf.mxu0
      %v3521 = vadd.f32 0.0, %v3520
      %3522 = vmatmul.f32.gmra.mxu0 %v3459
      %v3523 = vpop.f32.mrf.mxu0
      %v3524 = vadd.f32 0.0, %v3523
      %3525 = vdwg.mxu0
      %v3526 = vadd.f32 %v3343, %v3479
      %v3527 = vadd.f32 %v3346, %v3482
      %v3528 = vadd.f32 %v3349, %v3485
      %v3529 = vadd.f32 %v3352, %v3488
      %v3530 = vadd.f32 %v3355, %v3491
      %v3531 = vadd.f32 %v3358, %v3494
      %v3532 = vadd.f32 %v3361, %v3497
      %v3533 = vadd.f32 %v3364, %v3500
      %v3534 = vadd.f32 %v3367, %v3503
      %v3535 = vadd.f32 %v3370, %v3506
      %v3536 = vadd.f32 %v3373, %v3509
      %v3537 = vadd.f32 %v3376, %v3512
      %v3538 = vadd.f32 %v3379, %v3515
      %v3539 = vadd.f32 %v3382, %v3518
      %v3540 = vadd.f32 %v3385, %v3521
      %v3541 = vadd.f32 %v3388, %v3524
      %s3542 = scalar_lea.vmem %s6, 384
      %v3543 = vld [vmem:[%s3542] sm:$0xff]
      %v3544 = vld [vmem:[%s3542 + $0x8] sm:$0xff]
      %v3545 = vld [vmem:[%s3542 + $0x10] sm:$0xff]
      %v3546 = vld [vmem:[%s3542 + $0x18] sm:$0xff]
      %v3547 = vld [vmem:[%s3542 + $0x20] sm:$0xff]
      %v3548 = vld [vmem:[%s3542 + $0x28] sm:$0xff]
      %v3549 = vld [vmem:[%s3542 + $0x30] sm:$0xff]
      %v3550 = vld [vmem:[%s3542 + $0x38] sm:$0xff]
      %v3551 = vld [vmem:[%s3542 + $0x40] sm:$0xff]
      %v3552 = vld [vmem:[%s3542 + $0x48] sm:$0xff]
      %v3553 = vld [vmem:[%s3542 + $0x50] sm:$0xff]
      %v3554 = vld [vmem:[%s3542 + $0x58] sm:$0xff]
      %v3555 = vld [vmem:[%s3542 + $0x60] sm:$0xff]
      %v3556 = vld [vmem:[%s3542 + $0x68] sm:$0xff]
      %v3557 = vld [vmem:[%s3542 + $0x70] sm:$0xff]
      %v3558 = vld [vmem:[%s3542 + $0x78] sm:$0xff]
      %3559 = vrot.lane.b32.xlu0 %v3121, 104
      %v3560 = vpop.permute.xlu0 %3559
      %3561 = vrot.lane.b32.xlu0 %v3122, 104
      %v3562 = vpop.permute.xlu0 %3561
      %v3566 = vsel %vm576, %v3543, 0
      %v3569 = vsel %vm576, %v3544, 0
      %v3572 = vsel %vm576, %v3545, 0
      %v3575 = vsel %vm576, %v3546, 0
      %v3578 = vsel %vm576, %v3547, 0
      %v3581 = vsel %vm576, %v3548, 0
      %v3584 = vsel %vm576, %v3549, 0
      %v3587 = vsel %vm576, %v3550, 0
      %v3590 = vsel %vm576, %v3551, 0
      %v3593 = vsel %vm576, %v3552, 0
      %v3596 = vsel %vm576, %v3553, 0
      %v3599 = vsel %vm576, %v3554, 0
      %v3602 = vsel %vm576, %v3555, 0
      %v3605 = vsel %vm576, %v3556, 0
      %v3608 = vsel %vm576, %v3557, 0
      %v3611 = vsel %vm576, %v3558, 0
      %3613 = vmatpush.msra.mxu0 0.0
      %3614 = vmatpush.msra.mxu0 0.0
      %3615 = vmatpush.msra.mxu0 0.0
      %3616 = vmatpush.msra.mxu0 0.0
      %3617 = vmatpush.msra.mxu0 0.0
      %3618 = vmatpush.msra.mxu0 0.0
      %3619 = vmatpush.msra.mxu0 0.0
      %3620 = vmatpush.msra.mxu0 0.0
      %3621 = vmatpush.msra.mxu0 0.0
      %3622 = vmatpush.msra.mxu0 0.0
      %3623 = vmatpush.msra.mxu0 0.0
      %3624 = vmatpush.msra.mxu0 0.0
      %3625 = vmatpush.msra.mxu0 0.0
      %3626 = vmatpush.msra.mxu0 0.0
      %3627 = vmatpush.msra.mxu0 %v3562
      %3628 = vmatpush.msra.mxu0 %v3560
      %3629 = vmatmul.f32.gmra.mxu0 %v3566
      %v3630 = vpop.f32.mrf.mxu0
      %v3631 = vadd.f32 0.0, %v3630
      %3632 = vmatmul.f32.gmra.mxu0 %v3569
      %v3633 = vpop.f32.mrf.mxu0
      %v3634 = vadd.f32 0.0, %v3633
      %3635 = vmatmul.f32.gmra.mxu0 %v3572
      %v3636 = vpop.f32.mrf.mxu0
      %v3637 = vadd.f32 0.0, %v3636
      %3638 = vmatmul.f32.gmra.mxu0 %v3575
      %v3639 = vpop.f32.mrf.mxu0
      %v3640 = vadd.f32 0.0, %v3639
      %3641 = vmatmul.f32.gmra.mxu0 %v3578
      %v3642 = vpop.f32.mrf.mxu0
      %v3643 = vadd.f32 0.0, %v3642
      %3644 = vmatmul.f32.gmra.mxu0 %v3581
      %v3645 = vpop.f32.mrf.mxu0
      %v3646 = vadd.f32 0.0, %v3645
      %3647 = vmatmul.f32.gmra.mxu0 %v3584
      %v3648 = vpop.f32.mrf.mxu0
      %v3649 = vadd.f32 0.0, %v3648
      %3650 = vmatmul.f32.gmra.mxu0 %v3587
      %v3651 = vpop.f32.mrf.mxu0
      %v3652 = vadd.f32 0.0, %v3651
      %3653 = vmatmul.f32.gmra.mxu0 %v3590
      %v3654 = vpop.f32.mrf.mxu0
      %v3655 = vadd.f32 0.0, %v3654
      %3656 = vmatmul.f32.gmra.mxu0 %v3593
      %v3657 = vpop.f32.mrf.mxu0
      %v3658 = vadd.f32 0.0, %v3657
      %3659 = vmatmul.f32.gmra.mxu0 %v3596
      %v3660 = vpop.f32.mrf.mxu0
      %v3661 = vadd.f32 0.0, %v3660
      %3662 = vmatmul.f32.gmra.mxu0 %v3599
      %v3663 = vpop.f32.mrf.mxu0
      %v3664 = vadd.f32 0.0, %v3663
      %3665 = vmatmul.f32.gmra.mxu0 %v3602
      %v3666 = vpop.f32.mrf.mxu0
      %v3667 = vadd.f32 0.0, %v3666
      %3668 = vmatmul.f32.gmra.mxu0 %v3605
      %v3669 = vpop.f32.mrf.mxu0
      %v3670 = vadd.f32 0.0, %v3669
      %3671 = vmatmul.f32.gmra.mxu0 %v3608
      %v3672 = vpop.f32.mrf.mxu0
      %v3673 = vadd.f32 0.0, %v3672
      %3674 = vmatmul.f32.gmra.mxu0 %v3611
      %v3675 = vpop.f32.mrf.mxu0
      %v3676 = vadd.f32 0.0, %v3675
      %3677 = vdwg.mxu0
      %v3678 = vadd.f32 %v3526, %v3631
      %v3679 = vadd.f32 %v3527, %v3634
      %v3680 = vadd.f32 %v3528, %v3637
      %v3681 = vadd.f32 %v3529, %v3640
      %v3682 = vadd.f32 %v3530, %v3643
      %v3683 = vadd.f32 %v3531, %v3646
      %v3684 = vadd.f32 %v3532, %v3649
      %v3685 = vadd.f32 %v3533, %v3652
      %v3686 = vadd.f32 %v3534, %v3655
      %v3687 = vadd.f32 %v3535, %v3658
      %v3688 = vadd.f32 %v3536, %v3661
      %v3689 = vadd.f32 %v3537, %v3664
      %v3690 = vadd.f32 %v3538, %v3667
      %v3691 = vadd.f32 %v3539, %v3670
      %v3692 = vadd.f32 %v3540, %v3673
      %v3693 = vadd.f32 %v3541, %v3676
      %v3694 = vld [vmem:[%s7] sm:$0xff]
      %v3695 = vld [vmem:[%s7 + $0x8] sm:$0xff]
      %v3696 = vld [vmem:[%s7 + $0x10] sm:$0xff]
      %v3697 = vld [vmem:[%s7 + $0x18] sm:$0xff]
      %v3698 = vld [vmem:[%s7 + $0x20] sm:$0xff]
      %v3699 = vld [vmem:[%s7 + $0x28] sm:$0xff]
      %v3700 = vld [vmem:[%s7 + $0x30] sm:$0xff]
      %v3701 = vld [vmem:[%s7 + $0x38] sm:$0xff]
      %v3702 = vld [vmem:[%s7 + $0x40] sm:$0xff]
      %v3703 = vld [vmem:[%s7 + $0x48] sm:$0xff]
      %v3704 = vld [vmem:[%s7 + $0x50] sm:$0xff]
      %v3705 = vld [vmem:[%s7 + $0x58] sm:$0xff]
      %v3706 = vld [vmem:[%s7 + $0x60] sm:$0xff]
      %v3707 = vld [vmem:[%s7 + $0x68] sm:$0xff]
      %v3708 = vld [vmem:[%s7 + $0x70] sm:$0xff]
      %v3709 = vld [vmem:[%s7 + $0x78] sm:$0xff]
      %3711 = vset.pattern.permute.xlu0 0
      %3712 = vperm.xlu0 %3711, %v3694
      %v3713 = vpop.permute.xlu0 %3712
      %3716 = vset.pattern.permute.xlu0 0
      %3717 = vperm.xlu0 %3716, %v3695
      %v3718 = vpop.permute.xlu0 %3717
      %3721 = vset.pattern.permute.xlu0 0
      %3722 = vperm.xlu0 %3721, %v3696
      %v3723 = vpop.permute.xlu0 %3722
      %3726 = vset.pattern.permute.xlu0 0
      %3727 = vperm.xlu0 %3726, %v3697
      %v3728 = vpop.permute.xlu0 %3727
      %3731 = vset.pattern.permute.xlu0 0
      %3732 = vperm.xlu0 %3731, %v3698
      %v3733 = vpop.permute.xlu0 %3732
      %3736 = vset.pattern.permute.xlu0 0
      %3737 = vperm.xlu0 %3736, %v3699
      %v3738 = vpop.permute.xlu0 %3737
      %3741 = vset.pattern.permute.xlu0 0
      %3742 = vperm.xlu0 %3741, %v3700
      %v3743 = vpop.permute.xlu0 %3742
      %3746 = vset.pattern.permute.xlu0 0
      %3747 = vperm.xlu0 %3746, %v3701
      %v3748 = vpop.permute.xlu0 %3747
      %3751 = vset.pattern.permute.xlu0 0
      %3752 = vperm.xlu0 %3751, %v3702
      %v3753 = vpop.permute.xlu0 %3752
      %3756 = vset.pattern.permute.xlu0 0
      %3757 = vperm.xlu0 %3756, %v3703
      %v3758 = vpop.permute.xlu0 %3757
      %3761 = vset.pattern.permute.xlu0 0
      %3762 = vperm.xlu0 %3761, %v3704
      %v3763 = vpop.permute.xlu0 %3762
      %3766 = vset.pattern.permute.xlu0 0
      %3767 = vperm.xlu0 %3766, %v3705
      %v3768 = vpop.permute.xlu0 %3767
      %3771 = vset.pattern.permute.xlu0 0
      %3772 = vperm.xlu0 %3771, %v3706
      %v3773 = vpop.permute.xlu0 %3772
      %3776 = vset.pattern.permute.xlu0 0
      %3777 = vperm.xlu0 %3776, %v3707
      %v3778 = vpop.permute.xlu0 %3777
      %3781 = vset.pattern.permute.xlu0 0
      %3782 = vperm.xlu0 %3781, %v3708
      %v3783 = vpop.permute.xlu0 %3782
      %3786 = vset.pattern.permute.xlu0 0
      %3787 = vperm.xlu0 %3786, %v3709
      %v3788 = vpop.permute.xlu0 %3787
      %v3790 = vadd.f32 %v3678, %v3713
      %v3791 = vadd.f32 %v3679, %v3718
      %v3792 = vadd.f32 %v3680, %v3723
      %v3793 = vadd.f32 %v3681, %v3728
      %v3794 = vadd.f32 %v3682, %v3733
      %v3795 = vadd.f32 %v3683, %v3738
      %v3796 = vadd.f32 %v3684, %v3743
      %v3797 = vadd.f32 %v3685, %v3748
      %v3798 = vadd.f32 %v3686, %v3753
      %v3799 = vadd.f32 %v3687, %v3758
      %v3800 = vadd.f32 %v3688, %v3763
      %v3801 = vadd.f32 %v3689, %v3768
      %v3802 = vadd.f32 %v3690, %v3773
      %v3803 = vadd.f32 %v3691, %v3778
      %v3804 = vadd.f32 %v3692, %v3783
      %v3805 = vadd.f32 %v3693, %v3788
      %v3806 = vmax.f32 %v3790, 0.0
      %v3807 = vmax.f32 %v3791, 0.0
      %v3808 = vmax.f32 %v3792, 0.0
      %v3809 = vmax.f32 %v3793, 0.0
      %v3810 = vmax.f32 %v3794, 0.0
      %v3811 = vmax.f32 %v3795, 0.0
      %v3812 = vmax.f32 %v3796, 0.0
      %v3813 = vmax.f32 %v3797, 0.0
      %v3814 = vmax.f32 %v3798, 0.0
      %v3815 = vmax.f32 %v3799, 0.0
      %v3816 = vmax.f32 %v3800, 0.0
      %v3817 = vmax.f32 %v3801, 0.0
      %v3818 = vmax.f32 %v3802, 0.0
      %v3819 = vmax.f32 %v3803, 0.0
      %v3820 = vmax.f32 %v3804, 0.0
      %v3821 = vmax.f32 %v3805, 0.0
      %v3822 = vld [vmem:[%s8] sm:$0xff]
      %v3823 = vld [vmem:[%s8 + $0x8] sm:$0xff]
      %v3824 = vld [vmem:[%s8 + $0x10] sm:$0xff]
      %v3825 = vld [vmem:[%s8 + $0x18] sm:$0xff]
      %v3826 = vld [vmem:[%s8 + $0x20] sm:$0xff]
      %v3827 = vld [vmem:[%s8 + $0x28] sm:$0xff]
      %v3828 = vld [vmem:[%s8 + $0x30] sm:$0xff]
      %v3829 = vld [vmem:[%s8 + $0x38] sm:$0xff]
      %v3830 = vld [vmem:[%s8 + $0x40] sm:$0xff]
      %v3831 = vld [vmem:[%s8 + $0x48] sm:$0xff]
      %v3832 = vld [vmem:[%s8 + $0x50] sm:$0xff]
      %v3833 = vld [vmem:[%s8 + $0x58] sm:$0xff]
      %v3834 = vld [vmem:[%s8 + $0x60] sm:$0xff]
      %v3835 = vld [vmem:[%s8 + $0x68] sm:$0xff]
      %v3836 = vld [vmem:[%s8 + $0x70] sm:$0xff]
      %v3837 = vld [vmem:[%s8 + $0x78] sm:$0xff]
      %v3838 = vld [vmem:[%s8 + $0x80] sm:$0xff]
      %v3839 = vld [vmem:[%s8 + $0x88] sm:$0xff]
      %v3840 = vld [vmem:[%s8 + $0x90] sm:$0xff]
      %v3841 = vld [vmem:[%s8 + $0x98] sm:$0xff]
      %v3842 = vld [vmem:[%s8 + $0xa0] sm:$0xff]
      %v3843 = vld [vmem:[%s8 + $0xa8] sm:$0xff]
      %v3844 = vld [vmem:[%s8 + $0xb0] sm:$0xff]
      %v3845 = vld [vmem:[%s8 + $0xb8] sm:$0xff]
      %v3846 = vld [vmem:[%s8 + $0xc0] sm:$0xff]
      %v3847 = vld [vmem:[%s8 + $0xc8] sm:$0xff]
      %v3848 = vld [vmem:[%s8 + $0xd0] sm:$0xff]
      %v3849 = vld [vmem:[%s8 + $0xd8] sm:$0xff]
      %v3850 = vld [vmem:[%s8 + $0xe0] sm:$0xff]
      %v3851 = vld [vmem:[%s8 + $0xe8] sm:$0xff]
      %v3852 = vld [vmem:[%s8 + $0xf0] sm:$0xff]
      %v3853 = vld [vmem:[%s8 + $0xf8] sm:$0xff]
      %v3854 = vld [vmem:[%s9] sm:$0xff]
      %v3855 = vld [vmem:[%s9 + $0x8] sm:$0xff]
      %v3856 = vld [vmem:[%s9 + $0x10] sm:$0xff]
      %v3857 = vld [vmem:[%s9 + $0x18] sm:$0xff]
      %v3858 = vld [vmem:[%s9 + $0x20] sm:$0xff]
      %v3859 = vld [vmem:[%s9 + $0x28] sm:$0xff]
      %v3860 = vld [vmem:[%s9 + $0x30] sm:$0xff]
      %v3861 = vld [vmem:[%s9 + $0x38] sm:$0xff]
      %v3862 = vld [vmem:[%s9 + $0x40] sm:$0xff]
      %v3863 = vld [vmem:[%s9 + $0x48] sm:$0xff]
      %v3864 = vld [vmem:[%s9 + $0x50] sm:$0xff]
      %v3865 = vld [vmem:[%s9 + $0x58] sm:$0xff]
      %v3866 = vld [vmem:[%s9 + $0x60] sm:$0xff]
      %v3867 = vld [vmem:[%s9 + $0x68] sm:$0xff]
      %v3868 = vld [vmem:[%s9 + $0x70] sm:$0xff]
      %v3869 = vld [vmem:[%s9 + $0x78] sm:$0xff]
      %v3870 = vld [vmem:[%s9 + $0x80] sm:$0xff]
      %v3871 = vld [vmem:[%s9 + $0x88] sm:$0xff]
      %v3872 = vld [vmem:[%s9 + $0x90] sm:$0xff]
      %v3873 = vld [vmem:[%s9 + $0x98] sm:$0xff]
      %v3874 = vld [vmem:[%s9 + $0xa0] sm:$0xff]
      %v3875 = vld [vmem:[%s9 + $0xa8] sm:$0xff]
      %v3876 = vld [vmem:[%s9 + $0xb0] sm:$0xff]
      %v3877 = vld [vmem:[%s9 + $0xb8] sm:$0xff]
      %v3878 = vld [vmem:[%s9 + $0xc0] sm:$0xff]
      %v3879 = vld [vmem:[%s9 + $0xc8] sm:$0xff]
      %v3880 = vld [vmem:[%s9 + $0xd0] sm:$0xff]
      %v3881 = vld [vmem:[%s9 + $0xd8] sm:$0xff]
      %v3882 = vld [vmem:[%s9 + $0xe0] sm:$0xff]
      %v3883 = vld [vmem:[%s9 + $0xe8] sm:$0xff]
      %v3884 = vld [vmem:[%s9 + $0xf0] sm:$0xff]
      %v3885 = vld [vmem:[%s9 + $0xf8] sm:$0xff]
      %v3886 = vld [vmem:[%s536] sm:$0xff]
      %v3887 = vld [vmem:[%s536 + $0x8] sm:$0xff]
      %v3888 = vld [vmem:[%s536 + $0x10] sm:$0x3f]
      %vm3889 = vcmask 179200
      %v3891 = vsel %vm3889, %v3854, 0
      %v3894 = vsel %vm3889, %v3855, 0
      %v3897 = vsel %vm3889, %v3856, 0
      %v3900 = vsel %vm3889, %v3857, 0
      %v3903 = vsel %vm3889, %v3858, 0
      %v3906 = vsel %vm3889, %v3859, 0
      %v3909 = vsel %vm3889, %v3860, 0
      %v3912 = vsel %vm3889, %v3861, 0
      %v3915 = vsel %vm3889, %v3862, 0
      %v3918 = vsel %vm3889, %v3863, 0
      %v3921 = vsel %vm3889, %v3864, 0
      %v3924 = vsel %vm3889, %v3865, 0
      %v3927 = vsel %vm3889, %v3866, 0
      %v3930 = vsel %vm3889, %v3867, 0
      %v3933 = vsel %vm3889, %v3868, 0
      %v3936 = vsel %vm3889, %v3869, 0
      %v3939 = vsel %vm3889, %v3870, 0
      %v3942 = vsel %vm3889, %v3871, 0
      %v3945 = vsel %vm3889, %v3872, 0
      %v3948 = vsel %vm3889, %v3873, 0
      %v3951 = vsel %vm3889, %v3874, 0
      %v3954 = vsel %vm3889, %v3875, 0
      %v3957 = vsel %vm3889, %v3876, 0
      %v3960 = vsel %vm3889, %v3877, 0
      %v3963 = vsel %vm3889, %v3878, 0
      %v3966 = vsel %vm3889, %v3879, 0
      %v3969 = vsel %vm3889, %v3880, 0
      %v3972 = vsel %vm3889, %v3881, 0
      %v3975 = vsel %vm3889, %v3882, 0
      %v3978 = vsel %vm3889, %v3883, 0
      %v3981 = vsel %vm3889, %v3884, 0
      %v3984 = vsel %vm3889, %v3885, 0
      %vm3986 = vcmask 1045504
      %v3988 = vsel %vm3986, %v3888, 0
      %3990 = vmatpush.msra.mxu0 0.0
      %3991 = vmatpush.msra.mxu0 0.0
      %3992 = vmatpush.msra.mxu0 0.0
      %3993 = vmatpush.msra.mxu0 0.0
      %3994 = vmatpush.msra.mxu0 0.0
      %3995 = vmatpush.msra.mxu0 0.0
      %3996 = vmatpush.msra.mxu0 0.0
      %3997 = vmatpush.msra.mxu0 0.0
      %3998 = vmatpush.msra.mxu0 0.0
      %3999 = vmatpush.msra.mxu0 0.0
      %4000 = vmatpush.msra.mxu0 0.0
      %4001 = vmatpush.msra.mxu0 0.0
      %4002 = vmatpush.msra.mxu0 0.0
      %4003 = vmatpush.msra.mxu0 %v3988
      %4004 = vmatpush.msra.mxu0 %v3887
      %4005 = vmatpush.msra.mxu0 %v3886
      %4006 = vmatmul.f32.gmra.mxu0 %v3891
      %v4007 = vpop.f32.mrf.mxu0
      %v4008 = vadd.f32 0.0, %v4007
      %4009 = vmatmul.f32.gmra.mxu0 %v3894
      %v4010 = vpop.f32.mrf.mxu0
      %v4011 = vadd.f32 0.0, %v4010
      %4012 = vmatmul.f32.gmra.mxu0 %v3897
      %v4013 = vpop.f32.mrf.mxu0
      %v4014 = vadd.f32 0.0, %v4013
      %4015 = vmatmul.f32.gmra.mxu0 %v3900
      %v4016 = vpop.f32.mrf.mxu0
      %v4017 = vadd.f32 0.0, %v4016
      %4018 = vmatmul.f32.gmra.mxu0 %v3903
      %v4019 = vpop.f32.mrf.mxu0
      %v4020 = vadd.f32 0.0, %v4019
      %4021 = vmatmul.f32.gmra.mxu0 %v3906
      %v4022 = vpop.f32.mrf.mxu0
      %v4023 = vadd.f32 0.0, %v4022
      %4024 = vmatmul.f32.gmra.mxu0 %v3909
      %v4025 = vpop.f32.mrf.mxu0
      %v4026 = vadd.f32 0.0, %v4025
      %4027 = vmatmul.f32.gmra.mxu0 %v3912
      %v4028 = vpop.f32.mrf.mxu0
      %v4029 = vadd.f32 0.0, %v4028
      %4030 = vmatmul.f32.gmra.mxu0 %v3915
      %v4031 = vpop.f32.mrf.mxu0
      %v4032 = vadd.f32 0.0, %v4031
      %4033 = vmatmul.f32.gmra.mxu0 %v3918
      %v4034 = vpop.f32.mrf.mxu0
      %v4035 = vadd.f32 0.0, %v4034
      %4036 = vmatmul.f32.gmra.mxu0 %v3921
      %v4037 = vpop.f32.mrf.mxu0
      %v4038 = vadd.f32 0.0, %v4037
      %4039 = vmatmul.f32.gmra.mxu0 %v3924
      %v4040 = vpop.f32.mrf.mxu0
      %v4041 = vadd.f32 0.0, %v4040
      %4042 = vmatmul.f32.gmra.mxu0 %v3927
      %v4043 = vpop.f32.mrf.mxu0
      %v4044 = vadd.f32 0.0, %v4043
      %4045 = vmatmul.f32.gmra.mxu0 %v3930
      %v4046 = vpop.f32.mrf.mxu0
      %v4047 = vadd.f32 0.0, %v4046
      %4048 = vmatmul.f32.gmra.mxu0 %v3933
      %v4049 = vpop.f32.mrf.mxu0
      %v4050 = vadd.f32 0.0, %v4049
      %4051 = vmatmul.f32.gmra.mxu0 %v3936
      %v4052 = vpop.f32.mrf.mxu0
      %v4053 = vadd.f32 0.0, %v4052
      %4054 = vmatmul.f32.gmra.mxu0 %v3939
      %v4055 = vpop.f32.mrf.mxu0
      %v4056 = vadd.f32 0.0, %v4055
      %4057 = vmatmul.f32.gmra.mxu0 %v3942
      %v4058 = vpop.f32.mrf.mxu0
      %v4059 = vadd.f32 0.0, %v4058
      %4060 = vmatmul.f32.gmra.mxu0 %v3945
      %v4061 = vpop.f32.mrf.mxu0
      %v4062 = vadd.f32 0.0, %v4061
      %4063 = vmatmul.f32.gmra.mxu0 %v3948
      %v4064 = vpop.f32.mrf.mxu0
      %v4065 = vadd.f32 0.0, %v4064
      %4066 = vmatmul.f32.gmra.mxu0 %v3951
      %v4067 = vpop.f32.mrf.mxu0
      %v4068 = vadd.f32 0.0, %v4067
      %4069 = vmatmul.f32.gmra.mxu0 %v3954
      %v4070 = vpop.f32.mrf.mxu0
      %v4071 = vadd.f32 0.0, %v4070
      %4072 = vmatmul.f32.gmra.mxu0 %v3957
      %v4073 = vpop.f32.mrf.mxu0
      %v4074 = vadd.f32 0.0, %v4073
      %4075 = vmatmul.f32.gmra.mxu0 %v3960
      %v4076 = vpop.f32.mrf.mxu0
      %v4077 = vadd.f32 0.0, %v4076
      %4078 = vmatmul.f32.gmra.mxu0 %v3963
      %v4079 = vpop.f32.mrf.mxu0
      %v4080 = vadd.f32 0.0, %v4079
      %4081 = vmatmul.f32.gmra.mxu0 %v3966
      %v4082 = vpop.f32.mrf.mxu0
      %v4083 = vadd.f32 0.0, %v4082
      %4084 = vmatmul.f32.gmra.mxu0 %v3969
      %v4085 = vpop.f32.mrf.mxu0
      %v4086 = vadd.f32 0.0, %v4085
      %4087 = vmatmul.f32.gmra.mxu0 %v3972
      %v4088 = vpop.f32.mrf.mxu0
      %v4089 = vadd.f32 0.0, %v4088
      %4090 = vmatmul.f32.gmra.mxu0 %v3975
      %v4091 = vpop.f32.mrf.mxu0
      %v4092 = vadd.f32 0.0, %v4091
      %4093 = vmatmul.f32.gmra.mxu0 %v3978
      %v4094 = vpop.f32.mrf.mxu0
      %v4095 = vadd.f32 0.0, %v4094
      %4096 = vmatmul.f32.gmra.mxu0 %v3981
      %v4097 = vpop.f32.mrf.mxu0
      %v4098 = vadd.f32 0.0, %v4097
      %4099 = vmatmul.f32.gmra.mxu0 %v3984
      %v4100 = vpop.f32.mrf.mxu0
      %v4101 = vadd.f32 0.0, %v4100
      %4102 = vdwg.mxu0
      %4103 = vmatpush.msra.mxu0 %v3821
      %4104 = vmatpush.msra.mxu0 %v3820
      %4105 = vmatpush.msra.mxu0 %v3819
      %4106 = vmatpush.msra.mxu0 %v3818
      %4107 = vmatpush.msra.mxu0 %v3817
      %4108 = vmatpush.msra.mxu0 %v3816
      %4109 = vmatpush.msra.mxu0 %v3815
      %4110 = vmatpush.msra.mxu0 %v3814
      %4111 = vmatpush.msra.mxu0 %v3813
      %4112 = vmatpush.msra.mxu0 %v3812
      %4113 = vmatpush.msra.mxu0 %v3811
      %4114 = vmatpush.msra.mxu0 %v3810
      %4115 = vmatpush.msra.mxu0 %v3809
      %4116 = vmatpush.msra.mxu0 %v3808
      %4117 = vmatpush.msra.mxu0 %v3807
      %4118 = vmatpush.msra.mxu0 %v3806
      %4119 = vmatmul.f32.gmra.mxu0 %v3822
      %v4120 = vpop.f32.mrf.mxu0
      %v4121 = vadd.f32 %v4008, %v4120
      %4122 = vmatmul.f32.gmra.mxu0 %v3823
      %v4123 = vpop.f32.mrf.mxu0
      %v4124 = vadd.f32 %v4011, %v4123
      %4125 = vmatmul.f32.gmra.mxu0 %v3824
      %v4126 = vpop.f32.mrf.mxu0
      %v4127 = vadd.f32 %v4014, %v4126
      %4128 = vmatmul.f32.gmra.mxu0 %v3825
      %v4129 = vpop.f32.mrf.mxu0
      %v4130 = vadd.f32 %v4017, %v4129
      %4131 = vmatmul.f32.gmra.mxu0 %v3826
      %v4132 = vpop.f32.mrf.mxu0
      %v4133 = vadd.f32 %v4020, %v4132
      %4134 = vmatmul.f32.gmra.mxu0 %v3827
      %v4135 = vpop.f32.mrf.mxu0
      %v4136 = vadd.f32 %v4023, %v4135
      %4137 = vmatmul.f32.gmra.mxu0 %v3828
      %v4138 = vpop.f32.mrf.mxu0
      %v4139 = vadd.f32 %v4026, %v4138
      %4140 = vmatmul.f32.gmra.mxu0 %v3829
      %v4141 = vpop.f32.mrf.mxu0
      %v4142 = vadd.f32 %v4029, %v4141
      %4143 = vmatmul.f32.gmra.mxu0 %v3830
      %v4144 = vpop.f32.mrf.mxu0
      %v4145 = vadd.f32 %v4032, %v4144
      %4146 = vmatmul.f32.gmra.mxu0 %v3831
      %v4147 = vpop.f32.mrf.mxu0
      %v4148 = vadd.f32 %v4035, %v4147
      %4149 = vmatmul.f32.gmra.mxu0 %v3832
      %v4150 = vpop.f32.mrf.mxu0
      %v4151 = vadd.f32 %v4038, %v4150
      %4152 = vmatmul.f32.gmra.mxu0 %v3833
      %v4153 = vpop.f32.mrf.mxu0
      %v4154 = vadd.f32 %v4041, %v4153
      %4155 = vmatmul.f32.gmra.mxu0 %v3834
      %v4156 = vpop.f32.mrf.mxu0
      %v4157 = vadd.f32 %v4044, %v4156
      %4158 = vmatmul.f32.gmra.mxu0 %v3835
      %v4159 = vpop.f32.mrf.mxu0
      %v4160 = vadd.f32 %v4047, %v4159
      %4161 = vmatmul.f32.gmra.mxu0 %v3836
      %v4162 = vpop.f32.mrf.mxu0
      %v4163 = vadd.f32 %v4050, %v4162
      %4164 = vmatmul.f32.gmra.mxu0 %v3837
      %v4165 = vpop.f32.mrf.mxu0
      %v4166 = vadd.f32 %v4053, %v4165
      %4167 = vmatmul.f32.gmra.mxu0 %v3838
      %v4168 = vpop.f32.mrf.mxu0
      %v4169 = vadd.f32 %v4056, %v4168
      %4170 = vmatmul.f32.gmra.mxu0 %v3839
      %v4171 = vpop.f32.mrf.mxu0
      %v4172 = vadd.f32 %v4059, %v4171
      %4173 = vmatmul.f32.gmra.mxu0 %v3840
      %v4174 = vpop.f32.mrf.mxu0
      %v4175 = vadd.f32 %v4062, %v4174
      %4176 = vmatmul.f32.gmra.mxu0 %v3841
      %v4177 = vpop.f32.mrf.mxu0
      %v4178 = vadd.f32 %v4065, %v4177
      %4179 = vmatmul.f32.gmra.mxu0 %v3842
      %v4180 = vpop.f32.mrf.mxu0
      %v4181 = vadd.f32 %v4068, %v4180
      %4182 = vmatmul.f32.gmra.mxu0 %v3843
      %v4183 = vpop.f32.mrf.mxu0
      %v4184 = vadd.f32 %v4071, %v4183
      %4185 = vmatmul.f32.gmra.mxu0 %v3844
      %v4186 = vpop.f32.mrf.mxu0
      %v4187 = vadd.f32 %v4074, %v4186
      %4188 = vmatmul.f32.gmra.mxu0 %v3845
      %v4189 = vpop.f32.mrf.mxu0
      %v4190 = vadd.f32 %v4077, %v4189
      %4191 = vmatmul.f32.gmra.mxu0 %v3846
      %v4192 = vpop.f32.mrf.mxu0
      %v4193 = vadd.f32 %v4080, %v4192
      %4194 = vmatmul.f32.gmra.mxu0 %v3847
      %v4195 = vpop.f32.mrf.mxu0
      %v4196 = vadd.f32 %v4083, %v4195
      %4197 = vmatmul.f32.gmra.mxu0 %v3848
      %v4198 = vpop.f32.mrf.mxu0
      %v4199 = vadd.f32 %v4086, %v4198
      %4200 = vmatmul.f32.gmra.mxu0 %v3849
      %v4201 = vpop.f32.mrf.mxu0
      %v4202 = vadd.f32 %v4089, %v4201
      %4203 = vmatmul.f32.gmra.mxu0 %v3850
      %v4204 = vpop.f32.mrf.mxu0
      %v4205 = vadd.f32 %v4092, %v4204
      %4206 = vmatmul.f32.gmra.mxu0 %v3851
      %v4207 = vpop.f32.mrf.mxu0
      %v4208 = vadd.f32 %v4095, %v4207
      %4209 = vmatmul.f32.gmra.mxu0 %v3852
      %v4210 = vpop.f32.mrf.mxu0
      %v4211 = vadd.f32 %v4098, %v4210
      %4212 = vmatmul.f32.gmra.mxu0 %v3853
      %v4213 = vpop.f32.mrf.mxu0
      %v4214 = vadd.f32 %v4101, %v4213
      %4215 = vdwg.mxu0
      %v4216 = vmax.f32 %v4121, 0.0
      %v4217 = vmax.f32 %v4124, 0.0
      %v4218 = vmax.f32 %v4127, 0.0
      %v4219 = vmax.f32 %v4130, 0.0
      %v4220 = vmax.f32 %v4133, 0.0
      %v4221 = vmax.f32 %v4136, 0.0
      %v4222 = vmax.f32 %v4139, 0.0
      %v4223 = vmax.f32 %v4142, 0.0
      %v4224 = vmax.f32 %v4145, 0.0
      %v4225 = vmax.f32 %v4148, 0.0
      %v4226 = vmax.f32 %v4151, 0.0
      %v4227 = vmax.f32 %v4154, 0.0
      %v4228 = vmax.f32 %v4157, 0.0
      %v4229 = vmax.f32 %v4160, 0.0
      %v4230 = vmax.f32 %v4163, 0.0
      %v4231 = vmax.f32 %v4166, 0.0
      %v4232 = vmax.f32 %v4169, 0.0
      %v4233 = vmax.f32 %v4172, 0.0
      %v4234 = vmax.f32 %v4175, 0.0
      %v4235 = vmax.f32 %v4178, 0.0
      %v4236 = vmax.f32 %v4181, 0.0
      %v4237 = vmax.f32 %v4184, 0.0
      %v4238 = vmax.f32 %v4187, 0.0
      %v4239 = vmax.f32 %v4190, 0.0
      %v4240 = vmax.f32 %v4193, 0.0
      %v4241 = vmax.f32 %v4196, 0.0
      %v4242 = vmax.f32 %v4199, 0.0
      %v4243 = vmax.f32 %v4202, 0.0
      %v4244 = vmax.f32 %v4205, 0.0
      %v4245 = vmax.f32 %v4208, 0.0
      %v4246 = vmax.f32 %v4211, 0.0
      %v4247 = vmax.f32 %v4214, 0.0
      %v4248 = vld [vmem:[%s10] sm:$0xff]
      %v4249 = vld [vmem:[%s10 + $0x8] sm:$0xff]
      %v4250 = vld [vmem:[%s10 + $0x10] sm:$0xff]
      %v4251 = vld [vmem:[%s10 + $0x18] sm:$0xff]
      %v4252 = vld [vmem:[%s10 + $0x20] sm:$0xff]
      %v4253 = vld [vmem:[%s10 + $0x28] sm:$0xff]
      %v4254 = vld [vmem:[%s10 + $0x30] sm:$0xff]
      %v4255 = vld [vmem:[%s10 + $0x38] sm:$0xff]
      %v4256 = vld [vmem:[%s10 + $0x40] sm:$0xff]
      %v4257 = vld [vmem:[%s10 + $0x48] sm:$0xff]
      %v4258 = vld [vmem:[%s10 + $0x50] sm:$0xff]
      %v4259 = vld [vmem:[%s10 + $0x58] sm:$0xff]
      %v4260 = vld [vmem:[%s10 + $0x60] sm:$0xff]
      %v4261 = vld [vmem:[%s10 + $0x68] sm:$0xff]
      %v4262 = vld [vmem:[%s10 + $0x70] sm:$0xff]
      %v4263 = vld [vmem:[%s10 + $0x78] sm:$0xff]
      %v4264 = vld [vmem:[%s10 + $0x80] sm:$0xff]
      %v4265 = vld [vmem:[%s10 + $0x88] sm:$0xff]
      %v4266 = vld [vmem:[%s10 + $0x90] sm:$0xff]
      %v4267 = vld [vmem:[%s10 + $0x98] sm:$0xff]
      %v4268 = vld [vmem:[%s10 + $0xa0] sm:$0xff]
      %v4269 = vld [vmem:[%s10 + $0xa8] sm:$0xff]
      %v4270 = vld [vmem:[%s10 + $0xb0] sm:$0xff]
      %v4271 = vld [vmem:[%s10 + $0xb8] sm:$0xff]
      %v4272 = vld [vmem:[%s10 + $0xc0] sm:$0xff]
      %v4273 = vld [vmem:[%s10 + $0xc8] sm:$0xff]
      %v4274 = vld [vmem:[%s10 + $0xd0] sm:$0xff]
      %v4275 = vld [vmem:[%s10 + $0xd8] sm:$0xff]
      %v4276 = vld [vmem:[%s10 + $0xe0] sm:$0xff]
      %v4277 = vld [vmem:[%s10 + $0xe8] sm:$0xff]
      %v4278 = vld [vmem:[%s10 + $0xf0] sm:$0xff]
      %v4279 = vld [vmem:[%s10 + $0xf8] sm:$0xff]
      %v4280 = vld [vmem:[%s11] sm:$0xff]
      %v4281 = vld [vmem:[%s11 + $0x8] sm:$0xff]
      %v4282 = vld [vmem:[%s11 + $0x10] sm:$0xff]
      %v4283 = vld [vmem:[%s11 + $0x18] sm:$0xff]
      %v4284 = vld [vmem:[%s11 + $0x20] sm:$0xff]
      %v4285 = vld [vmem:[%s11 + $0x28] sm:$0xff]
      %v4286 = vld [vmem:[%s11 + $0x30] sm:$0xff]
      %v4287 = vld [vmem:[%s11 + $0x38] sm:$0xff]
      %v4288 = vld [vmem:[%s11 + $0x40] sm:$0xff]
      %v4289 = vld [vmem:[%s11 + $0x48] sm:$0xff]
      %v4290 = vld [vmem:[%s11 + $0x50] sm:$0xff]
      %v4291 = vld [vmem:[%s11 + $0x58] sm:$0xff]
      %v4292 = vld [vmem:[%s11 + $0x60] sm:$0xff]
      %v4293 = vld [vmem:[%s11 + $0x68] sm:$0xff]
      %v4294 = vld [vmem:[%s11 + $0x70] sm:$0xff]
      %v4295 = vld [vmem:[%s11 + $0x78] sm:$0xff]
      %4297 = vset.pattern.permute.xlu0 0
      %4298 = vperm.xlu0 %4297, %v4280
      %v4299 = vpop.permute.xlu0 %4298
      %4302 = vset.pattern.permute.xlu0 0
      %4303 = vperm.xlu0 %4302, %v4281
      %v4304 = vpop.permute.xlu0 %4303
      %4307 = vset.pattern.permute.xlu0 0
      %4308 = vperm.xlu0 %4307, %v4282
      %v4309 = vpop.permute.xlu0 %4308
      %4312 = vset.pattern.permute.xlu0 0
      %4313 = vperm.xlu0 %4312, %v4283
      %v4314 = vpop.permute.xlu0 %4313
      %4317 = vset.pattern.permute.xlu0 0
      %4318 = vperm.xlu0 %4317, %v4284
      %v4319 = vpop.permute.xlu0 %4318
      %4322 = vset.pattern.permute.xlu0 0
      %4323 = vperm.xlu0 %4322, %v4285
      %v4324 = vpop.permute.xlu0 %4323
      %4327 = vset.pattern.permute.xlu0 0
      %4328 = vperm.xlu0 %4327, %v4286
      %v4329 = vpop.permute.xlu0 %4328
      %4332 = vset.pattern.permute.xlu0 0
      %4333 = vperm.xlu0 %4332, %v4287
      %v4334 = vpop.permute.xlu0 %4333
      %4337 = vset.pattern.permute.xlu0 0
      %4338 = vperm.xlu0 %4337, %v4288
      %v4339 = vpop.permute.xlu0 %4338
      %4342 = vset.pattern.permute.xlu0 0
      %4343 = vperm.xlu0 %4342, %v4289
      %v4344 = vpop.permute.xlu0 %4343
      %4347 = vset.pattern.permute.xlu0 0
      %4348 = vperm.xlu0 %4347, %v4290
      %v4349 = vpop.permute.xlu0 %4348
      %4352 = vset.pattern.permute.xlu0 0
      %4353 = vperm.xlu0 %4352, %v4291
      %v4354 = vpop.permute.xlu0 %4353
      %4357 = vset.pattern.permute.xlu0 0
      %4358 = vperm.xlu0 %4357, %v4292
      %v4359 = vpop.permute.xlu0 %4358
      %4362 = vset.pattern.permute.xlu0 0
      %4363 = vperm.xlu0 %4362, %v4293
      %v4364 = vpop.permute.xlu0 %4363
      %4367 = vset.pattern.permute.xlu0 0
      %4368 = vperm.xlu0 %4367, %v4294
      %v4369 = vpop.permute.xlu0 %4368
      %4372 = vset.pattern.permute.xlu0 0
      %4373 = vperm.xlu0 %4372, %v4295
      %v4374 = vpop.permute.xlu0 %4373
      %4376 = vmatpush.msra.mxu0 %v4231
      %4377 = vmatpush.msra.mxu0 %v4230
      %4378 = vmatpush.msra.mxu0 %v4229
      %4379 = vmatpush.msra.mxu0 %v4228
      %4380 = vmatpush.msra.mxu0 %v4227
      %4381 = vmatpush.msra.mxu0 %v4226
      %4382 = vmatpush.msra.mxu0 %v4225
      %4383 = vmatpush.msra.mxu0 %v4224
      %4384 = vmatpush.msra.mxu0 %v4223
      %4385 = vmatpush.msra.mxu0 %v4222
      %4386 = vmatpush.msra.mxu0 %v4221
      %4387 = vmatpush.msra.mxu0 %v4220
      %4388 = vmatpush.msra.mxu0 %v4219
      %4389 = vmatpush.msra.mxu0 %v4218
      %4390 = vmatpush.msra.mxu0 %v4217
      %4391 = vmatpush.msra.mxu0 %v4216
      %4392 = vmatmul.f32.gmra.mxu0 %v4248
      %v4393 = vpop.f32.mrf.mxu0
      %v4394 = vadd.f32 %v4299, %v4393
      %4395 = vmatmul.f32.gmra.mxu0 %v4250
      %v4396 = vpop.f32.mrf.mxu0
      %v4397 = vadd.f32 %v4304, %v4396
      %4398 = vmatmul.f32.gmra.mxu0 %v4252
      %v4399 = vpop.f32.mrf.mxu0
      %v4400 = vadd.f32 %v4309, %v4399
      %4401 = vmatmul.f32.gmra.mxu0 %v4254
      %v4402 = vpop.f32.mrf.mxu0
      %v4403 = vadd.f32 %v4314, %v4402
      %4404 = vmatmul.f32.gmra.mxu0 %v4256
      %v4405 = vpop.f32.mrf.mxu0
      %v4406 = vadd.f32 %v4319, %v4405
      %4407 = vmatmul.f32.gmra.mxu0 %v4258
      %v4408 = vpop.f32.mrf.mxu0
      %v4409 = vadd.f32 %v4324, %v4408
      %4410 = vmatmul.f32.gmra.mxu0 %v4260
      %v4411 = vpop.f32.mrf.mxu0
      %v4412 = vadd.f32 %v4329, %v4411
      %4413 = vmatmul.f32.gmra.mxu0 %v4262
      %v4414 = vpop.f32.mrf.mxu0
      %v4415 = vadd.f32 %v4334, %v4414
      %4416 = vmatmul.f32.gmra.mxu0 %v4264
      %v4417 = vpop.f32.mrf.mxu0
      %v4418 = vadd.f32 %v4339, %v4417
      %4419 = vmatmul.f32.gmra.mxu0 %v4266
      %v4420 = vpop.f32.mrf.mxu0
      %v4421 = vadd.f32 %v4344, %v4420
      %4422 = vmatmul.f32.gmra.mxu0 %v4268
      %v4423 = vpop.f32.mrf.mxu0
      %v4424 = vadd.f32 %v4349, %v4423
      %4425 = vmatmul.f32.gmra.mxu0 %v4270
      %v4426 = vpop.f32.mrf.mxu0
      %v4427 = vadd.f32 %v4354, %v4426
      %4428 = vmatmul.f32.gmra.mxu0 %v4272
      %v4429 = vpop.f32.mrf.mxu0
      %v4430 = vadd.f32 %v4359, %v4429
      %4431 = vmatmul.f32.gmra.mxu0 %v4274
      %v4432 = vpop.f32.mrf.mxu0
      %v4433 = vadd.f32 %v4364, %v4432
      %4434 = vmatmul.f32.gmra.mxu0 %v4276
      %v4435 = vpop.f32.mrf.mxu0
      %v4436 = vadd.f32 %v4369, %v4435
      %4437 = vmatmul.f32.gmra.mxu0 %v4278
      %v4438 = vpop.f32.mrf.mxu0
      %v4439 = vadd.f32 %v4374, %v4438
      %4440 = vdwg.mxu0
      %4441 = vmatpush.msra.mxu0 %v4247
      %4442 = vmatpush.msra.mxu0 %v4246
      %4443 = vmatpush.msra.mxu0 %v4245
      %4444 = vmatpush.msra.mxu0 %v4244
      %4445 = vmatpush.msra.mxu0 %v4243
      %4446 = vmatpush.msra.mxu0 %v4242
      %4447 = vmatpush.msra.mxu0 %v4241
      %4448 = vmatpush.msra.mxu0 %v4240
      %4449 = vmatpush.msra.mxu0 %v4239
      %4450 = vmatpush.msra.mxu0 %v4238
      %4451 = vmatpush.msra.mxu0 %v4237
      %4452 = vmatpush.msra.mxu0 %v4236
      %4453 = vmatpush.msra.mxu0 %v4235
      %4454 = vmatpush.msra.mxu0 %v4234
      %4455 = vmatpush.msra.mxu0 %v4233
      %4456 = vmatpush.msra.mxu0 %v4232
      %4457 = vmatmul.f32.gmra.mxu0 %v4249
      %v4458 = vpop.f32.mrf.mxu0
      %v4459 = vadd.f32 %v4394, %v4458
      %4460 = vmatmul.f32.gmra.mxu0 %v4251
      %v4461 = vpop.f32.mrf.mxu0
      %v4462 = vadd.f32 %v4397, %v4461
      %4463 = vmatmul.f32.gmra.mxu0 %v4253
      %v4464 = vpop.f32.mrf.mxu0
      %v4465 = vadd.f32 %v4400, %v4464
      %4466 = vmatmul.f32.gmra.mxu0 %v4255
      %v4467 = vpop.f32.mrf.mxu0
      %v4468 = vadd.f32 %v4403, %v4467
      %4469 = vmatmul.f32.gmra.mxu0 %v4257
      %v4470 = vpop.f32.mrf.mxu0
      %v4471 = vadd.f32 %v4406, %v4470
      %4472 = vmatmul.f32.gmra.mxu0 %v4259
      %v4473 = vpop.f32.mrf.mxu0
      %v4474 = vadd.f32 %v4409, %v4473
      %4475 = vmatmul.f32.gmra.mxu0 %v4261
      %v4476 = vpop.f32.mrf.mxu0
      %v4477 = vadd.f32 %v4412, %v4476
      %4478 = vmatmul.f32.gmra.mxu0 %v4263
      %v4479 = vpop.f32.mrf.mxu0
      %v4480 = vadd.f32 %v4415, %v4479
      %4481 = vmatmul.f32.gmra.mxu0 %v4265
      %v4482 = vpop.f32.mrf.mxu0
      %v4483 = vadd.f32 %v4418, %v4482
      %4484 = vmatmul.f32.gmra.mxu0 %v4267
      %v4485 = vpop.f32.mrf.mxu0
      %v4486 = vadd.f32 %v4421, %v4485
      %4487 = vmatmul.f32.gmra.mxu0 %v4269
      %v4488 = vpop.f32.mrf.mxu0
      %v4489 = vadd.f32 %v4424, %v4488
      %4490 = vmatmul.f32.gmra.mxu0 %v4271
      %v4491 = vpop.f32.mrf.mxu0
      %v4492 = vadd.f32 %v4427, %v4491
      %4493 = vmatmul.f32.gmra.mxu0 %v4273
      %v4494 = vpop.f32.mrf.mxu0
      %v4495 = vadd.f32 %v4430, %v4494
      %4496 = vmatmul.f32.gmra.mxu0 %v4275
      %v4497 = vpop.f32.mrf.mxu0
      %v4498 = vadd.f32 %v4433, %v4497
      %4499 = vmatmul.f32.gmra.mxu0 %v4277
      %v4500 = vpop.f32.mrf.mxu0
      %v4501 = vadd.f32 %v4436, %v4500
      %4502 = vmatmul.f32.gmra.mxu0 %v4279
      %v4503 = vpop.f32.mrf.mxu0
      %v4504 = vadd.f32 %v4439, %v4503
      %4505 = vdwg.mxu0
      %v4506 = vmax.f32 %v4459, 0.0
      %v4507 = vmax.f32 %v4462, 0.0
      %v4508 = vmax.f32 %v4465, 0.0
      %v4509 = vmax.f32 %v4468, 0.0
      %v4510 = vmax.f32 %v4471, 0.0
      %v4511 = vmax.f32 %v4474, 0.0
      %v4512 = vmax.f32 %v4477, 0.0
      %v4513 = vmax.f32 %v4480, 0.0
      %v4514 = vmax.f32 %v4483, 0.0
      %v4515 = vmax.f32 %v4486, 0.0
      %v4516 = vmax.f32 %v4489, 0.0
      %v4517 = vmax.f32 %v4492, 0.0
      %v4518 = vmax.f32 %v4495, 0.0
      %v4519 = vmax.f32 %v4498, 0.0
      %v4520 = vmax.f32 %v4501, 0.0
      %v4521 = vmax.f32 %v4504, 0.0
      %v4522 = vld [vmem:[%s12] sm:$0xff]
      %v4523 = vld [vmem:[%s12 + $0x8] sm:$0xff]
      %v4524 = vld [vmem:[%s12 + $0x10] sm:$0xff]
      %v4525 = vld [vmem:[%s12 + $0x18] sm:$0xff]
      %v4526 = vld [vmem:[%s12 + $0x20] sm:$0xff]
      %v4527 = vld [vmem:[%s12 + $0x28] sm:$0xff]
      %v4528 = vld [vmem:[%s12 + $0x30] sm:$0xff]
      %v4529 = vld [vmem:[%s12 + $0x38] sm:$0xff]
      %v4530 = vld [vmem:[%s13] sm:$0xff]
      %v4531 = vld [vmem:[%s13 + $0x8] sm:$0xff]
      %v4532 = vld [vmem:[%s13 + $0x10] sm:$0xff]
      %v4533 = vld [vmem:[%s13 + $0x18] sm:$0xff]
      %v4534 = vld [vmem:[%s13 + $0x20] sm:$0xff]
      %v4535 = vld [vmem:[%s13 + $0x28] sm:$0xff]
      %v4536 = vld [vmem:[%s13 + $0x30] sm:$0xff]
      %v4537 = vld [vmem:[%s13 + $0x38] sm:$0xff]
      %4539 = vset.pattern.permute.xlu0 0
      %4540 = vperm.xlu0 %4539, %v4530
      %v4541 = vpop.permute.xlu0 %4540
      %4544 = vset.pattern.permute.xlu0 0
      %4545 = vperm.xlu0 %4544, %v4531
      %v4546 = vpop.permute.xlu0 %4545
      %4549 = vset.pattern.permute.xlu0 0
      %4550 = vperm.xlu0 %4549, %v4532
      %v4551 = vpop.permute.xlu0 %4550
      %4554 = vset.pattern.permute.xlu0 0
      %4555 = vperm.xlu0 %4554, %v4533
      %v4556 = vpop.permute.xlu0 %4555
      %4559 = vset.pattern.permute.xlu0 0
      %4560 = vperm.xlu0 %4559, %v4534
      %v4561 = vpop.permute.xlu0 %4560
      %4564 = vset.pattern.permute.xlu0 0
      %4565 = vperm.xlu0 %4564, %v4535
      %v4566 = vpop.permute.xlu0 %4565
      %4569 = vset.pattern.permute.xlu0 0
      %4570 = vperm.xlu0 %4569, %v4536
      %v4571 = vpop.permute.xlu0 %4570
      %4574 = vset.pattern.permute.xlu0 0
      %4575 = vperm.xlu0 %4574, %v4537
      %v4576 = vpop.permute.xlu0 %4575
      %4578 = vmatpush.msra.mxu0 %v4521
      %4579 = vmatpush.msra.mxu0 %v4520
      %4580 = vmatpush.msra.mxu0 %v4519
      %4581 = vmatpush.msra.mxu0 %v4518
      %4582 = vmatpush.msra.mxu0 %v4517
      %4583 = vmatpush.msra.mxu0 %v4516
      %4584 = vmatpush.msra.mxu0 %v4515
      %4585 = vmatpush.msra.mxu0 %v4514
      %4586 = vmatpush.msra.mxu0 %v4513
      %4587 = vmatpush.msra.mxu0 %v4512
      %4588 = vmatpush.msra.mxu0 %v4511
      %4589 = vmatpush.msra.mxu0 %v4510
      %4590 = vmatpush.msra.mxu0 %v4509
      %4591 = vmatpush.msra.mxu0 %v4508
      %4592 = vmatpush.msra.mxu0 %v4507
      %4593 = vmatpush.msra.mxu0 %v4506
      %4594 = vmatmul.f32.gmra.mxu0 %v4522
      %v4595 = vpop.f32.mrf.mxu0
      %v4596 = vadd.f32 %v4541, %v4595
      %4597 = vmatmul.f32.gmra.mxu0 %v4523
      %v4598 = vpop.f32.mrf.mxu0
      %v4599 = vadd.f32 %v4546, %v4598
      %4600 = vmatmul.f32.gmra.mxu0 %v4524
      %v4601 = vpop.f32.mrf.mxu0
      %v4602 = vadd.f32 %v4551, %v4601
      %4603 = vmatmul.f32.gmra.mxu0 %v4525
      %v4604 = vpop.f32.mrf.mxu0
      %v4605 = vadd.f32 %v4556, %v4604
      %4606 = vmatmul.f32.gmra.mxu0 %v4526
      %v4607 = vpop.f32.mrf.mxu0
      %v4608 = vadd.f32 %v4561, %v4607
      %4609 = vmatmul.f32.gmra.mxu0 %v4527
      %v4610 = vpop.f32.mrf.mxu0
      %v4611 = vadd.f32 %v4566, %v4610
      %4612 = vmatmul.f32.gmra.mxu0 %v4528
      %v4613 = vpop.f32.mrf.mxu0
      %v4614 = vadd.f32 %v4571, %v4613
      %4615 = vmatmul.f32.gmra.mxu0 %v4529
      %v4616 = vpop.f32.mrf.mxu0
      %v4617 = vadd.f32 %v4576, %v4616
      %4618 = vdwg.mxu0
      %v4619 = vmax.f32 %v4596, 0.0
      %v4620 = vmax.f32 %v4599, 0.0
      %v4621 = vmax.f32 %v4602, 0.0
      %v4622 = vmax.f32 %v4605, 0.0
      %v4623 = vmax.f32 %v4608, 0.0
      %v4624 = vmax.f32 %v4611, 0.0
      %v4625 = vmax.f32 %v4614, 0.0
      %v4626 = vmax.f32 %v4617, 0.0
      %v4627 = vld [vmem:[%s14] sm:$0x1]
      %v4628 = vld [vmem:[#allocation2] sm:$0x1]
      %4630 = vset.pattern.permute.xlu0 0
      %4631 = vperm.xlu0 %4630, %v4628
      %v4632 = vpop.permute.xlu0 %4631
      %v4634 = vperm.slane %v4632, 0
      %vm4635 = vcmask 523264
      %v4637 = vsel %vm4635, %v4627, 0
      %4639 = vmatpush.msra.mxu0 0.0
      %4640 = vmatpush.msra.mxu0 0.0
      %4641 = vmatpush.msra.mxu0 0.0
      %4642 = vmatpush.msra.mxu0 0.0
      %4643 = vmatpush.msra.mxu0 0.0
      %4644 = vmatpush.msra.mxu0 0.0
      %4645 = vmatpush.msra.mxu0 0.0
      %4646 = vmatpush.msra.mxu0 0.0
      %4647 = vmatpush.msra.mxu0 %v4626
      %4648 = vmatpush.msra.mxu0 %v4625
      %4649 = vmatpush.msra.mxu0 %v4624
      %4650 = vmatpush.msra.mxu0 %v4623
      %4651 = vmatpush.msra.mxu0 %v4622
      %4652 = vmatpush.msra.mxu0 %v4621
      %4653 = vmatpush.msra.mxu0 %v4620
      %4654 = vmatpush.msra.mxu0 %v4619
      %4655 = vmatmul.f32.gmra.mxu0 %v4637
      %v4656 = vpop.f32.mrf.mxu0
      %v4657 = vadd.f32 %v4634, %v4656
      %4658 = vdwg.mxu0
      %vm4659 = vcmask 57344
      %4660 = vst.msk [vmem:[%s539] sm:$0x1] %vm4659, %v4657
      %p4661 = scmp.lt.s32.totalorder %s29, 1
      %s4662 = scalar_select %p4661, %s29, 1
      %s4663 = scalar_lea.vmem %s16, %s4662
      // Predicated region
      $region85: #{critic_forward.1} parent=83 // pred_check
        %p4664 = pneg %p393
      $region86: #{critic_forward.1} parent=83 // pred_check_branch
        %4666 = sbr.rel (%p4664) target = $region88
      $region87: #{critic_forward.1} parent=83 // pred_region
        _
      $region88: #{critic_forward.1} parent=83 // pred_fallthru
        _
    $region84: #{critic_forward.1} parent=5 // pred_fallthru
      _
    %p4667 = scmp.le.s32.totalorder 2, %s24
    // Predicated region
    $region89: #{critic_forward.1} parent=5 // pred_check
      %p4668 = pneg %p4667
    $region90: #{critic_forward.1} parent=5 // pred_check_branch
      %4670 = sbr.rel (%p4668) target = $region92
    $region91: #{critic_forward.1} parent=5 // pred_region
      %s4671 = ssub.s32 %s24, 2
      // Predicated region
      $region93: #{critic_forward.1} parent=91 // pred_check
        %p4672 = pneg %p399
      $region94: #{critic_forward.1} parent=91 // pred_check_branch
        %4674 = sbr.rel (%p4672) target = $region96
      $region95: #{critic_forward.1} parent=91 // pred_region
        %p4675 = scmp.lt.s32.totalorder %s30, 1
        %s4676 = scalar_select %p4675, %s30, 1
        %s4677 = scalar_lea.vmem %s16, %s4676
      $region96: #{critic_forward.1} parent=91 // pred_fallthru
        _
    $region92: #{critic_forward.1} parent=5 // pred_fallthru
      _
  $region6: #{critic_forward.1} parent=0 // loop_footer
    %s28 = sadd.s32 1, %s24
  $region7: #{critic_forward.1} parent=0 // loop_footer_branch
    %23 = sbr.rel target = $region3
  $region8: #{critic_forward.1} parent=0 // loop_exit
    _

</llo_original>
